<compile_context>
chip_gen: v5e
topology: v5e:2x2
jax: 0.10.0
libtpu: 0.0.40
codegen_flags: <defaults>
</compile_context>

<pallas_src>
import functools

import jax
import jax.numpy as jnp
from jax.experimental import pallas as pl
from jax.experimental.pallas import tpu as pltpu

EPS = 1e-5
# Sized with headroom against v7x's 64 MiB physical VMEM (v5e/v6e have 128 MiB);
# actual per-step footprint here is ~1.5 MiB (double-buffered 512-row tiles).
_VMEM_LIMIT = 32 * 1024 * 1024

# Small compat shim (older jax spelled this pltpu.TPUCompilerParams).
_CompilerParams = getattr(pltpu, "CompilerParams", None)
if _CompilerParams is None:  # pragma: no cover
    _CompilerParams = pltpu.TPUCompilerParams


def _round_up(x, m):
    return (x + m - 1) // m * m


def _pick_row_tile(p):
    # 512-row tiles (review: 512-1024), falling back to smaller divisors / whole P.
    for t in (512, 256, 128, 64, 32, 16, 8):
        if p % t == 0:
            return t
    return p


# ----------------------------- MaxPool3d(2) ---------------------------------

def _maxpool_kernel(x_ref, o_ref):
    # x_ref: (1, 8, M) — axis 1 enumerates the 2x2x2 window offsets,
    # M = Do*Ho*Wo*C sits on lanes (lane-dense).  Pairwise max tree (depth 3).
    v = x_ref[0]                          # (8, M)
    a = jnp.maximum(v[:4], v[4:])         # (4, M)
    b = jnp.maximum(a[:2], a[2:])         # (2, M)
    m = jnp.maximum(b[0:1], b[1:2])       # (1, M)
    o_ref[...] = m[None].astype(o_ref.dtype)


def maxpool3d_2x_to_ndhwc(x):
    """(N, C, D, H, W) f32 -> (N, D//2, H//2, W//2, C) bf16 (channels-last)."""
    N, C, D, H, W = x.shape
    Do, Ho, Wo = D // 2, H // 2, W // 2
    M = Do * Ho * Wo * C
    # Single wrapper relayout: split the 2x2x2 windows out AND go channels-last,
    # so the kernel output reshapes straight into the conv stage's layout.
    xr = x[:, :, : Do * 2, : Ho * 2, : Wo * 2].reshape(N, C, Do, 2, Ho, 2, Wo, 2)
    xr = jnp.transpose(xr, (0, 3, 5, 7, 2, 4, 6, 1)).reshape(N, 8, M)
    out = pl.pallas_call(
        _maxpool_kernel,
        out_shape=jax.ShapeDtypeStruct((N, 1, M), jnp.bfloat16),
        grid=(N,),
        in_specs=[pl.BlockSpec((1, 8, M), lambda i: (i, 0, 0))],
        out_specs=pl.BlockSpec((1, 1, M), lambda i: (i, 0, 0)),
        compiler_params=_CompilerParams(dimension_semantics=("parallel",)),
    )(xr)
    return out.reshape(N, Do, Ho, Wo, C)


# ------------------- Conv3d(3x3x3, pad=1) + BN + ReLU ------------------------

def _conv_matmul_stats_kernel(a_ref, w_ref, z_ref, s_ref):
    # a_ref: (TP, Kp) bf16 im2col rows; w_ref: (Kp, Cp) bf16 (resident, idx const)
    # z_ref: (TP, Cp) f32 conv output tile (written back per step)
    # s_ref: (2, Cp) f32 running [sum(z); sum(z^2)] accumulated across the grid
    z = jnp.dot(a_ref[...], w_ref[...], preferred_element_type=jnp.float32)
    z_ref[...] = z

    @pl.when(pl.program_id(0) == 0)
    def _init():
        s_ref[...] = jnp.zeros_like(s_ref)

    s_ref[...] += jnp.concatenate(
        [jnp.sum(z, axis=0, keepdims=True),
         jnp.sum(z * z, axis=0, keepdims=True)],
        axis=0,
    )


def _bn_relu_kernel(z_ref, s_ref, g_ref, b_ref, o_ref, *, inv_n):
    # BN folded into a single FMA: scale = gamma*rsqrt(var+eps), bias = beta - mean*scale.
    mean = s_ref[0:1, :] * inv_n
    var = jnp.maximum(s_ref[1:2, :] * inv_n - mean * mean, 0.0)
    scale = g_ref[...] * jax.lax.rsqrt(var + EPS)
    bias = b_ref[...] - mean * scale
    o_ref[...] = jnp.maximum(z_ref[...] * scale + bias, 0.0).astype(o_ref.dtype)


def conv3x3x3_bn_relu(x_ndhwc, w_oidhw, gamma, beta, out_dtype):
    """3x3x3 'same' conv (no bias) + train-mode BatchNorm3d + ReLU.

    x_ndhwc: (N, D, H, W, Cin); w_oidhw: (Cout, Cin, 3, 3, 3) (PyTorch layout).
    Returns (N, D, H, W, Cout) in out_dtype.
    """
    N, D, H, W, Cin = x_ndhwc.shape
    Cout = w_oidhw.shape[0]
    P = N * D * H * W
    K = 27 * Cin
    Kp = _round_up(K, 128)      # contraction dim padded to MXU width
    Cp = _round_up(Cout, 128)   # output channels padded -> lane-dense epilogue/stores

    # im2col in the wrapper (zero-padding folded in): the kernel reads lane-dense
    # (TP, Kp) slabs and runs ONE wide-K matmul instead of 27 K=Cin dots.
    xp = jnp.pad(x_ndhwc, ((0, 0), (1, 1), (1, 1), (1, 1), (0, 0)))
    taps = [
        xp[:, kd:kd + D, kh:kh + H, kw:kw + W, :]
        for kd in range(3) for kh in range(3) for kw in range(3)
    ]
    a = jnp.concatenate(taps, axis=-1).reshape(P, K)
    a = jnp.pad(a, ((0, 0), (0, Kp - K))).astype(jnp.bfloat16)

    wt = jnp.transpose(w_oidhw, (2, 3, 4, 1, 0)).reshape(K, Cout)
    wt = jnp.pad(wt, ((0, Kp - K), (0, Cp - Cout))).astype(jnp.bfloat16)

    g = jnp.pad(gamma.astype(jnp.float32), (0, Cp - Cout)).reshape(1, Cp)
    b = jnp.pad(beta.astype(jnp.float32), (0, Cp - Cout)).reshape(1, Cp)

    TP = _pick_row_tile(P)
    grid = (P // TP,)

    # Pass 1: tiled conv matmul + per-channel sum / sum-of-squares accumulation.
    # The sums block index is constant across the grid -> resident accumulator,
    # so the (single) grid axis must be "arbitrary".
    z, sums = pl.pallas_call(
        _conv_matmul_stats_kernel,
        out_shape=(jax.ShapeDtypeStruct((P, Cp), jnp.float32),
                   jax.ShapeDtypeStruct((2, Cp), jnp.float32)),
        grid=grid,
        in_specs=[pl.BlockSpec((TP, Kp), lambda i: (i, 0)),
                  pl.BlockSpec((Kp, Cp), lambda i: (0, 0))],
        out_specs=(pl.BlockSpec((TP, Cp), lambda i: (i, 0)),
                   pl.BlockSpec((2, Cp), lambda i: (0, 0))),
        compiler_params=_CompilerParams(
            dimension_semantics=("arbitrary",),
            vmem_limit_bytes=_VMEM_LIMIT),
    )(a, wt)

    # Pass 2: normalize + affine + ReLU over lane-dense tiles (independent tiles
    # -> "parallel" for megacore sharding).
    y = pl.pallas_call(
        functools.partial(_bn_relu_kernel, inv_n=1.0 / P),
        out_shape=jax.ShapeDtypeStruct((P, Cp), out_dtype),
        grid=grid,
        in_specs=[pl.BlockSpec((TP, Cp), lambda i: (i, 0)),
                  pl.BlockSpec((2, Cp), lambda i: (0, 0)),
                  pl.BlockSpec((1, Cp), lambda i: (0, 0)),
                  pl.BlockSpec((1, Cp), lambda i: (0, 0))],
        out_specs=pl.BlockSpec((TP, Cp), lambda i: (i, 0)),
        compiler_params=_CompilerParams(
            dimension_semantics=("parallel",),
            vmem_limit_bytes=_VMEM_LIMIT),
    )(z, sums, g, b)

    return y[:, :Cout].reshape(N, D, H, W, Cout)


# ------------------------------- Down.forward --------------------------------

def down_forward(x, w1, g1, b1, w2, g2, b2):
    # x: (N, Cin, D, H, W) NCDHW; w*: PyTorch layout (Cout, Cin, 3, 3, 3)
    p = maxpool3d_2x_to_ndhwc(x)                                  # (N,Do,Ho,Wo,Cin) bf16
    y = conv3x3x3_bn_relu(p, w1, g1, b1, out_dtype=jnp.bfloat16)  # bf16 feeds conv2 directly
    y = conv3x3x3_bn_relu(y, w2, g2, b2, out_dtype=jnp.float32)
    return jnp.transpose(y, (0, 4, 1, 2, 3))                      # back to NCDHW


# --------------------------- pure-JAX reference ------------------------------

def _reference(x, w1, g1, b1, w2, g2, b2, mixed):
    # mixed=True mirrors the kernel's numerics (bf16 MXU operands, f32 accum/BN).
    p = jax.lax.reduce_window(
        x, -jnp.inf, jax.lax.max,
        window_dimensions=(1, 1, 2, 2, 2),
        window_strides=(1, 1, 2, 2, 2),
        padding="VALID",
    )

    def conv_bn_relu(y, w, g, b, cast_out):
        if mixed:
            y = y.astype(jnp.bfloat16)
            w = w.astype(jnp.bfloat16)
        z = jax.lax.conv_general_dilated(
            y, w, window_strides=(1, 1, 1),
            padding=((1, 1), (1, 1), (1, 1)),
            dimension_numbers=("NCDHW", "OIDHW", "NCDHW"),
            preferred_element_type=jnp.float32,
        )
        mean = z.mean(axis=(0, 2, 3, 4), keepdims=True)
        var = jnp.square(z - mean).mean(axis=(0, 2, 3, 4), keepdims=True)
        zn = (z - mean) / jnp.sqrt(var + EPS)
        zn = zn * g.reshape(1, -1, 1, 1, 1) + b.reshape(1, -1, 1, 1, 1)
        zn = jnp.maximum(zn, 0.0)
        if mixed and cast_out:
            zn = zn.astype(jnp.bfloat16).astype(jnp.float32)
        return zn

    z1 = conv_bn_relu(p, w1, g1, b1, cast_out=True)
    return conv_bn_relu(z1, w2, g2, b2, cast_out=False)


if __name__ == "__main__":
    key = jax.random.PRNGKey(0)
    kx, kw1, kw2, kg1, kb1, kg2, kb2 = jax.random.split(key, 7)

    N, Cin, Cout = 2, 4, 8            # Down(in_channels=4, out_channels=8)
    D = H = W = 16

    x = jax.random.normal(kx, (N, Cin, D, H, W), jnp.float32)
    w1 = 0.1 * jax.random.normal(kw1, (Cout, Cin, 3, 3, 3), jnp.float32)
    w2 = 0.1 * jax.random.normal(kw2, (Cout, Cout, 3, 3, 3), jnp.float32)
    g1 = 1.0 + 0.1 * jax.random.normal(kg1, (Cout,), jnp.float32)
    b1 = 0.1 * jax.random.normal(kb1, (Cout,), jnp.float32)
    g2 = 1.0 + 0.1 * jax.random.normal(kg2, (Cout,), jnp.float32)
    b2 = 0.1 * jax.random.normal(kb2, (Cout,), jnp.float32)

    out = jax.block_until_ready(jax.jit(down_forward)(x, w1, g1, b1, w2, g2, b2))
    assert out.shape == (N, Cout, D // 2, H // 2, W // 2), out.shape

    # Tight check against a reference with identical mixed precision
    # (bf16 matmul operands, f32 accumulation and f32 BN statistics).
    ref_mix = jax.block_until_ready(_reference(x, w1, g1, b1, w2, g2, b2, mixed=True))
    err_mix = float(jnp.max(jnp.abs(out - ref_mix)))
    if not err_mix < 2e-3:
        raise AssertionError(f"mismatch vs mixed-precision reference: {err_mix}")

    # Loose sanity check against the full-f32 reference; the gap is the expected
    # bf16 operand rounding of the MXU inputs (standard TPU mixed precision).
    ref_f32 = jax.block_until_ready(_reference(x, w1, g1, b1, w2, g2, b2, mixed=False))
    err_f32 = float(jnp.max(jnp.abs(out - ref_f32)))
    if not err_f32 < 1e-1:
        raise AssertionError(f"mismatch vs f32 reference: {err_f32}")

    print("KERNEL_OK")
</pallas_src>

<mosaic_0001>
module attributes {stable_mosaic.version = 11 : i64} {
  func.func @_maxpool_kernel(%arg0: i32, %arg1: memref<1x8x2048xf32, #tpu.memory_space<vmem>>, %arg2: memref<1x1x2048xbf16, #tpu.memory_space<vmem>>) attributes {dimension_semantics = [#tpu.dimension_semantics<parallel>], iteration_bounds = array<i64: 2>, scalar_prefetch = 0 : i64, scratch_operands = 0 : i64, tpu.core_type = #tpu.core_type<tc>, window_params = [{transform_indices = @transform_0, window_bounds = array<i64: 1, 8, 2048>}, {transform_indices = @transform_1, window_bounds = array<i64: 1, 1, 2048>}]} {
    %c0 = arith.constant 0 : index
    %c0_0 = arith.constant 0 : index
    %c0_1 = arith.constant 0 : index
    %0 = vector.load %arg1[%c0, %c0_0, %c0_1] : memref<1x8x2048xf32, #tpu.memory_space<vmem>>, vector<1x8x2048xf32>
    %1 = vector.shape_cast %0 : vector<1x8x2048xf32> to vector<8x2048xf32>
    %2 = vector.extract_strided_slice %1 {offsets = [0, 0], sizes = [4, 2048], strides = [1, 1]} : vector<8x2048xf32> to vector<4x2048xf32>
    %3 = vector.extract_strided_slice %1 {offsets = [4, 0], sizes = [4, 2048], strides = [1, 1]} : vector<8x2048xf32> to vector<4x2048xf32>
    %4 = arith.maximumf %2, %3 : vector<4x2048xf32>
    %5 = vector.extract_strided_slice %4 {offsets = [0, 0], sizes = [2, 2048], strides = [1, 1]} : vector<4x2048xf32> to vector<2x2048xf32>
    %6 = vector.extract_strided_slice %4 {offsets = [2, 0], sizes = [2, 2048], strides = [1, 1]} : vector<4x2048xf32> to vector<2x2048xf32>
    %7 = arith.maximumf %5, %6 : vector<2x2048xf32>
    %8 = vector.extract_strided_slice %7 {offsets = [0, 0], sizes = [1, 2048], strides = [1, 1]} : vector<2x2048xf32> to vector<1x2048xf32>
    %9 = vector.extract_strided_slice %7 {offsets = [1, 0], sizes = [1, 2048], strides = [1, 1]} : vector<2x2048xf32> to vector<1x2048xf32>
    %10 = arith.maximumf %8, %9 : vector<1x2048xf32>
    %11 = vector.shape_cast %10 : vector<1x2048xf32> to vector<1x1x2048xf32>
    %12 = arith.truncf %11 : vector<1x1x2048xf32> to vector<1x1x2048xbf16>
    %c0_2 = arith.constant 0 : index
    %c0_3 = arith.constant 0 : index
    %c0_4 = arith.constant 0 : index
    %13 = vector.load %arg2[%c0_2, %c0_3, %c0_4] : memref<1x1x2048xbf16, #tpu.memory_space<vmem>>, vector<1x1x2048xbf16>
    tpu.vector_store %arg2[%c0_2, %c0_3, %c0_4], %12 {strides = array<i32>} : memref<1x1x2048xbf16, #tpu.memory_space<vmem>>, vector<1x1x2048xbf16>,
    return
  }
  func.func @transform_0(%arg0: i32) -> (i32, i32, i32) {
    %c0_i32 = arith.constant 0 : i32
    %c0_i32_0 = arith.constant 0 : i32
    %c0_i32_1 = arith.constant 0 : i32
    return %arg0, %c0_i32, %c0_i32_0 : i32, i32, i32
  }
  func.func @transform_1(%arg0: i32) -> (i32, i32, i32) {
    %c0_i32 = arith.constant 0 : i32
    %c0_i32_0 = arith.constant 0 : i32
    %c0_i32_1 = arith.constant 0 : i32
    return %arg0, %c0_i32, %c0_i32_0 : i32, i32, i32
  }
}

module attributes {stable_mosaic.version = 11 : i64} {
  func.func @_conv_matmul_stats_kernel(%arg0: i32, %arg1: memref<512x128xbf16, #tpu.memory_space<vmem>>, %arg2: memref<128x128xbf16, #tpu.memory_space<vmem>>, %arg3: memref<512x128xf32, #tpu.memory_space<vmem>>, %arg4: memref<2x128xf32, #tpu.memory_space<vmem>>) attributes {dimension_semantics = [#tpu.dimension_semantics<arbitrary>], iteration_bounds = array<i64: 2>, scalar_prefetch = 0 : i64, scratch_operands = 0 : i64, tpu.core_type = #tpu.core_type<tc>, window_params = [{transform_indices = @transform_0, window_bounds = array<i64: 512, 128>}, {pipeline_mode = #tpu.pipeline_mode<synchronous>, transform_indices = @transform_1, window_bounds = array<i64: 128, 128>}, {transform_indices = @transform_2, window_bounds = array<i64: 512, 128>}, {pipeline_mode = #tpu.pipeline_mode<synchronous>, transform_indices = @transform_3, window_bounds = array<i64: 2, 128>}]} {
    %c0 = arith.constant 0 : index
    %c0_0 = arith.constant 0 : index
    %0 = vector.load %arg1[%c0, %c0_0] : memref<512x128xbf16, #tpu.memory_space<vmem>>, vector<512x128xbf16>
    %c0_1 = arith.constant 0 : index
    %c0_2 = arith.constant 0 : index
    %1 = vector.load %arg2[%c0_1, %c0_2] : memref<128x128xbf16, #tpu.memory_space<vmem>>, vector<128x128xbf16>
    %cst = arith.constant dense<0.000000e+00> : vector<512x128xf32>
    %2 = tpu.matmul %0, %1, %cst {dimension_numbers = #tpu.dot_dimension_numbers<[1], [0], [0], [1], [0, 0, 1, 1], [], []>} : vector<512x128xbf16>, vector<128x128xbf16>, vector<512x128xf32> -> vector<512x128xf32>
    %c0_3 = arith.constant 0 : index
    %c0_4 = arith.constant 0 : index
    %3 = vector.load %arg3[%c0_3, %c0_4] : memref<512x128xf32, #tpu.memory_space<vmem>>, vector<512x128xf32>
    tpu.vector_store %arg3[%c0_3, %c0_4], %2 {strides = array<i32>} : memref<512x128xf32, #tpu.memory_space<vmem>>, vector<512x128xf32>,
    %c0_i32 = arith.constant 0 : i32
    %4 = arith.cmpi eq, %arg0, %c0_i32 : i32
    %5 = arith.extui %4 : i1 to i32
    %c0_i32_5 = arith.constant 0 : i32
    %6 = arith.cmpi ne, %5, %c0_i32_5 : i32
    scf.if %6 {
      %cst_12 = arith.constant 0.000000e+00 : f32
      %16 = vector.broadcast %cst_12 : f32 to vector<2x128xf32>
      %c0_13 = arith.constant 0 : index
      %c0_14 = arith.constant 0 : index
      %17 = vector.load %arg4[%c0_13, %c0_14] : memref<2x128xf32, #tpu.memory_space<vmem>>, vector<2x128xf32>
      tpu.vector_store %arg4[%c0_13, %c0_14], %16 {strides = array<i32>} : memref<2x128xf32, #tpu.memory_space<vmem>>, vector<2x128xf32>,
    } else {
    }
    %c0_6 = arith.constant 0 : index
    %c0_7 = arith.constant 0 : index
    %7 = vector.load %arg4[%c0_6, %c0_7] : memref<2x128xf32, #tpu.memory_space<vmem>>, vector<2x128xf32>
    %cst_8 = arith.constant dense<0.000000e+00> : vector<128xf32>
    %8 = vector.multi_reduction <add>, %2, %cst_8 [0] : vector<512x128xf32> to vector<128xf32>
    %9 = vector.shape_cast %8 : vector<128xf32> to vector<1x128xf32>
    %10 = arith.mulf %2, %2 : vector<512x128xf32>
    %cst_9 = arith.constant dense<0.000000e+00> : vector<128xf32>
    %11 = vector.multi_reduction <add>, %10, %cst_9 [0] : vector<512x128xf32> to vector<128xf32>
    %12 = vector.shape_cast %11 : vector<128xf32> to vector<1x128xf32>
    %13 = tpu.concatenate %9, %12 in 0 : vector<1x128xf32>, vector<1x128xf32> -> vector<2x128xf32>
    %14 = arith.addf %7, %13 : vector<2x128xf32>
    %c0_10 = arith.constant 0 : index
    %c0_11 = arith.constant 0 : index
    %15 = vector.load %arg4[%c0_10, %c0_11] : memref<2x128xf32, #tpu.memory_space<vmem>>, vector<2x128xf32>
    tpu.vector_store %arg4[%c0_10, %c0_11], %14 {strides = array<i32>} : memref<2x128xf32, #tpu.memory_space<vmem>>, vector<2x128xf32>,
    return
  }
  func.func @transform_0(%arg0: i32) -> (i32, i32) {
    %c0_i32 = arith.constant 0 : i32
    %c0_i32_0 = arith.constant 0 : i32
    return %arg0, %c0_i32 : i32, i32
  }
  func.func @transform_1(%arg0: i32) -> (i32, i32) {
    %c0_i32 = arith.constant 0 : i32
    %c0_i32_0 = arith.constant 0 : i32
    %c0_i32_1 = arith.constant 0 : i32
    return %c0_i32, %c0_i32_0 : i32, i32
  }
  func.func @transform_2(%arg0: i32) -> (i32, i32) {
    %c0_i32 = arith.constant 0 : i32
    %c0_i32_0 = arith.constant 0 : i32
    return %arg0, %c0_i32 : i32, i32
  }
  func.func @transform_3(%arg0: i32) -> (i32, i32) {
    %c0_i32 = arith.constant 0 : i32
    %c0_i32_0 = arith.constant 0 : i32
    %c0_i32_1 = arith.constant 0 : i32
    return %c0_i32, %c0_i32_0 : i32, i32
  }
}

module attributes {stable_mosaic.version = 11 : i64} {
  func.func @_bn_relu_kernel(%arg0: i32, %arg1: memref<512x128xf32, #tpu.memory_space<vmem>>, %arg2: memref<2x128xf32, #tpu.memory_space<vmem>>, %arg3: memref<1x128xf32, #tpu.memory_space<vmem>>, %arg4: memref<1x128xf32, #tpu.memory_space<vmem>>, %arg5: memref<512x128xbf16, #tpu.memory_space<vmem>>) attributes {dimension_semantics = [#tpu.dimension_semantics<parallel>], iteration_bounds = array<i64: 2>, scalar_prefetch = 0 : i64, scratch_operands = 0 : i64, tpu.core_type = #tpu.core_type<tc>, window_params = [{transform_indices = @transform_0, window_bounds = array<i64: 512, 128>}, {pipeline_mode = #tpu.pipeline_mode<synchronous>, transform_indices = @transform_1, window_bounds = array<i64: 2, 128>}, {pipeline_mode = #tpu.pipeline_mode<synchronous>, transform_indices = @transform_2, window_bounds = array<i64: 1, 128>}, {pipeline_mode = #tpu.pipeline_mode<synchronous>, transform_indices = @transform_3, window_bounds = array<i64: 1, 128>}, {transform_indices = @transform_4, window_bounds = array<i64: 512, 128>}]} {
    %c0 = arith.constant 0 : index
    %c0_0 = arith.constant 0 : index
    %0 = vector.load %arg2[%c0, %c0_0] : memref<2x128xf32, #tpu.memory_space<vmem>>, vector<1x128xf32>
    %cst = arith.constant 9.765625E-4 : f32
    %1 = vector.broadcast %cst : f32 to vector<1x128xf32>
    %2 = arith.mulf %0, %1 : vector<1x128xf32>
    %c1 = arith.constant 1 : index
    %c0_1 = arith.constant 0 : index
    %3 = vector.load %arg2[%c1, %c0_1] : memref<2x128xf32, #tpu.memory_space<vmem>>, vector<1x128xf32>
    %cst_2 = arith.constant 9.765625E-4 : f32
    %4 = vector.broadcast %cst_2 : f32 to vector<1x128xf32>
    %5 = arith.mulf %3, %4 : vector<1x128xf32>
    %6 = arith.mulf %2, %2 : vector<1x128xf32>
    %7 = arith.subf %5, %6 : vector<1x128xf32>
    %cst_3 = arith.constant 0.000000e+00 : f32
    %8 = vector.broadcast %cst_3 : f32 to vector<1x128xf32>
    %9 = arith.maximumf %7, %8 : vector<1x128xf32>
    %c0_4 = arith.constant 0 : index
    %c0_5 = arith.constant 0 : index
    %10 = vector.load %arg3[%c0_4, %c0_5] : memref<1x128xf32, #tpu.memory_space<vmem>>, vector<1x128xf32>
    %cst_6 = arith.constant 9.99999974E-6 : f32
    %11 = vector.broadcast %cst_6 : f32 to vector<1x128xf32>
    %12 = arith.addf %9, %11 : vector<1x128xf32>
    %13 = math.rsqrt %12 : vector<1x128xf32>
    %14 = arith.mulf %10, %13 : vector<1x128xf32>
    %c0_7 = arith.constant 0 : index
    %c0_8 = arith.constant 0 : index
    %15 = vector.load %arg4[%c0_7, %c0_8] : memref<1x128xf32, #tpu.memory_space<vmem>>, vector<1x128xf32>
    %16 = arith.mulf %2, %14 : vector<1x128xf32>
    %17 = arith.subf %15, %16 : vector<1x128xf32>
    %c0_9 = arith.constant 0 : index
    %c0_10 = arith.constant 0 : index
    %18 = vector.load %arg1[%c0_9, %c0_10] : memref<512x128xf32, #tpu.memory_space<vmem>>, vector<512x128xf32>
    %19 = vector.broadcast %14 : vector<1x128xf32> to vector<512x128xf32>
    %20 = arith.mulf %18, %19 : vector<512x128xf32>
    %21 = vector.broadcast %17 : vector<1x128xf32> to vector<512x128xf32>
    %22 = arith.addf %20, %21 : vector<512x128xf32>
    %cst_11 = arith.constant 0.000000e+00 : f32
    %23 = vector.broadcast %cst_11 : f32 to vector<512x128xf32>
    %24 = arith.maximumf %22, %23 : vector<512x128xf32>
    %25 = arith.truncf %24 : vector<512x128xf32> to vector<512x128xbf16>
    %c0_12 = arith.constant 0 : index
    %c0_13 = arith.constant 0 : index
    %26 = vector.load %arg5[%c0_12, %c0_13] : memref<512x128xbf16, #tpu.memory_space<vmem>>, vector<512x128xbf16>
    tpu.vector_store %arg5[%c0_12, %c0_13], %25 {strides = array<i32>} : memref<512x128xbf16, #tpu.memory_space<vmem>>, vector<512x128xbf16>,
    return
  }
  func.func @transform_0(%arg0: i32) -> (i32, i32) {
    %c0_i32 = arith.constant 0 : i32
    %c0_i32_0 = arith.constant 0 : i32
    return %arg0, %c0_i32 : i32, i32
  }
  func.func @transform_1(%arg0: i32) -> (i32, i32) {
    %c0_i32 = arith.constant 0 : i32
    %c0_i32_0 = arith.constant 0 : i32
    %c0_i32_1 = arith.constant 0 : i32
    return %c0_i32, %c0_i32_0 : i32, i32
  }
  func.func @transform_2(%arg0: i32) -> (i32, i32) {
    %c0_i32 = arith.constant 0 : i32
    %c0_i32_0 = arith.constant 0 : i32
    %c0_i32_1 = arith.constant 0 : i32
    return %c0_i32, %c0_i32_0 : i32, i32
  }
  func.func @transform_3(%arg0: i32) -> (i32, i32) {
    %c0_i32 = arith.constant 0 : i32
    %c0_i32_0 = arith.constant 0 : i32
    %c0_i32_1 = arith.constant 0 : i32
    return %c0_i32, %c0_i32_0 : i32, i32
  }
  func.func @transform_4(%arg0: i32) -> (i32, i32) {
    %c0_i32 = arith.constant 0 : i32
    %c0_i32_0 = arith.constant 0 : i32
    return %arg0, %c0_i32 : i32, i32
  }
}

module attributes {stable_mosaic.version = 11 : i64} {
  func.func @_conv_matmul_stats_kernel(%arg0: i32, %arg1: memref<512x256xbf16, #tpu.memory_space<vmem>>, %arg2: memref<256x128xbf16, #tpu.memory_space<vmem>>, %arg3: memref<512x128xf32, #tpu.memory_space<vmem>>, %arg4: memref<2x128xf32, #tpu.memory_space<vmem>>) attributes {dimension_semantics = [#tpu.dimension_semantics<arbitrary>], iteration_bounds = array<i64: 2>, scalar_prefetch = 0 : i64, scratch_operands = 0 : i64, tpu.core_type = #tpu.core_type<tc>, window_params = [{transform_indices = @transform_0, window_bounds = array<i64: 512, 256>}, {pipeline_mode = #tpu.pipeline_mode<synchronous>, transform_indices = @transform_1, window_bounds = array<i64: 256, 128>}, {transform_indices = @transform_2, window_bounds = array<i64: 512, 128>}, {pipeline_mode = #tpu.pipeline_mode<synchronous>, transform_indices = @transform_3, window_bounds = array<i64: 2, 128>}]} {
    %c0 = arith.constant 0 : index
    %c0_0 = arith.constant 0 : index
    %0 = vector.load %arg1[%c0, %c0_0] : memref<512x256xbf16, #tpu.memory_space<vmem>>, vector<512x256xbf16>
    %c0_1 = arith.constant 0 : index
    %c0_2 = arith.constant 0 : index
    %1 = vector.load %arg2[%c0_1, %c0_2] : memref<256x128xbf16, #tpu.memory_space<vmem>>, vector<256x128xbf16>
    %cst = arith.constant dense<0.000000e+00> : vector<512x128xf32>
    %2 = tpu.matmul %0, %1, %cst {dimension_numbers = #tpu.dot_dimension_numbers<[1], [0], [0], [1], [0, 0, 1, 1], [], []>} : vector<512x256xbf16>, vector<256x128xbf16>, vector<512x128xf32> -> vector<512x128xf32>
    %c0_3 = arith.constant 0 : index
    %c0_4 = arith.constant 0 : index
    %3 = vector.load %arg3[%c0_3, %c0_4] : memref<512x128xf32, #tpu.memory_space<vmem>>, vector<512x128xf32>
    tpu.vector_store %arg3[%c0_3, %c0_4], %2 {strides = array<i32>} : memref<512x128xf32, #tpu.memory_space<vmem>>, vector<512x128xf32>,
    %c0_i32 = arith.constant 0 : i32
    %4 = arith.cmpi eq, %arg0, %c0_i32 : i32
    %5 = arith.extui %4 : i1 to i32
    %c0_i32_5 = arith.constant 0 : i32
    %6 = arith.cmpi ne, %5, %c0_i32_5 : i32
    scf.if %6 {
      %cst_12 = arith.constant 0.000000e+00 : f32
      %16 = vector.broadcast %cst_12 : f32 to vector<2x128xf32>
      %c0_13 = arith.constant 0 : index
      %c0_14 = arith.constant 0 : index
      %17 = vector.load %arg4[%c0_13, %c0_14] : memref<2x128xf32, #tpu.memory_space<vmem>>, vector<2x128xf32>
      tpu.vector_store %arg4[%c0_13, %c0_14], %16 {strides = array<i32>} : memref<2x128xf32, #tpu.memory_space<vmem>>, vector<2x128xf32>,
    } else {
    }
    %c0_6 = arith.constant 0 : index
    %c0_7 = arith.constant 0 : index
    %7 = vector.load %arg4[%c0_6, %c0_7] : memref<2x128xf32, #tpu.memory_space<vmem>>, vector<2x128xf32>
    %cst_8 = arith.constant dense<0.000000e+00> : vector<128xf32>
    %8 = vector.multi_reduction <add>, %2, %cst_8 [0] : vector<512x128xf32> to vector<128xf32>
    %9 = vector.shape_cast %8 : vector<128xf32> to vector<1x128xf32>
    %10 = arith.mulf %2, %2 : vector<512x128xf32>
    %cst_9 = arith.constant dense<0.000000e+00> : vector<128xf32>
    %11 = vector.multi_reduction <add>, %10, %cst_9 [0] : vector<512x128xf32> to vector<128xf32>
    %12 = vector.shape_cast %11 : vector<128xf32> to vector<1x128xf32>
    %13 = tpu.concatenate %9, %12 in 0 : vector<1x128xf32>, vector<1x128xf32> -> vector<2x128xf32>
    %14 = arith.addf %7, %13 : vector<2x128xf32>
    %c0_10 = arith.constant 0 : index
    %c0_11 = arith.constant 0 : index
    %15 = vector.load %arg4[%c0_10, %c0_11] : memref<2x128xf32, #tpu.memory_space<vmem>>, vector<2x128xf32>
    tpu.vector_store %arg4[%c0_10, %c0_11], %14 {strides = array<i32>} : memref<2x128xf32, #tpu.memory_space<vmem>>, vector<2x128xf32>,
    return
  }
  func.func @transform_0(%arg0: i32) -> (i32, i32) {
    %c0_i32 = arith.constant 0 : i32
    %c0_i32_0 = arith.constant 0 : i32
    return %arg0, %c0_i32 : i32, i32
  }
  func.func @transform_1(%arg0: i32) -> (i32, i32) {
    %c0_i32 = arith.constant 0 : i32
    %c0_i32_0 = arith.constant 0 : i32
    %c0_i32_1 = arith.constant 0 : i32
    return %c0_i32, %c0_i32_0 : i32, i32
  }
  func.func @transform_2(%arg0: i32) -> (i32, i32) {
    %c0_i32 = arith.constant 0 : i32
    %c0_i32_0 = arith.constant 0 : i32
    return %arg0, %c0_i32 : i32, i32
  }
  func.func @transform_3(%arg0: i32) -> (i32, i32) {
    %c0_i32 = arith.constant 0 : i32
    %c0_i32_0 = arith.constant 0 : i32
    %c0_i32_1 = arith.constant 0 : i32
    return %c0_i32, %c0_i32_0 : i32, i32
  }
}

module attributes {stable_mosaic.version = 11 : i64} {
  func.func @_bn_relu_kernel(%arg0: i32, %arg1: memref<512x128xf32, #tpu.memory_space<vmem>>, %arg2: memref<2x128xf32, #tpu.memory_space<vmem>>, %arg3: memref<1x128xf32, #tpu.memory_space<vmem>>, %arg4: memref<1x128xf32, #tpu.memory_space<vmem>>, %arg5: memref<512x128xf32, #tpu.memory_space<vmem>>) attributes {dimension_semantics = [#tpu.dimension_semantics<parallel>], iteration_bounds = array<i64: 2>, scalar_prefetch = 0 : i64, scratch_operands = 0 : i64, tpu.core_type = #tpu.core_type<tc>, window_params = [{transform_indices = @transform_0, window_bounds = array<i64: 512, 128>}, {pipeline_mode = #tpu.pipeline_mode<synchronous>, transform_indices = @transform_1, window_bounds = array<i64: 2, 128>}, {pipeline_mode = #tpu.pipeline_mode<synchronous>, transform_indices = @transform_2, window_bounds = array<i64: 1, 128>}, {pipeline_mode = #tpu.pipeline_mode<synchronous>, transform_indices = @transform_3, window_bounds = array<i64: 1, 128>}, {transform_indices = @transform_4, window_bounds = array<i64: 512, 128>}]} {
    %c0 = arith.constant 0 : index
    %c0_0 = arith.constant 0 : index
    %0 = vector.load %arg2[%c0, %c0_0] : memref<2x128xf32, #tpu.memory_space<vmem>>, vector<1x128xf32>
    %cst = arith.constant 9.765625E-4 : f32
    %1 = vector.broadcast %cst : f32 to vector<1x128xf32>
    %2 = arith.mulf %0, %1 : vector<1x128xf32>
    %c1 = arith.constant 1 : index
    %c0_1 = arith.constant 0 : index
    %3 = vector.load %arg2[%c1, %c0_1] : memref<2x128xf32, #tpu.memory_space<vmem>>, vector<1x128xf32>
    %cst_2 = arith.constant 9.765625E-4 : f32
    %4 = vector.broadcast %cst_2 : f32 to vector<1x128xf32>
    %5 = arith.mulf %3, %4 : vector<1x128xf32>
    %6 = arith.mulf %2, %2 : vector<1x128xf32>
    %7 = arith.subf %5, %6 : vector<1x128xf32>
    %cst_3 = arith.constant 0.000000e+00 : f32
    %8 = vector.broadcast %cst_3 : f32 to vector<1x128xf32>
    %9 = arith.maximumf %7, %8 : vector<1x128xf32>
    %c0_4 = arith.constant 0 : index
    %c0_5 = arith.constant 0 : index
    %10 = vector.load %arg3[%c0_4, %c0_5] : memref<1x128xf32, #tpu.memory_space<vmem>>, vector<1x128xf32>
    %cst_6 = arith.constant 9.99999974E-6 : f32
    %11 = vector.broadcast %cst_6 : f32 to vector<1x128xf32>
    %12 = arith.addf %9, %11 : vector<1x128xf32>
    %13 = math.rsqrt %12 : vector<1x128xf32>
    %14 = arith.mulf %10, %13 : vector<1x128xf32>
    %c0_7 = arith.constant 0 : index
    %c0_8 = arith.constant 0 : index
    %15 = vector.load %arg4[%c0_7, %c0_8] : memref<1x128xf32, #tpu.memory_space<vmem>>, vector<1x128xf32>
    %16 = arith.mulf %2, %14 : vector<1x128xf32>
    %17 = arith.subf %15, %16 : vector<1x128xf32>
    %c0_9 = arith.constant 0 : index
    %c0_10 = arith.constant 0 : index
    %18 = vector.load %arg1[%c0_9, %c0_10] : memref<512x128xf32, #tpu.memory_space<vmem>>, vector<512x128xf32>
    %19 = vector.broadcast %14 : vector<1x128xf32> to vector<512x128xf32>
    %20 = arith.mulf %18, %19 : vector<512x128xf32>
    %21 = vector.broadcast %17 : vector<1x128xf32> to vector<512x128xf32>
    %22 = arith.addf %20, %21 : vector<512x128xf32>
    %cst_11 = arith.constant 0.000000e+00 : f32
    %23 = vector.broadcast %cst_11 : f32 to vector<512x128xf32>
    %24 = arith.maximumf %22, %23 : vector<512x128xf32>
    %c0_12 = arith.constant 0 : index
    %c0_13 = arith.constant 0 : index
    %25 = vector.load %arg5[%c0_12, %c0_13] : memref<512x128xf32, #tpu.memory_space<vmem>>, vector<512x128xf32>
    tpu.vector_store %arg5[%c0_12, %c0_13], %24 {strides = array<i32>} : memref<512x128xf32, #tpu.memory_space<vmem>>, vector<512x128xf32>,
    return
  }
  func.func @transform_0(%arg0: i32) -> (i32, i32) {
    %c0_i32 = arith.constant 0 : i32
    %c0_i32_0 = arith.constant 0 : i32
    return %arg0, %c0_i32 : i32, i32
  }
  func.func @transform_1(%arg0: i32) -> (i32, i32) {
    %c0_i32 = arith.constant 0 : i32
    %c0_i32_0 = arith.constant 0 : i32
    %c0_i32_1 = arith.constant 0 : i32
    return %c0_i32, %c0_i32_0 : i32, i32
  }
  func.func @transform_2(%arg0: i32) -> (i32, i32) {
    %c0_i32 = arith.constant 0 : i32
    %c0_i32_0 = arith.constant 0 : i32
    %c0_i32_1 = arith.constant 0 : i32
    return %c0_i32, %c0_i32_0 : i32, i32
  }
  func.func @transform_3(%arg0: i32) -> (i32, i32) {
    %c0_i32 = arith.constant 0 : i32
    %c0_i32_0 = arith.constant 0 : i32
    %c0_i32_1 = arith.constant 0 : i32
    return %c0_i32, %c0_i32_0 : i32, i32
  }
  func.func @transform_4(%arg0: i32) -> (i32, i32) {
    %c0_i32 = arith.constant 0 : i32
    %c0_i32_0 = arith.constant 0 : i32
    return %arg0, %c0_i32 : i32, i32
  }
}

</mosaic_0001>

<llo_original>
// kernel: down_forward.5
$region0: #{down_forward.5}
  #allocation0 [shape = 'u32[]', space=smem, size = 0x4, offset = 0x4, fixed_abs, tag = 'smem constant byte address 0x4 - core index']
  #allocation1 [shape = 'u32[72,128]{1,0:T(1,128)}', space=vmem, size = 0x9000, scoped, tag = 'internal scratch']
  %s0 = inlined_call_operand.vmem [shape: f32[2,8,2048], index: 0, kind: input, shape index: {}]
  %s1 = inlined_call_operand.vmem [shape: bf16[2,1,2048], index: 1, kind: output, shape index: {}]
  %s2 = sld [smem:[#allocation0]]
  $region37: #{down_forward.5} parent=0
    _
  %s4 = ssub.s32 1, %s2
  %s5 = scalar_select 0, %s4, %s2
  loop: start=0, step=1, limit=4
  $region2: #{down_forward.5} parent=0 // loop_pre_header
    _
  $region3: #{down_forward.5} parent=0 // loop_header
    %s7 = sphi 0, %s11
    %p8 = scmp.ge.s32.totalorder %s7, 4
    %s17 = sphi 0, %s19
    %s20 = sphi 0, %s17
    %s21 = sphi 0, %s20
    %s37 = sphi 0, %s21
    %s43 = sphi 0, %s45
    %s46 = sphi 0, %s43
    %s47 = sphi 0, %s46
    %s63 = sphi 0, %s47
  $region4: #{down_forward.5} parent=0 // loop_header_branch
    %10 = sbr.rel (%p8) target = $region8
  $region5: #{down_forward.5} parent=0 // loop_body
    %s12 = ssub.s32 %s7, 1
    %s13 = ssub.s32 %s7, 2
    %s14 = sadd.s32 %s7, 1
    %s15 = ssub.s32 %s7, %s14
    %p16 = scmp.eq.s32.totalorder %s15, 0
    %s18 = sadd.s32 %s17, 1
    %s19 = scalar_select %p16, %s17, %s18
    %p22 = pneg %p16
    %p23 = scmp.eq.s32.totalorder %s7, 1
    %p24 = por %p22, %p23
    %p25 = scmp.ne.s32.totalorder %s17, %s20
    %p26 = scmp.eq.s32.totalorder %s7, 0
    %p27 = por %p25, %p26
    %p28 = scmp.ne.s32.totalorder %s17, %s20
    %p29 = scmp.eq.s32.totalorder %s12, 1
    %p30 = por %p28, %p29
    %p31 = scmp.ne.s32.totalorder %s20, %s21
    %p32 = scmp.eq.s32.totalorder %s12, 0
    %p33 = por %p31, %p32
    %p34 = scmp.ne.s32.totalorder %s20, %s21
    %p35 = scmp.eq.s32.totalorder %s13, 1
    %p36 = por %p34, %p35
    %p38 = scmp.ne.s32.totalorder %s21, %s37
    %p39 = scmp.eq.s32.totalorder %s13, 0
    %p40 = por %p38, %p39
    %s41 = ssub.s32 %s7, %s14
    %p42 = scmp.eq.s32.totalorder %s41, 0
    %s44 = sadd.s32 %s43, 1
    %s45 = scalar_select %p42, %s43, %s44
    %p48 = pneg %p42
    %p49 = scmp.eq.s32.totalorder %s7, 1
    %p50 = por %p48, %p49
    %p51 = scmp.ne.s32.totalorder %s43, %s46
    %p52 = scmp.eq.s32.totalorder %s7, 0
    %p53 = por %p51, %p52
    %p54 = scmp.ne.s32.totalorder %s43, %s46
    %p55 = scmp.eq.s32.totalorder %s12, 1
    %p56 = por %p54, %p55
    %p57 = scmp.ne.s32.totalorder %s46, %s47
    %p58 = scmp.eq.s32.totalorder %s12, 0
    %p59 = por %p57, %p58
    %p60 = scmp.ne.s32.totalorder %s46, %s47
    %p61 = scmp.eq.s32.totalorder %s13, 1
    %p62 = por %p60, %p61
    %p64 = scmp.ne.s32.totalorder %s47, %s63
    %p65 = scmp.eq.s32.totalorder %s13, 0
    %p66 = por %p64, %p65
    %p67 = scmp.le.s32.totalorder 1, %s7
    %p68 = scmp.lt.s32.totalorder %s7, 3
    %p69 = pnand %p67, %p68
    %p70 = pneg %p69
    // Predicated region
    $region9: #{down_forward.5} parent=5 // pred_check
      _
    $region10: #{down_forward.5} parent=5 // pred_check_branch
      %72 = sbr.rel (%p69) target = $region12
    $region11: #{down_forward.5} parent=5 // pred_region
      %s73 = ssub.s32 %s7, 1
    $region12: #{down_forward.5} parent=5 // pred_fallthru
      _
    %p74 = scmp.lt.s32.totalorder %s7, 2
    // Predicated region
    $region13: #{down_forward.5} parent=5 // pred_check
      %p75 = pneg %p74
    $region14: #{down_forward.5} parent=5 // pred_check_branch
      %77 = sbr.rel (%p75) target = $region16
    $region15: #{down_forward.5} parent=5 // pred_region
      // Predicated region
      $region17: #{down_forward.5} parent=15 // pred_check
        %p78 = pneg %p27
      $region18: #{down_forward.5} parent=15 // pred_check_branch
        %80 = sbr.rel (%p78) target = $region20
      $region19: #{down_forward.5} parent=15 // pred_region
        %p81 = scmp.lt.s32.totalorder %s7, 1
        %s82 = scalar_select %p81, %s7, 1
        %s83 = smul.addr %s82, 16
        %s84 = smul.addr %s83, 8
        %s85 = scalar_lea.vmem %s0, %s84
      $region20: #{down_forward.5} parent=15 // pred_fallthru
        _
    $region16: #{down_forward.5} parent=5 // pred_fallthru
      _
    %p86 = scmp.le.s32.totalorder 1, %s7
    %p87 = scmp.lt.s32.totalorder %s7, 3
    %p88 = pnand %p86, %p87
    %p89 = pneg %p88
    // Predicated region
    $region21: #{down_forward.5} parent=5 // pred_check
      _
    $region22: #{down_forward.5} parent=5 // pred_check_branch
      %91 = sbr.rel (%p88) target = $region24
    $region23: #{down_forward.5} parent=5 // pred_region
      %s92 = ssub.s32 %s7, 1
      %p93 = scmp.lt.s32.totalorder %s12, 1
      %s94 = scalar_select %p93, %s12, 1
      %s95 = smul.addr %s94, 16
      %s96 = smul.addr %s95, 8
      %s97 = scalar_lea.vmem %s0, %s96
      %p98 = pneg %p33
      %p99 = pneg %p30
      %p100 = pneg %p59
      %p101 = pneg %p56
      %p102 = scmp.lt.s32.totalorder %s12, 1
      %s103 = scalar_select %p102, %s12, 1
      %s104 = smul.addr %s103, 16
      %s105 = scalar_lea.vmem %s1, %s104
      %p106 = scmp.lt.s32.totalorder %s12, 1
      %s107 = scalar_select %p106, %s12, 1
      %s108 = smul.addr %s107, 16
      %s109 = smul.addr %s108, 8
      %s110 = scalar_lea.vmem %s0, %s109
      %p111 = scmp.lt.s32.totalorder %s12, 1
      %s112 = scalar_select %p111, %s12, 1
      %s113 = smul.addr %s112, 16
      %s114 = scalar_lea.vmem %s1, %s113
      %v115 = vld [vmem:[%s110] sm:$0xff]
      %v116 = vld [vmem:[%s110 + $0x8] sm:$0xff]
      %v117 = vld [vmem:[%s110 + $0x10] sm:$0xff]
      %v118 = vld [vmem:[%s110 + $0x18] sm:$0xff]
      %v119 = vld [vmem:[%s110 + $0x20] sm:$0xff]
      %v120 = vld [vmem:[%s110 + $0x28] sm:$0xff]
      %v121 = vld [vmem:[%s110 + $0x30] sm:$0xff]
      %v122 = vld [vmem:[%s110 + $0x38] sm:$0xff]
      %v123 = vld [vmem:[%s110 + $0x40] sm:$0xff]
      %v124 = vld [vmem:[%s110 + $0x48] sm:$0xff]
      %v125 = vld [vmem:[%s110 + $0x50] sm:$0xff]
      %v126 = vld [vmem:[%s110 + $0x58] sm:$0xff]
      %v127 = vld [vmem:[%s110 + $0x60] sm:$0xff]
      %v128 = vld [vmem:[%s110 + $0x68] sm:$0xff]
      %v129 = vld [vmem:[%s110 + $0x70] sm:$0xff]
      %v130 = vld [vmem:[%s110 + $0x78] sm:$0xff]
      %v147 = vrot.slane %v115, 4
      %v148 = vrot.slane %v116, 4
      %v149 = vrot.slane %v117, 4
      %v150 = vrot.slane %v118, 4
      %v151 = vrot.slane %v119, 4
      %v152 = vrot.slane %v120, 4
      %v153 = vrot.slane %v121, 4
      %v154 = vrot.slane %v122, 4
      %v155 = vrot.slane %v123, 4
      %v156 = vrot.slane %v124, 4
      %v157 = vrot.slane %v125, 4
      %v158 = vrot.slane %v126, 4
      %v159 = vrot.slane %v127, 4
      %v160 = vrot.slane %v128, 4
      %v161 = vrot.slane %v129, 4
      %v162 = vrot.slane %v130, 4
      %v179 = vmax.f32 %v115, %v147
      %v180 = vmax.f32 %v116, %v148
      %v181 = vmax.f32 %v117, %v149
      %v182 = vmax.f32 %v118, %v150
      %v183 = vmax.f32 %v119, %v151
      %v184 = vmax.f32 %v120, %v152
      %v185 = vmax.f32 %v121, %v153
      %v186 = vmax.f32 %v122, %v154
      %v187 = vmax.f32 %v123, %v155
      %v188 = vmax.f32 %v124, %v156
      %v189 = vmax.f32 %v125, %v157
      %v190 = vmax.f32 %v126, %v158
      %v191 = vmax.f32 %v127, %v159
      %v192 = vmax.f32 %v128, %v160
      %v193 = vmax.f32 %v129, %v161
      %v194 = vmax.f32 %v130, %v162
      %v211 = vrot.slane %v179, 2
      %v212 = vrot.slane %v180, 2
      %v213 = vrot.slane %v181, 2
      %v214 = vrot.slane %v182, 2
      %v215 = vrot.slane %v183, 2
      %v216 = vrot.slane %v184, 2
      %v217 = vrot.slane %v185, 2
      %v218 = vrot.slane %v186, 2
      %v219 = vrot.slane %v187, 2
      %v220 = vrot.slane %v188, 2
      %v221 = vrot.slane %v189, 2
      %v222 = vrot.slane %v190, 2
      %v223 = vrot.slane %v191, 2
      %v224 = vrot.slane %v192, 2
      %v225 = vrot.slane %v193, 2
      %v226 = vrot.slane %v194, 2
      %v243 = vmax.f32 %v179, %v211
      %v244 = vmax.f32 %v180, %v212
      %v245 = vmax.f32 %v181, %v213
      %v246 = vmax.f32 %v182, %v214
      %v247 = vmax.f32 %v183, %v215
      %v248 = vmax.f32 %v184, %v216
      %v249 = vmax.f32 %v185, %v217
      %v250 = vmax.f32 %v186, %v218
      %v251 = vmax.f32 %v187, %v219
      %v252 = vmax.f32 %v188, %v220
      %v253 = vmax.f32 %v189, %v221
      %v254 = vmax.f32 %v190, %v222
      %v255 = vmax.f32 %v191, %v223
      %v256 = vmax.f32 %v192, %v224
      %v257 = vmax.f32 %v193, %v225
      %v258 = vmax.f32 %v194, %v226
      %v275 = vrot.slane %v243, 1
      %v276 = vrot.slane %v244, 1
      %v277 = vrot.slane %v245, 1
      %v278 = vrot.slane %v246, 1
      %v279 = vrot.slane %v247, 1
      %v280 = vrot.slane %v248, 1
      %v281 = vrot.slane %v249, 1
      %v282 = vrot.slane %v250, 1
      %v283 = vrot.slane %v251, 1
      %v284 = vrot.slane %v252, 1
      %v285 = vrot.slane %v253, 1
      %v286 = vrot.slane %v254, 1
      %v287 = vrot.slane %v255, 1
      %v288 = vrot.slane %v256, 1
      %v289 = vrot.slane %v257, 1
      %v290 = vrot.slane %v258, 1
      %v307 = vmax.f32 %v243, %v275
      %v308 = vmax.f32 %v244, %v276
      %v309 = vmax.f32 %v245, %v277
      %v310 = vmax.f32 %v246, %v278
      %v311 = vmax.f32 %v247, %v279
      %v312 = vmax.f32 %v248, %v280
      %v313 = vmax.f32 %v249, %v281
      %v314 = vmax.f32 %v250, %v282
      %v315 = vmax.f32 %v251, %v283
      %v316 = vmax.f32 %v252, %v284
      %v317 = vmax.f32 %v253, %v285
      %v318 = vmax.f32 %v254, %v286
      %v319 = vmax.f32 %v255, %v287
      %v320 = vmax.f32 %v256, %v288
      %v321 = vmax.f32 %v257, %v289
      %v322 = vmax.f32 %v258, %v290
      %v323 = vpack.c.bf16 %v308, %v307
      %v324 = vpack.c.bf16 %v310, %v309
      %v325 = vpack.c.bf16 %v312, %v311
      %v326 = vpack.c.bf16 %v314, %v313
      %v327 = vpack.c.bf16 %v316, %v315
      %v328 = vpack.c.bf16 %v318, %v317
      %v329 = vpack.c.bf16 %v320, %v319
      %v330 = vpack.c.bf16 %v322, %v321
      %v339 = vrot.slane %v323, 3
      %v340 = vrot.slane %v324, 6
      %v341 = vrot.slane %v324, 1
      %v342 = vrot.slane %v325, 4
      %v343 = vrot.slane %v325, 7
      %v344 = vrot.slane %v326, 2
      %v345 = vrot.slane %v326, 5
      %v346 = vrot.slane %v327, 3
      %v347 = vrot.slane %v328, 6
      %v348 = vrot.slane %v328, 1
      %v349 = vrot.slane %v329, 4
      %v350 = vrot.slane %v329, 7
      %v351 = vrot.slane %v330, 2
      %v352 = vrot.slane %v330, 5
      %vm353 = vcmask 1040384
      %v356 = vsel %vm353, %v323, %v339
      %vm357 = vcmask 1042434
      %v360 = vsel %vm357, %v340, %v341
      %vm361 = vcmask 1041408
      %v362 = vsel %vm361, %v356, %v360
      %vm363 = vcmask 1044484
      %v366 = vsel %vm363, %v342, %v343
      %vm367 = vcmask 1046534
      %v370 = vsel %vm367, %v344, %v345
      %vm371 = vcmask 1045508
      %v372 = vsel %vm371, %v366, %v370
      %vm373 = vcmask 1043456
      %v374 = vsel %vm373, %v362, %v372
      %v377 = vsel %vm353, %v327, %v346
      %v380 = vsel %vm357, %v347, %v348
      %v381 = vsel %vm361, %v377, %v380
      %v384 = vsel %vm363, %v349, %v350
      %v387 = vsel %vm367, %v351, %v352
      %v388 = vsel %vm371, %v384, %v387
      %v389 = vsel %vm373, %v381, %v388
      %vm392 = vcmask 1040384
      %vm393 = vsmask.f32 256
      %vm394 = vmand %vm392, %vm393
      %vm395 = vcmask 1041409
      %vm396 = vsmask.f32 1280
      %vm397 = vmand %vm395, %vm396
      %vm398 = vmor %vm397, %vm394
      %vm399 = vcmask 1042434
      %vm400 = vsmask.f32 2304
      %vm401 = vmand %vm399, %vm400
      %vm402 = vmor %vm401, %vm398
      %vm403 = vcmask 1043459
      %vm404 = vsmask.f32 3328
      %vm405 = vmand %vm403, %vm404
      %vm406 = vmor %vm405, %vm402
      %vm407 = vcmask 1044484
      %vm408 = vsmask.f32 4352
      %vm409 = vmand %vm407, %vm408
      %vm410 = vmor %vm409, %vm406
      %vm411 = vcmask 1045509
      %vm412 = vsmask.f32 5376
      %vm413 = vmand %vm411, %vm412
      %vm414 = vmor %vm413, %vm410
      %vm415 = vcmask 1046534
      %vm416 = vsmask.f32 6400
      %vm417 = vmand %vm415, %vm416
      %vm418 = vmor %vm417, %vm414
      %vm419 = vcmask 1047559
      %vm420 = vsmask.f32 7424
      %vm421 = vmand %vm419, %vm420
      %vm422 = vmor %vm421, %vm418
      %v423 = vld [vmem:[%s114] sm:$0xff]
      %v424 = vsel %vm422, %v374, %v423
      %425 = vst [vmem:[%s114] sm:$0xff] %v424
      %v426 = vld [vmem:[%s114 + $0x8] sm:$0xff]
      %v427 = vsel %vm422, %v389, %v426
      %428 = vst [vmem:[%s114 + $0x8] sm:$0xff] %v427
      %p429 = scmp.lt.s32.totalorder %s12, 1
      %s430 = scalar_select %p429, %s12, 1
      %s431 = smul.addr %s430, 16
      %s432 = scalar_lea.vmem %s1, %s431
      // Predicated region
      $region25: #{down_forward.5} parent=23 // pred_check
        %p433 = pneg %p56
      $region26: #{down_forward.5} parent=23 // pred_check_branch
        %435 = sbr.rel (%p433) target = $region28
      $region27: #{down_forward.5} parent=23 // pred_region
        _
      $region28: #{down_forward.5} parent=23 // pred_fallthru
        _
    $region24: #{down_forward.5} parent=5 // pred_fallthru
      _
    %p436 = scmp.le.s32.totalorder 2, %s7
    // Predicated region
    $region29: #{down_forward.5} parent=5 // pred_check
      %p437 = pneg %p436
    $region30: #{down_forward.5} parent=5 // pred_check_branch
      %439 = sbr.rel (%p437) target = $region32
    $region31: #{down_forward.5} parent=5 // pred_region
      %s440 = ssub.s32 %s7, 2
      // Predicated region
      $region33: #{down_forward.5} parent=31 // pred_check
        %p441 = pneg %p62
      $region34: #{down_forward.5} parent=31 // pred_check_branch
        %443 = sbr.rel (%p441) target = $region36
      $region35: #{down_forward.5} parent=31 // pred_region
        %p444 = scmp.lt.s32.totalorder %s13, 1
        %s445 = scalar_select %p444, %s13, 1
        %s446 = smul.addr %s445, 16
        %s447 = scalar_lea.vmem %s1, %s446
      $region36: #{down_forward.5} parent=31 // pred_fallthru
        _
    $region32: #{down_forward.5} parent=5 // pred_fallthru
      _
  $region6: #{down_forward.5} parent=0 // loop_footer
    %s11 = sadd.s32 1, %s7
  $region7: #{down_forward.5} parent=0 // loop_footer_branch
    %6 = sbr.rel target = $region3
  $region8: #{down_forward.5} parent=0 // loop_exit
    _

// kernel: down_forward.6
$region0: #{down_forward.6}
  #allocation0 [shape = 'u32[]', space=smem, size = 0x4, offset = 0x4, fixed_abs, tag = 'smem constant byte address 0x4 - core index']
  #allocation1 [shape = 'u32[72,128]{1,0:T(1,128)}', space=vmem, size = 0x9000, scoped, tag = 'internal scratch']
  %s0 = inlined_call_operand.vmem [shape: bf16[1024,128], index: 0, kind: input, shape index: {}]
  %s1 = inlined_call_operand.vmem [shape: bf16[128,128], index: 1, kind: input, shape index: {}]
  %s2 = inlined_call_operand.vmem [shape: f32[1024,128], index: 2, kind: output, shape index: {0}]
  %s3 = inlined_call_operand.vmem [shape: f32[2,128], index: 3, kind: output, shape index: {1}]
  %4 = xla_tuple %s2, %s3
  %s5 = sld [smem:[#allocation0]]
  $region53: #{down_forward.6} parent=0
    _
  %s7 = ssub.s32 1, %s5
  %s8 = scalar_select 0, %s7, %s5
  loop: start=0, step=1, limit=4
  $region2: #{down_forward.6} parent=0 // loop_pre_header
    _
  $region3: #{down_forward.6} parent=0 // loop_header
    %s10 = sphi 0, %s14
    %p11 = scmp.ge.s32.totalorder %s10, 4
    %s20 = sphi 0, %s22
    %s23 = sphi 0, %s20
    %s24 = sphi 0, %s23
    %s40 = sphi 0, %s24
    %s44 = sphi 0, %s44
    %s46 = sphi 0, %s44
    %s47 = sphi 0, %s46
    %s61 = sphi 0, %s47
    %s67 = sphi 0, %s69
    %s70 = sphi 0, %s67
    %s71 = sphi 0, %s70
    %s87 = sphi 0, %s71
    %s91 = sphi 0, %s91
    %s93 = sphi 0, %s91
    %s94 = sphi 0, %s93
    %s108 = sphi 0, %s94
  $region4: #{down_forward.6} parent=0 // loop_header_branch
    %13 = sbr.rel (%p11) target = $region8
  $region5: #{down_forward.6} parent=0 // loop_body
    %s15 = ssub.s32 %s10, 1
    %s16 = ssub.s32 %s10, 2
    %s17 = sadd.s32 %s10, 1
    %s18 = ssub.s32 %s10, %s17
    %p19 = scmp.eq.s32.totalorder %s18, 0
    %s21 = sadd.s32 %s20, 1
    %s22 = scalar_select %p19, %s20, %s21
    %p25 = pneg %p19
    %p26 = scmp.eq.s32.totalorder %s10, 1
    %p27 = por %p25, %p26
    %p28 = scmp.ne.s32.totalorder %s20, %s23
    %p29 = scmp.eq.s32.totalorder %s10, 0
    %p30 = por %p28, %p29
    %p31 = scmp.ne.s32.totalorder %s20, %s23
    %p32 = scmp.eq.s32.totalorder %s15, 1
    %p33 = por %p31, %p32
    %p34 = scmp.ne.s32.totalorder %s23, %s24
    %p35 = scmp.eq.s32.totalorder %s15, 0
    %p36 = por %p34, %p35
    %p37 = scmp.ne.s32.totalorder %s23, %s24
    %p38 = scmp.eq.s32.totalorder %s16, 1
    %p39 = por %p37, %p38
    %p41 = scmp.ne.s32.totalorder %s24, %s40
    %p42 = scmp.eq.s32.totalorder %s16, 0
    %p43 = por %p41, %p42
    %s45 = sadd.s32 %s44, 1
    %p48 = scmp.eq.s32.totalorder %s10, 1
    %p49 = scmp.ne.s32.totalorder %s44, %s46
    %p50 = scmp.eq.s32.totalorder %s10, 0
    %p51 = por %p49, %p50
    %p52 = scmp.ne.s32.totalorder %s44, %s46
    %p53 = scmp.eq.s32.totalorder %s15, 1
    %p54 = por %p52, %p53
    %p55 = scmp.ne.s32.totalorder %s46, %s47
    %p56 = scmp.eq.s32.totalorder %s15, 0
    %p57 = por %p55, %p56
    %p58 = scmp.ne.s32.totalorder %s46, %s47
    %p59 = scmp.eq.s32.totalorder %s16, 1
    %p60 = por %p58, %p59
    %p62 = scmp.ne.s32.totalorder %s47, %s61
    %p63 = scmp.eq.s32.totalorder %s16, 0
    %p64 = por %p62, %p63
    %s65 = ssub.s32 %s10, %s17
    %p66 = scmp.eq.s32.totalorder %s65, 0
    %s68 = sadd.s32 %s67, 1
    %s69 = scalar_select %p66, %s67, %s68
    %p72 = pneg %p66
    %p73 = scmp.eq.s32.totalorder %s10, 1
    %p74 = por %p72, %p73
    %p75 = scmp.ne.s32.totalorder %s67, %s70
    %p76 = scmp.eq.s32.totalorder %s10, 0
    %p77 = por %p75, %p76
    %p78 = scmp.ne.s32.totalorder %s67, %s70
    %p79 = scmp.eq.s32.totalorder %s15, 1
    %p80 = por %p78, %p79
    %p81 = scmp.ne.s32.totalorder %s70, %s71
    %p82 = scmp.eq.s32.totalorder %s15, 0
    %p83 = por %p81, %p82
    %p84 = scmp.ne.s32.totalorder %s70, %s71
    %p85 = scmp.eq.s32.totalorder %s16, 1
    %p86 = por %p84, %p85
    %p88 = scmp.ne.s32.totalorder %s71, %s87
    %p89 = scmp.eq.s32.totalorder %s16, 0
    %p90 = por %p88, %p89
    %s92 = sadd.s32 %s91, 1
    %p95 = scmp.eq.s32.totalorder %s10, 1
    %p96 = scmp.ne.s32.totalorder %s91, %s93
    %p97 = scmp.eq.s32.totalorder %s10, 0
    %p98 = por %p96, %p97
    %p99 = scmp.ne.s32.totalorder %s91, %s93
    %p100 = scmp.eq.s32.totalorder %s15, 1
    %p101 = por %p99, %p100
    %p102 = scmp.ne.s32.totalorder %s93, %s94
    %p103 = scmp.eq.s32.totalorder %s15, 0
    %p104 = por %p102, %p103
    %p105 = scmp.ne.s32.totalorder %s93, %s94
    %p106 = scmp.eq.s32.totalorder %s16, 1
    %p107 = por %p105, %p106
    %p109 = scmp.ne.s32.totalorder %s94, %s108
    %p110 = scmp.eq.s32.totalorder %s16, 0
    %p111 = por %p109, %p110
    %p112 = scmp.le.s32.totalorder 1, %s10
    %p113 = scmp.lt.s32.totalorder %s10, 3
    %p114 = pnand %p112, %p113
    %p115 = pneg %p114
    // Predicated region
    $region9: #{down_forward.6} parent=5 // pred_check
      _
    $region10: #{down_forward.6} parent=5 // pred_check_branch
      %117 = sbr.rel (%p114) target = $region12
    $region11: #{down_forward.6} parent=5 // pred_region
      %s118 = ssub.s32 %s10, 1
      // Predicated region
      $region13: #{down_forward.6} parent=11 // pred_check
        %p119 = pneg %p57
      $region14: #{down_forward.6} parent=11 // pred_check_branch
        %121 = sbr.rel (%p119) target = $region16
      $region15: #{down_forward.6} parent=11 // pred_region
        _
      $region16: #{down_forward.6} parent=11 // pred_fallthru
        _
    $region12: #{down_forward.6} parent=5 // pred_fallthru
      _
    %p122 = scmp.lt.s32.totalorder %s10, 2
    // Predicated region
    $region17: #{down_forward.6} parent=5 // pred_check
      %p123 = pneg %p122
    $region18: #{down_forward.6} parent=5 // pred_check_branch
      %125 = sbr.rel (%p123) target = $region20
    $region19: #{down_forward.6} parent=5 // pred_region
      // Predicated region
      $region21: #{down_forward.6} parent=19 // pred_check
        %p126 = pneg %p30
      $region22: #{down_forward.6} parent=19 // pred_check_branch
        %128 = sbr.rel (%p126) target = $region24
      $region23: #{down_forward.6} parent=19 // pred_region
        %s129 = smul.u32 64, %s10
        %p130 = scmp.lt.s32.totalorder %s129, 127
        %s131 = scalar_select %p130, %s129, 127
        %s132 = smul.addr %s131, 4
        %s133 = scalar_lea.vmem %s0, %s132
        %s134 = smul.u32 64, %s10
      $region24: #{down_forward.6} parent=19 // pred_fallthru
        _
    $region20: #{down_forward.6} parent=5 // pred_fallthru
      _
    %p135 = scmp.le.s32.totalorder 1, %s10
    %p136 = scmp.lt.s32.totalorder %s10, 3
    %p137 = pnand %p135, %p136
    %p138 = pneg %p137
    // Predicated region
    $region25: #{down_forward.6} parent=5 // pred_check
      _
    $region26: #{down_forward.6} parent=5 // pred_check_branch
      %140 = sbr.rel (%p137) target = $region28
    $region27: #{down_forward.6} parent=5 // pred_region
      %s141 = ssub.s32 %s10, 1
      %s142 = smul.u32 64, %s15
      %p143 = scmp.lt.s32.totalorder %s142, 127
      %s144 = scalar_select %p143, %s142, 127
      %s145 = smul.addr %s144, 4
      %s146 = scalar_lea.vmem %s0, %s145
      %p147 = pneg %p36
      %p148 = pneg %p33
      %p149 = pneg %p57
      %p150 = pneg %p54
      %p151 = pneg %p83
      %p152 = pneg %p80
      %s153 = smul.u32 64, %s15
      %p154 = scmp.lt.s32.totalorder %s153, 127
      %s155 = scalar_select %p154, %s153, 127
      %s156 = smul.addr %s155, 8
      %s157 = scalar_lea.vmem %s2, %s156
      %p158 = pneg %p104
      %p159 = pneg %p101
      %s160 = smul.u32 64, %s15
      %p161 = scmp.lt.s32.totalorder %s160, 127
      %s162 = scalar_select %p161, %s160, 127
      %s163 = smul.addr %s162, 4
      %s164 = scalar_lea.vmem %s0, %s163
      %s165 = smul.u32 64, %s15
      %s166 = smul.u32 64, %s15
      %p167 = scmp.lt.s32.totalorder %s166, 127
      %s168 = scalar_select %p167, %s166, 127
      %s169 = smul.addr %s168, 8
      %s170 = scalar_lea.vmem %s2, %s169
      %s171 = smul.u32 64, %s15
      %v172 = vld [vmem:[%s164] sm:$0xf]
      %v173 = vld [vmem:[%s164 + $0x4] sm:$0xf]
      %v174 = vld [vmem:[%s164 + $0x8] sm:$0xf]
      %v175 = vld [vmem:[%s164 + $0xc] sm:$0xf]
      %v176 = vld [vmem:[%s164 + $0x10] sm:$0xf]
      %v177 = vld [vmem:[%s164 + $0x14] sm:$0xf]
      %v178 = vld [vmem:[%s164 + $0x18] sm:$0xf]
      %v179 = vld [vmem:[%s164 + $0x1c] sm:$0xf]
      %v180 = vld [vmem:[%s164 + $0x20] sm:$0xf]
      %v181 = vld [vmem:[%s164 + $0x24] sm:$0xf]
      %v182 = vld [vmem:[%s164 + $0x28] sm:$0xf]
      %v183 = vld [vmem:[%s164 + $0x2c] sm:$0xf]
      %v184 = vld [vmem:[%s164 + $0x30] sm:$0xf]
      %v185 = vld [vmem:[%s164 + $0x34] sm:$0xf]
      %v186 = vld [vmem:[%s164 + $0x38] sm:$0xf]
      %v187 = vld [vmem:[%s164 + $0x3c] sm:$0xf]
      %v188 = vld [vmem:[%s164 + $0x40] sm:$0xf]
      %v189 = vld [vmem:[%s164 + $0x44] sm:$0xf]
      %v190 = vld [vmem:[%s164 + $0x48] sm:$0xf]
      %v191 = vld [vmem:[%s164 + $0x4c] sm:$0xf]
      %v192 = vld [vmem:[%s164 + $0x50] sm:$0xf]
      %v193 = vld [vmem:[%s164 + $0x54] sm:$0xf]
      %v194 = vld [vmem:[%s164 + $0x58] sm:$0xf]
      %v195 = vld [vmem:[%s164 + $0x5c] sm:$0xf]
      %v196 = vld [vmem:[%s164 + $0x60] sm:$0xf]
      %v197 = vld [vmem:[%s164 + $0x64] sm:$0xf]
      %v198 = vld [vmem:[%s164 + $0x68] sm:$0xf]
      %v199 = vld [vmem:[%s164 + $0x6c] sm:$0xf]
      %v200 = vld [vmem:[%s164 + $0x70] sm:$0xf]
      %v201 = vld [vmem:[%s164 + $0x74] sm:$0xf]
      %v202 = vld [vmem:[%s164 + $0x78] sm:$0xf]
      %v203 = vld [vmem:[%s164 + $0x7c] sm:$0xf]
      %v204 = vld [vmem:[%s164 + $0x80] sm:$0xf]
      %v205 = vld [vmem:[%s164 + $0x84] sm:$0xf]
      %v206 = vld [vmem:[%s164 + $0x88] sm:$0xf]
      %v207 = vld [vmem:[%s164 + $0x8c] sm:$0xf]
      %v208 = vld [vmem:[%s164 + $0x90] sm:$0xf]
      %v209 = vld [vmem:[%s164 + $0x94] sm:$0xf]
      %v210 = vld [vmem:[%s164 + $0x98] sm:$0xf]
      %v211 = vld [vmem:[%s164 + $0x9c] sm:$0xf]
      %v212 = vld [vmem:[%s164 + $0xa0] sm:$0xf]
      %v213 = vld [vmem:[%s164 + $0xa4] sm:$0xf]
      %v214 = vld [vmem:[%s164 + $0xa8] sm:$0xf]
      %v215 = vld [vmem:[%s164 + $0xac] sm:$0xf]
      %v216 = vld [vmem:[%s164 + $0xb0] sm:$0xf]
      %v217 = vld [vmem:[%s164 + $0xb4] sm:$0xf]
      %v218 = vld [vmem:[%s164 + $0xb8] sm:$0xf]
      %v219 = vld [vmem:[%s164 + $0xbc] sm:$0xf]
      %v220 = vld [vmem:[%s164 + $0xc0] sm:$0xf]
      %v221 = vld [vmem:[%s164 + $0xc4] sm:$0xf]
      %v222 = vld [vmem:[%s164 + $0xc8] sm:$0xf]
      %v223 = vld [vmem:[%s164 + $0xcc] sm:$0xf]
      %v224 = vld [vmem:[%s164 + $0xd0] sm:$0xf]
      %v225 = vld [vmem:[%s164 + $0xd4] sm:$0xf]
      %v226 = vld [vmem:[%s164 + $0xd8] sm:$0xf]
      %v227 = vld [vmem:[%s164 + $0xdc] sm:$0xf]
      %v228 = vld [vmem:[%s164 + $0xe0] sm:$0xf]
      %v229 = vld [vmem:[%s164 + $0xe4] sm:$0xf]
      %v230 = vld [vmem:[%s164 + $0xe8] sm:$0xf]
      %v231 = vld [vmem:[%s164 + $0xec] sm:$0xf]
      %v232 = vld [vmem:[%s164 + $0xf0] sm:$0xf]
      %v233 = vld [vmem:[%s164 + $0xf4] sm:$0xf]
      %v234 = vld [vmem:[%s164 + $0xf8] sm:$0xf]
      %v235 = vld [vmem:[%s164 + $0xfc] sm:$0xf]
      %v236 = vld [vmem:[%s1] sm:$0xf]
      %v237 = vld [vmem:[%s1 + $0x4] sm:$0xf]
      %v238 = vld [vmem:[%s1 + $0x8] sm:$0xf]
      %v239 = vld [vmem:[%s1 + $0xc] sm:$0xf]
      %v240 = vld [vmem:[%s1 + $0x10] sm:$0xf]
      %v241 = vld [vmem:[%s1 + $0x14] sm:$0xf]
      %v242 = vld [vmem:[%s1 + $0x18] sm:$0xf]
      %v243 = vld [vmem:[%s1 + $0x1c] sm:$0xf]
      %v244 = vld [vmem:[%s1 + $0x20] sm:$0xf]
      %v245 = vld [vmem:[%s1 + $0x24] sm:$0xf]
      %v246 = vld [vmem:[%s1 + $0x28] sm:$0xf]
      %v247 = vld [vmem:[%s1 + $0x2c] sm:$0xf]
      %v248 = vld [vmem:[%s1 + $0x30] sm:$0xf]
      %v249 = vld [vmem:[%s1 + $0x34] sm:$0xf]
      %v250 = vld [vmem:[%s1 + $0x38] sm:$0xf]
      %v251 = vld [vmem:[%s1 + $0x3c] sm:$0xf]
      %v316 = vunpack.c.l.b16 %v172
      %v317 = vunpack.c.l.b16 %v173
      %v318 = vunpack.c.l.b16 %v174
      %v319 = vunpack.c.l.b16 %v175
      %v320 = vunpack.c.l.b16 %v176
      %v321 = vunpack.c.l.b16 %v177
      %v322 = vunpack.c.l.b16 %v178
      %v323 = vunpack.c.l.b16 %v179
      %v324 = vunpack.c.l.b16 %v180
      %v325 = vunpack.c.l.b16 %v181
      %v326 = vunpack.c.l.b16 %v182
      %v327 = vunpack.c.l.b16 %v183
      %v328 = vunpack.c.l.b16 %v184
      %v329 = vunpack.c.l.b16 %v185
      %v330 = vunpack.c.l.b16 %v186
      %v331 = vunpack.c.l.b16 %v187
      %v332 = vunpack.c.l.b16 %v188
      %v333 = vunpack.c.l.b16 %v189
      %v334 = vunpack.c.l.b16 %v190
      %v335 = vunpack.c.l.b16 %v191
      %v336 = vunpack.c.l.b16 %v192
      %v337 = vunpack.c.l.b16 %v193
      %v338 = vunpack.c.l.b16 %v194
      %v339 = vunpack.c.l.b16 %v195
      %v340 = vunpack.c.l.b16 %v196
      %v341 = vunpack.c.l.b16 %v197
      %v342 = vunpack.c.l.b16 %v198
      %v343 = vunpack.c.l.b16 %v199
      %v344 = vunpack.c.l.b16 %v200
      %v345 = vunpack.c.l.b16 %v201
      %v346 = vunpack.c.l.b16 %v202
      %v347 = vunpack.c.l.b16 %v203
      %v348 = vunpack.c.l.b16 %v204
      %v349 = vunpack.c.l.b16 %v205
      %v350 = vunpack.c.l.b16 %v206
      %v351 = vunpack.c.l.b16 %v207
      %v352 = vunpack.c.l.b16 %v208
      %v353 = vunpack.c.l.b16 %v209
      %v354 = vunpack.c.l.b16 %v210
      %v355 = vunpack.c.l.b16 %v211
      %v356 = vunpack.c.l.b16 %v212
      %v357 = vunpack.c.l.b16 %v213
      %v358 = vunpack.c.l.b16 %v214
      %v359 = vunpack.c.l.b16 %v215
      %v360 = vunpack.c.l.b16 %v216
      %v361 = vunpack.c.l.b16 %v217
      %v362 = vunpack.c.l.b16 %v218
      %v363 = vunpack.c.l.b16 %v219
      %v364 = vunpack.c.l.b16 %v220
      %v365 = vunpack.c.l.b16 %v221
      %v366 = vunpack.c.l.b16 %v222
      %v367 = vunpack.c.l.b16 %v223
      %v368 = vunpack.c.l.b16 %v224
      %v369 = vunpack.c.l.b16 %v225
      %v370 = vunpack.c.l.b16 %v226
      %v371 = vunpack.c.l.b16 %v227
      %v372 = vunpack.c.l.b16 %v228
      %v373 = vunpack.c.l.b16 %v229
      %v374 = vunpack.c.l.b16 %v230
      %v375 = vunpack.c.l.b16 %v231
      %v376 = vunpack.c.l.b16 %v232
      %v377 = vunpack.c.l.b16 %v233
      %v378 = vunpack.c.l.b16 %v234
      %v379 = vunpack.c.l.b16 %v235
      %v380 = vpack.c.b16 %v317, %v316
      %v381 = vpack.c.b16 %v319, %v318
      %v382 = vpack.c.b16 %v321, %v320
      %v383 = vpack.c.b16 %v323, %v322
      %v384 = vpack.c.b16 %v325, %v324
      %v385 = vpack.c.b16 %v327, %v326
      %v386 = vpack.c.b16 %v329, %v328
      %v387 = vpack.c.b16 %v331, %v330
      %v388 = vpack.c.b16 %v333, %v332
      %v389 = vpack.c.b16 %v335, %v334
      %v390 = vpack.c.b16 %v337, %v336
      %v391 = vpack.c.b16 %v339, %v338
      %v392 = vpack.c.b16 %v341, %v340
      %v393 = vpack.c.b16 %v343, %v342
      %v394 = vpack.c.b16 %v345, %v344
      %v395 = vpack.c.b16 %v347, %v346
      %v396 = vpack.c.b16 %v349, %v348
      %v397 = vpack.c.b16 %v351, %v350
      %v398 = vpack.c.b16 %v353, %v352
      %v399 = vpack.c.b16 %v355, %v354
      %v400 = vpack.c.b16 %v357, %v356
      %v401 = vpack.c.b16 %v359, %v358
      %v402 = vpack.c.b16 %v361, %v360
      %v403 = vpack.c.b16 %v363, %v362
      %v404 = vpack.c.b16 %v365, %v364
      %v405 = vpack.c.b16 %v367, %v366
      %v406 = vpack.c.b16 %v369, %v368
      %v407 = vpack.c.b16 %v371, %v370
      %v408 = vpack.c.b16 %v373, %v372
      %v409 = vpack.c.b16 %v375, %v374
      %v410 = vpack.c.b16 %v377, %v376
      %v411 = vpack.c.b16 %v379, %v378
      %v460 = vunpack.c.l.b16 %v236
      %v461 = vunpack.c.l.b16 %v237
      %v462 = vunpack.c.l.b16 %v238
      %v463 = vunpack.c.l.b16 %v239
      %v464 = vunpack.c.l.b16 %v240
      %v465 = vunpack.c.l.b16 %v241
      %v466 = vunpack.c.l.b16 %v242
      %v467 = vunpack.c.l.b16 %v243
      %v468 = vunpack.c.l.b16 %v244
      %v469 = vunpack.c.l.b16 %v245
      %v470 = vunpack.c.l.b16 %v246
      %v471 = vunpack.c.l.b16 %v247
      %v472 = vunpack.c.l.b16 %v248
      %v473 = vunpack.c.l.b16 %v249
      %v474 = vunpack.c.l.b16 %v250
      %v475 = vunpack.c.l.b16 %v251
      %v476 = vpack.c.b16 %v461, %v460
      %v477 = vpack.c.b16 %v463, %v462
      %v478 = vpack.c.b16 %v465, %v464
      %v479 = vpack.c.b16 %v467, %v466
      %v480 = vpack.c.b16 %v469, %v468
      %v481 = vpack.c.b16 %v471, %v470
      %v482 = vpack.c.b16 %v473, %v472
      %v483 = vpack.c.b16 %v475, %v474
      %492 = vmatpush.bf16.msra.mxu0 %v483
      %493 = vmatpush.bf16.msra.mxu0 %v482
      %494 = vmatpush.bf16.msra.mxu0 %v481
      %495 = vmatpush.bf16.msra.mxu0 %v480
      %496 = vmatpush.bf16.msra.mxu0 %v479
      %497 = vmatpush.bf16.msra.mxu0 %v478
      %498 = vmatpush.bf16.msra.mxu0 %v477
      %499 = vmatpush.bf16.msra.mxu0 %v476
      %500 = vmatmul.bf16.gmra.mxu0 %v380
      %v501 = vpop.f32.mrf.mxu0
      %v502 = vadd.f32 0.0, %v501
      %v503 = vpop.f32.mrf.mxu0
      %v504 = vadd.f32 0.0, %v503
      %505 = vmatmul.bf16.gmra.mxu0 %v381
      %v506 = vpop.f32.mrf.mxu0
      %v507 = vadd.f32 0.0, %v506
      %v508 = vpop.f32.mrf.mxu0
      %v509 = vadd.f32 0.0, %v508
      %510 = vmatmul.bf16.gmra.mxu0 %v382
      %v511 = vpop.f32.mrf.mxu0
      %v512 = vadd.f32 0.0, %v511
      %v513 = vpop.f32.mrf.mxu0
      %v514 = vadd.f32 0.0, %v513
      %515 = vmatmul.bf16.gmra.mxu0 %v383
      %v516 = vpop.f32.mrf.mxu0
      %v517 = vadd.f32 0.0, %v516
      %v518 = vpop.f32.mrf.mxu0
      %v519 = vadd.f32 0.0, %v518
      %520 = vmatmul.bf16.gmra.mxu0 %v384
      %v521 = vpop.f32.mrf.mxu0
      %v522 = vadd.f32 0.0, %v521
      %v523 = vpop.f32.mrf.mxu0
      %v524 = vadd.f32 0.0, %v523
      %525 = vmatmul.bf16.gmra.mxu0 %v385
      %v526 = vpop.f32.mrf.mxu0
      %v527 = vadd.f32 0.0, %v526
      %v528 = vpop.f32.mrf.mxu0
      %v529 = vadd.f32 0.0, %v528
      %530 = vmatmul.bf16.gmra.mxu0 %v386
      %v531 = vpop.f32.mrf.mxu0
      %v532 = vadd.f32 0.0, %v531
      %v533 = vpop.f32.mrf.mxu0
      %v534 = vadd.f32 0.0, %v533
      %535 = vmatmul.bf16.gmra.mxu0 %v387
      %v536 = vpop.f32.mrf.mxu0
      %v537 = vadd.f32 0.0, %v536
      %v538 = vpop.f32.mrf.mxu0
      %v539 = vadd.f32 0.0, %v538
      %540 = vmatmul.bf16.gmra.mxu0 %v388
      %v541 = vpop.f32.mrf.mxu0
      %v542 = vadd.f32 0.0, %v541
      %v543 = vpop.f32.mrf.mxu0
      %v544 = vadd.f32 0.0, %v543
      %545 = vmatmul.bf16.gmra.mxu0 %v389
      %v546 = vpop.f32.mrf.mxu0
      %v547 = vadd.f32 0.0, %v546
      %v548 = vpop.f32.mrf.mxu0
      %v549 = vadd.f32 0.0, %v548
      %550 = vmatmul.bf16.gmra.mxu0 %v390
      %v551 = vpop.f32.mrf.mxu0
      %v552 = vadd.f32 0.0, %v551
      %v553 = vpop.f32.mrf.mxu0
      %v554 = vadd.f32 0.0, %v553
      %555 = vmatmul.bf16.gmra.mxu0 %v391
      %v556 = vpop.f32.mrf.mxu0
      %v557 = vadd.f32 0.0, %v556
      %v558 = vpop.f32.mrf.mxu0
      %v559 = vadd.f32 0.0, %v558
      %560 = vmatmul.bf16.gmra.mxu0 %v392
      %v561 = vpop.f32.mrf.mxu0
      %v562 = vadd.f32 0.0, %v561
      %v563 = vpop.f32.mrf.mxu0
      %v564 = vadd.f32 0.0, %v563
      %565 = vmatmul.bf16.gmra.mxu0 %v393
      %v566 = vpop.f32.mrf.mxu0
      %v567 = vadd.f32 0.0, %v566
      %v568 = vpop.f32.mrf.mxu0
      %v569 = vadd.f32 0.0, %v568
      %570 = vmatmul.bf16.gmra.mxu0 %v394
      %v571 = vpop.f32.mrf.mxu0
      %v572 = vadd.f32 0.0, %v571
      %v573 = vpop.f32.mrf.mxu0
      %v574 = vadd.f32 0.0, %v573
      %575 = vmatmul.bf16.gmra.mxu0 %v395
      %v576 = vpop.f32.mrf.mxu0
      %v577 = vadd.f32 0.0, %v576
      %v578 = vpop.f32.mrf.mxu0
      %v579 = vadd.f32 0.0, %v578
      %580 = vmatmul.bf16.gmra.mxu0 %v396
      %v581 = vpop.f32.mrf.mxu0
      %v582 = vadd.f32 0.0, %v581
      %v583 = vpop.f32.mrf.mxu0
      %v584 = vadd.f32 0.0, %v583
      %585 = vmatmul.bf16.gmra.mxu0 %v397
      %v586 = vpop.f32.mrf.mxu0
      %v587 = vadd.f32 0.0, %v586
      %v588 = vpop.f32.mrf.mxu0
      %v589 = vadd.f32 0.0, %v588
      %590 = vmatmul.bf16.gmra.mxu0 %v398
      %v591 = vpop.f32.mrf.mxu0
      %v592 = vadd.f32 0.0, %v591
      %v593 = vpop.f32.mrf.mxu0
      %v594 = vadd.f32 0.0, %v593
      %595 = vmatmul.bf16.gmra.mxu0 %v399
      %v596 = vpop.f32.mrf.mxu0
      %v597 = vadd.f32 0.0, %v596
      %v598 = vpop.f32.mrf.mxu0
      %v599 = vadd.f32 0.0, %v598
      %600 = vmatmul.bf16.gmra.mxu0 %v400
      %v601 = vpop.f32.mrf.mxu0
      %v602 = vadd.f32 0.0, %v601
      %v603 = vpop.f32.mrf.mxu0
      %v604 = vadd.f32 0.0, %v603
      %605 = vmatmul.bf16.gmra.mxu0 %v401
      %v606 = vpop.f32.mrf.mxu0
      %v607 = vadd.f32 0.0, %v606
      %v608 = vpop.f32.mrf.mxu0
      %v609 = vadd.f32 0.0, %v608
      %610 = vmatmul.bf16.gmra.mxu0 %v402
      %v611 = vpop.f32.mrf.mxu0
      %v612 = vadd.f32 0.0, %v611
      %v613 = vpop.f32.mrf.mxu0
      %v614 = vadd.f32 0.0, %v613
      %615 = vmatmul.bf16.gmra.mxu0 %v403
      %v616 = vpop.f32.mrf.mxu0
      %v617 = vadd.f32 0.0, %v616
      %v618 = vpop.f32.mrf.mxu0
      %v619 = vadd.f32 0.0, %v618
      %620 = vmatmul.bf16.gmra.mxu0 %v404
      %v621 = vpop.f32.mrf.mxu0
      %v622 = vadd.f32 0.0, %v621
      %v623 = vpop.f32.mrf.mxu0
      %v624 = vadd.f32 0.0, %v623
      %625 = vmatmul.bf16.gmra.mxu0 %v405
      %v626 = vpop.f32.mrf.mxu0
      %v627 = vadd.f32 0.0, %v626
      %v628 = vpop.f32.mrf.mxu0
      %v629 = vadd.f32 0.0, %v628
      %630 = vmatmul.bf16.gmra.mxu0 %v406
      %v631 = vpop.f32.mrf.mxu0
      %v632 = vadd.f32 0.0, %v631
      %v633 = vpop.f32.mrf.mxu0
      %v634 = vadd.f32 0.0, %v633
      %635 = vmatmul.bf16.gmra.mxu0 %v407
      %v636 = vpop.f32.mrf.mxu0
      %v637 = vadd.f32 0.0, %v636
      %v638 = vpop.f32.mrf.mxu0
      %v639 = vadd.f32 0.0, %v638
      %640 = vmatmul.bf16.gmra.mxu0 %v408
      %v641 = vpop.f32.mrf.mxu0
      %v642 = vadd.f32 0.0, %v641
      %v643 = vpop.f32.mrf.mxu0
      %v644 = vadd.f32 0.0, %v643
      %645 = vmatmul.bf16.gmra.mxu0 %v409
      %v646 = vpop.f32.mrf.mxu0
      %v647 = vadd.f32 0.0, %v646
      %v648 = vpop.f32.mrf.mxu0
      %v649 = vadd.f32 0.0, %v648
      %650 = vmatmul.bf16.gmra.mxu0 %v410
      %v651 = vpop.f32.mrf.mxu0
      %v652 = vadd.f32 0.0, %v651
      %v653 = vpop.f32.mrf.mxu0
      %v654 = vadd.f32 0.0, %v653
      %655 = vmatmul.bf16.gmra.mxu0 %v411
      %v656 = vpop.f32.mrf.mxu0
      %v657 = vadd.f32 0.0, %v656
      %v658 = vpop.f32.mrf.mxu0
      %v659 = vadd.f32 0.0, %v658
      %660 = vdwg.mxu0
      %661 = vst [vmem:[%s170] sm:$0xff] %v502
      %662 = vst [vmem:[%s170 + $0x8] sm:$0xff] %v504
      %663 = vst [vmem:[%s170 + $0x10] sm:$0xff] %v507
      %664 = vst [vmem:[%s170 + $0x18] sm:$0xff] %v509
      %665 = vst [vmem:[%s170 + $0x20] sm:$0xff] %v512
      %666 = vst [vmem:[%s170 + $0x28] sm:$0xff] %v514
      %667 = vst [vmem:[%s170 + $0x30] sm:$0xff] %v517
      %668 = vst [vmem:[%s170 + $0x38] sm:$0xff] %v519
      %669 = vst [vmem:[%s170 + $0x40] sm:$0xff] %v522
      %670 = vst [vmem:[%s170 + $0x48] sm:$0xff] %v524
      %671 = vst [vmem:[%s170 + $0x50] sm:$0xff] %v527
      %672 = vst [vmem:[%s170 + $0x58] sm:$0xff] %v529
      %673 = vst [vmem:[%s170 + $0x60] sm:$0xff] %v532
      %674 = vst [vmem:[%s170 + $0x68] sm:$0xff] %v534
      %675 = vst [vmem:[%s170 + $0x70] sm:$0xff] %v537
      %676 = vst [vmem:[%s170 + $0x78] sm:$0xff] %v539
      %677 = vst [vmem:[%s170 + $0x80] sm:$0xff] %v542
      %678 = vst [vmem:[%s170 + $0x88] sm:$0xff] %v544
      %679 = vst [vmem:[%s170 + $0x90] sm:$0xff] %v547
      %680 = vst [vmem:[%s170 + $0x98] sm:$0xff] %v549
      %681 = vst [vmem:[%s170 + $0xa0] sm:$0xff] %v552
      %682 = vst [vmem:[%s170 + $0xa8] sm:$0xff] %v554
      %683 = vst [vmem:[%s170 + $0xb0] sm:$0xff] %v557
      %684 = vst [vmem:[%s170 + $0xb8] sm:$0xff] %v559
      %685 = vst [vmem:[%s170 + $0xc0] sm:$0xff] %v562
      %686 = vst [vmem:[%s170 + $0xc8] sm:$0xff] %v564
      %687 = vst [vmem:[%s170 + $0xd0] sm:$0xff] %v567
      %688 = vst [vmem:[%s170 + $0xd8] sm:$0xff] %v569
      %689 = vst [vmem:[%s170 + $0xe0] sm:$0xff] %v572
      %690 = vst [vmem:[%s170 + $0xe8] sm:$0xff] %v574
      %691 = vst [vmem:[%s170 + $0xf0] sm:$0xff] %v577
      %692 = vst [vmem:[%s170 + $0xf8] sm:$0xff] %v579
      %693 = vst [vmem:[%s170 + $0x100] sm:$0xff] %v582
      %694 = vst [vmem:[%s170 + $0x108] sm:$0xff] %v584
      %695 = vst [vmem:[%s170 + $0x110] sm:$0xff] %v587
      %696 = vst [vmem:[%s170 + $0x118] sm:$0xff] %v589
      %697 = vst [vmem:[%s170 + $0x120] sm:$0xff] %v592
      %698 = vst [vmem:[%s170 + $0x128] sm:$0xff] %v594
      %699 = vst [vmem:[%s170 + $0x130] sm:$0xff] %v597
      %700 = vst [vmem:[%s170 + $0x138] sm:$0xff] %v599
      %701 = vst [vmem:[%s170 + $0x140] sm:$0xff] %v602
      %702 = vst [vmem:[%s170 + $0x148] sm:$0xff] %v604
      %703 = vst [vmem:[%s170 + $0x150] sm:$0xff] %v607
      %704 = vst [vmem:[%s170 + $0x158] sm:$0xff] %v609
      %705 = vst [vmem:[%s170 + $0x160] sm:$0xff] %v612
      %706 = vst [vmem:[%s170 + $0x168] sm:$0xff] %v614
      %707 = vst [vmem:[%s170 + $0x170] sm:$0xff] %v617
      %708 = vst [vmem:[%s170 + $0x178] sm:$0xff] %v619
      %709 = vst [vmem:[%s170 + $0x180] sm:$0xff] %v622
      %710 = vst [vmem:[%s170 + $0x188] sm:$0xff] %v624
      %711 = vst [vmem:[%s170 + $0x190] sm:$0xff] %v627
      %712 = vst [vmem:[%s170 + $0x198] sm:$0xff] %v629
      %713 = vst [vmem:[%s170 + $0x1a0] sm:$0xff] %v632
      %714 = vst [vmem:[%s170 + $0x1a8] sm:$0xff] %v634
      %715 = vst [vmem:[%s170 + $0x1b0] sm:$0xff] %v637
      %716 = vst [vmem:[%s170 + $0x1b8] sm:$0xff] %v639
      %717 = vst [vmem:[%s170 + $0x1c0] sm:$0xff] %v642
      %718 = vst [vmem:[%s170 + $0x1c8] sm:$0xff] %v644
      %719 = vst [vmem:[%s170 + $0x1d0] sm:$0xff] %v647
      %720 = vst [vmem:[%s170 + $0x1d8] sm:$0xff] %v649
      %721 = vst [vmem:[%s170 + $0x1e0] sm:$0xff] %v652
      %722 = vst [vmem:[%s170 + $0x1e8] sm:$0xff] %v654
      %723 = vst [vmem:[%s170 + $0x1f0] sm:$0xff] %v657
      %724 = vst [vmem:[%s170 + $0x1f8] sm:$0xff] %v659
      %p725 = scmp.eq.s32.totalorder %s15, 0
      // Predicated region
      $region29: #{down_forward.6} parent=27 // pred_check
        %p726 = pneg %p725
      $region30: #{down_forward.6} parent=27 // pred_check_branch
        %728 = sbr.rel (%p726) target = $region32
      $region31: #{down_forward.6} parent=27 // pred_region
        %729 = vst [vmem:[%s3] sm:$0x3] 0.0
      $region32: #{down_forward.6} parent=27 // pred_fallthru
        _
      %v730 = vld [vmem:[%s3] sm:$0x3]
      %v731 = vadd.f32 %v502, %v504
      %v732 = vadd.f32 %v731, %v507
      %v733 = vadd.f32 %v732, %v509
      %v734 = vadd.f32 %v733, %v512
      %v735 = vadd.f32 %v734, %v514
      %v736 = vadd.f32 %v735, %v517
      %v737 = vadd.f32 %v736, %v519
      %v738 = vadd.f32 %v737, %v522
      %v739 = vadd.f32 %v738, %v524
      %v740 = vadd.f32 %v739, %v527
      %v741 = vadd.f32 %v740, %v529
      %v742 = vadd.f32 %v741, %v532
      %v743 = vadd.f32 %v742, %v534
      %v744 = vadd.f32 %v743, %v537
      %v745 = vadd.f32 %v744, %v539
      %v746 = vadd.f32 %v745, %v542
      %v747 = vadd.f32 %v746, %v544
      %v748 = vadd.f32 %v747, %v547
      %v749 = vadd.f32 %v748, %v549
      %v750 = vadd.f32 %v749, %v552
      %v751 = vadd.f32 %v750, %v554
      %v752 = vadd.f32 %v751, %v557
      %v753 = vadd.f32 %v752, %v559
      %v754 = vadd.f32 %v753, %v562
      %v755 = vadd.f32 %v754, %v564
      %v756 = vadd.f32 %v755, %v567
      %v757 = vadd.f32 %v756, %v569
      %v758 = vadd.f32 %v757, %v572
      %v759 = vadd.f32 %v758, %v574
      %v760 = vadd.f32 %v759, %v577
      %v761 = vadd.f32 %v760, %v579
      %v762 = vadd.f32 %v761, %v582
      %v763 = vadd.f32 %v762, %v584
      %v764 = vadd.f32 %v763, %v587
      %v765 = vadd.f32 %v764, %v589
      %v766 = vadd.f32 %v765, %v592
      %v767 = vadd.f32 %v766, %v594
      %v768 = vadd.f32 %v767, %v597
      %v769 = vadd.f32 %v768, %v599
      %v770 = vadd.f32 %v769, %v602
      %v771 = vadd.f32 %v770, %v604
      %v772 = vadd.f32 %v771, %v607
      %v773 = vadd.f32 %v772, %v609
      %v774 = vadd.f32 %v773, %v612
      %v775 = vadd.f32 %v774, %v614
      %v776 = vadd.f32 %v775, %v617
      %v777 = vadd.f32 %v776, %v619
      %v778 = vadd.f32 %v777, %v622
      %v779 = vadd.f32 %v778, %v624
      %v780 = vadd.f32 %v779, %v627
      %v781 = vadd.f32 %v780, %v629
      %v782 = vadd.f32 %v781, %v632
      %v783 = vadd.f32 %v782, %v634
      %v784 = vadd.f32 %v783, %v637
      %v785 = vadd.f32 %v784, %v639
      %v786 = vadd.f32 %v785, %v642
      %v787 = vadd.f32 %v786, %v644
      %v788 = vadd.f32 %v787, %v647
      %v789 = vadd.f32 %v788, %v649
      %v790 = vadd.f32 %v789, %v652
      %v791 = vadd.f32 %v790, %v654
      %v792 = vadd.f32 %v791, %v657
      %v793 = vadd.f32 %v792, %v659
      %v794 = vrot.slane %v793, 4
      %v795 = vadd.f32 %v793, %v794
      %v796 = vrot.slane %v795, 2
      %v797 = vadd.f32 %v795, %v796
      %v798 = vrot.slane %v797, 1
      %v799 = vadd.f32 %v797, %v798
      %v800 = vmul.f32 %v502, %v502
      %v801 = vmul.f32 %v504, %v504
      %v802 = vmul.f32 %v507, %v507
      %v803 = vmul.f32 %v509, %v509
      %v804 = vmul.f32 %v512, %v512
      %v805 = vmul.f32 %v514, %v514
      %v806 = vmul.f32 %v517, %v517
      %v807 = vmul.f32 %v519, %v519
      %v808 = vmul.f32 %v522, %v522
      %v809 = vmul.f32 %v524, %v524
      %v810 = vmul.f32 %v527, %v527
      %v811 = vmul.f32 %v529, %v529
      %v812 = vmul.f32 %v532, %v532
      %v813 = vmul.f32 %v534, %v534
      %v814 = vmul.f32 %v537, %v537
      %v815 = vmul.f32 %v539, %v539
      %v816 = vmul.f32 %v542, %v542
      %v817 = vmul.f32 %v544, %v544
      %v818 = vmul.f32 %v547, %v547
      %v819 = vmul.f32 %v549, %v549
      %v820 = vmul.f32 %v552, %v552
      %v821 = vmul.f32 %v554, %v554
      %v822 = vmul.f32 %v557, %v557
      %v823 = vmul.f32 %v559, %v559
      %v824 = vmul.f32 %v562, %v562
      %v825 = vmul.f32 %v564, %v564
      %v826 = vmul.f32 %v567, %v567
      %v827 = vmul.f32 %v569, %v569
      %v828 = vmul.f32 %v572, %v572
      %v829 = vmul.f32 %v574, %v574
      %v830 = vmul.f32 %v577, %v577
      %v831 = vmul.f32 %v579, %v579
      %v832 = vmul.f32 %v582, %v582
      %v833 = vmul.f32 %v584, %v584
      %v834 = vmul.f32 %v587, %v587
      %v835 = vmul.f32 %v589, %v589
      %v836 = vmul.f32 %v592, %v592
      %v837 = vmul.f32 %v594, %v594
      %v838 = vmul.f32 %v597, %v597
      %v839 = vmul.f32 %v599, %v599
      %v840 = vmul.f32 %v602, %v602
      %v841 = vmul.f32 %v604, %v604
      %v842 = vmul.f32 %v607, %v607
      %v843 = vmul.f32 %v609, %v609
      %v844 = vmul.f32 %v612, %v612
      %v845 = vmul.f32 %v614, %v614
      %v846 = vmul.f32 %v617, %v617
      %v847 = vmul.f32 %v619, %v619
      %v848 = vmul.f32 %v622, %v622
      %v849 = vmul.f32 %v624, %v624
      %v850 = vmul.f32 %v627, %v627
      %v851 = vmul.f32 %v629, %v629
      %v852 = vmul.f32 %v632, %v632
      %v853 = vmul.f32 %v634, %v634
      %v854 = vmul.f32 %v637, %v637
      %v855 = vmul.f32 %v639, %v639
      %v856 = vmul.f32 %v642, %v642
      %v857 = vmul.f32 %v644, %v644
      %v858 = vmul.f32 %v647, %v647
      %v859 = vmul.f32 %v649, %v649
      %v860 = vmul.f32 %v652, %v652
      %v861 = vmul.f32 %v654, %v654
      %v862 = vmul.f32 %v657, %v657
      %v863 = vmul.f32 %v659, %v659
      %v864 = vadd.f32 %v800, %v801
      %v865 = vadd.f32 %v864, %v802
      %v866 = vadd.f32 %v865, %v803
      %v867 = vadd.f32 %v866, %v804
      %v868 = vadd.f32 %v867, %v805
      %v869 = vadd.f32 %v868, %v806
      %v870 = vadd.f32 %v869, %v807
      %v871 = vadd.f32 %v870, %v808
      %v872 = vadd.f32 %v871, %v809
      %v873 = vadd.f32 %v872, %v810
      %v874 = vadd.f32 %v873, %v811
      %v875 = vadd.f32 %v874, %v812
      %v876 = vadd.f32 %v875, %v813
      %v877 = vadd.f32 %v876, %v814
      %v878 = vadd.f32 %v877, %v815
      %v879 = vadd.f32 %v878, %v816
      %v880 = vadd.f32 %v879, %v817
      %v881 = vadd.f32 %v880, %v818
      %v882 = vadd.f32 %v881, %v819
      %v883 = vadd.f32 %v882, %v820
      %v884 = vadd.f32 %v883, %v821
      %v885 = vadd.f32 %v884, %v822
      %v886 = vadd.f32 %v885, %v823
      %v887 = vadd.f32 %v886, %v824
      %v888 = vadd.f32 %v887, %v825
      %v889 = vadd.f32 %v888, %v826
      %v890 = vadd.f32 %v889, %v827
      %v891 = vadd.f32 %v890, %v828
      %v892 = vadd.f32 %v891, %v829
      %v893 = vadd.f32 %v892, %v830
      %v894 = vadd.f32 %v893, %v831
      %v895 = vadd.f32 %v894, %v832
      %v896 = vadd.f32 %v895, %v833
      %v897 = vadd.f32 %v896, %v834
      %v898 = vadd.f32 %v897, %v835
      %v899 = vadd.f32 %v898, %v836
      %v900 = vadd.f32 %v899, %v837
      %v901 = vadd.f32 %v900, %v838
      %v902 = vadd.f32 %v901, %v839
      %v903 = vadd.f32 %v902, %v840
      %v904 = vadd.f32 %v903, %v841
      %v905 = vadd.f32 %v904, %v842
      %v906 = vadd.f32 %v905, %v843
      %v907 = vadd.f32 %v906, %v844
      %v908 = vadd.f32 %v907, %v845
      %v909 = vadd.f32 %v908, %v846
      %v910 = vadd.f32 %v909, %v847
      %v911 = vadd.f32 %v910, %v848
      %v912 = vadd.f32 %v911, %v849
      %v913 = vadd.f32 %v912, %v850
      %v914 = vadd.f32 %v913, %v851
      %v915 = vadd.f32 %v914, %v852
      %v916 = vadd.f32 %v915, %v853
      %v917 = vadd.f32 %v916, %v854
      %v918 = vadd.f32 %v917, %v855
      %v919 = vadd.f32 %v918, %v856
      %v920 = vadd.f32 %v919, %v857
      %v921 = vadd.f32 %v920, %v858
      %v922 = vadd.f32 %v921, %v859
      %v923 = vadd.f32 %v922, %v860
      %v924 = vadd.f32 %v923, %v861
      %v925 = vadd.f32 %v924, %v862
      %v926 = vadd.f32 %v925, %v863
      %v927 = vrot.slane %v926, 4
      %v928 = vadd.f32 %v926, %v927
      %v929 = vrot.slane %v928, 2
      %v930 = vadd.f32 %v928, %v929
      %v931 = vrot.slane %v930, 1
      %v932 = vadd.f32 %v930, %v931
      %vm933 = vcmask 1040384
      %v934 = vsel %vm933, %v799, %v932
      %v935 = vadd.f32 %v730, %v934
      %936 = vst [vmem:[%s3] sm:$0x3] %v935
      %s937 = smul.u32 64, %s15
      %p938 = scmp.lt.s32.totalorder %s937, 127
      %s939 = scalar_select %p938, %s937, 127
      %s940 = smul.addr %s939, 8
      %s941 = scalar_lea.vmem %s2, %s940
      // Predicated region
      $region33: #{down_forward.6} parent=27 // pred_check
        %p942 = pneg %p80
      $region34: #{down_forward.6} parent=27 // pred_check_branch
        %944 = sbr.rel (%p942) target = $region36
      $region35: #{down_forward.6} parent=27 // pred_region
        %s945 = smul.u32 64, %s15
      $region36: #{down_forward.6} parent=27 // pred_fallthru
        _
      // Predicated region
      $region37: #{down_forward.6} parent=27 // pred_check
        %p946 = pneg %p101
      $region38: #{down_forward.6} parent=27 // pred_check_branch
        %948 = sbr.rel (%p946) target = $region40
      $region39: #{down_forward.6} parent=27 // pred_region
        _
      $region40: #{down_forward.6} parent=27 // pred_fallthru
        _
      // Predicated region
      $region41: #{down_forward.6} parent=27 // pred_check
        %p949 = pneg %p101
      $region42: #{down_forward.6} parent=27 // pred_check_branch
        %951 = sbr.rel (%p949) target = $region44
      $region43: #{down_forward.6} parent=27 // pred_region
        _
      $region44: #{down_forward.6} parent=27 // pred_fallthru
        _
    $region28: #{down_forward.6} parent=5 // pred_fallthru
      _
    %p952 = scmp.le.s32.totalorder 2, %s10
    // Predicated region
    $region45: #{down_forward.6} parent=5 // pred_check
      %p953 = pneg %p952
    $region46: #{down_forward.6} parent=5 // pred_check_branch
      %955 = sbr.rel (%p953) target = $region48
    $region47: #{down_forward.6} parent=5 // pred_region
      %s956 = ssub.s32 %s10, 2
      // Predicated region
      $region49: #{down_forward.6} parent=47 // pred_check
        %p957 = pneg %p86
      $region50: #{down_forward.6} parent=47 // pred_check_branch
        %959 = sbr.rel (%p957) target = $region52
      $region51: #{down_forward.6} parent=47 // pred_region
        %s960 = smul.u32 64, %s16
        %p961 = scmp.lt.s32.totalorder %s960, 127
        %s962 = scalar_select %p961, %s960, 127
        %s963 = smul.addr %s962, 8
        %s964 = scalar_lea.vmem %s2, %s963
      $region52: #{down_forward.6} parent=47 // pred_fallthru
        _
    $region48: #{down_forward.6} parent=5 // pred_fallthru
      _
  $region6: #{down_forward.6} parent=0 // loop_footer
    %s14 = sadd.s32 1, %s10
  $region7: #{down_forward.6} parent=0 // loop_footer_branch
    %9 = sbr.rel target = $region3
  $region8: #{down_forward.6} parent=0 // loop_exit
    _

// kernel: down_forward.7
$region0: #{down_forward.7}
  #allocation0 [shape = 'u32[]', space=smem, size = 0x4, offset = 0x4, fixed_abs, tag = 'smem constant byte address 0x4 - core index']
  #allocation1 [shape = 'u32[72,128]{1,0:T(1,128)}', space=vmem, size = 0x9000, scoped, tag = 'internal scratch']
  %s0 = inlined_call_operand.vmem [shape: f32[1024,128], index: 0, kind: input, shape index: {}]
  %s1 = inlined_call_operand.vmem [shape: f32[2,128], index: 1, kind: input, shape index: {}]
  %s2 = inlined_call_operand.vmem [shape: f32[1,128], index: 2, kind: input, shape index: {}]
  %s3 = inlined_call_operand.vmem [shape: f32[1,128], index: 3, kind: input, shape index: {}]
  %s4 = inlined_call_operand.vmem [shape: bf16[1024,128], index: 4, kind: output, shape index: {}]
  %s5 = sld [smem:[#allocation0]]
  $region49: #{down_forward.7} parent=0
    _
  %s7 = ssub.s32 1, %s5
  %s8 = scalar_select 0, %s7, %s5
  loop: start=0, step=1, limit=4
  $region2: #{down_forward.7} parent=0 // loop_pre_header
    _
  $region3: #{down_forward.7} parent=0 // loop_header
    %s10 = sphi 0, %s14
    %p11 = scmp.ge.s32.totalorder %s10, 4
    %s20 = sphi 0, %s22
    %s23 = sphi 0, %s20
    %s24 = sphi 0, %s23
    %s40 = sphi 0, %s24
    %s44 = sphi 0, %s44
    %s46 = sphi 0, %s44
    %s47 = sphi 0, %s46
    %s61 = sphi 0, %s47
    %s65 = sphi 0, %s65
    %s67 = sphi 0, %s65
    %s68 = sphi 0, %s67
    %s82 = sphi 0, %s68
    %s86 = sphi 0, %s86
    %s88 = sphi 0, %s86
    %s89 = sphi 0, %s88
    %s103 = sphi 0, %s89
    %s109 = sphi 0, %s111
    %s112 = sphi 0, %s109
    %s113 = sphi 0, %s112
    %s129 = sphi 0, %s113
  $region4: #{down_forward.7} parent=0 // loop_header_branch
    %13 = sbr.rel (%p11) target = $region8
  $region5: #{down_forward.7} parent=0 // loop_body
    %s15 = ssub.s32 %s10, 1
    %s16 = ssub.s32 %s10, 2
    %s17 = sadd.s32 %s10, 1
    %s18 = ssub.s32 %s10, %s17
    %p19 = scmp.eq.s32.totalorder %s18, 0
    %s21 = sadd.s32 %s20, 1
    %s22 = scalar_select %p19, %s20, %s21
    %p25 = pneg %p19
    %p26 = scmp.eq.s32.totalorder %s10, 1
    %p27 = por %p25, %p26
    %p28 = scmp.ne.s32.totalorder %s20, %s23
    %p29 = scmp.eq.s32.totalorder %s10, 0
    %p30 = por %p28, %p29
    %p31 = scmp.ne.s32.totalorder %s20, %s23
    %p32 = scmp.eq.s32.totalorder %s15, 1
    %p33 = por %p31, %p32
    %p34 = scmp.ne.s32.totalorder %s23, %s24
    %p35 = scmp.eq.s32.totalorder %s15, 0
    %p36 = por %p34, %p35
    %p37 = scmp.ne.s32.totalorder %s23, %s24
    %p38 = scmp.eq.s32.totalorder %s16, 1
    %p39 = por %p37, %p38
    %p41 = scmp.ne.s32.totalorder %s24, %s40
    %p42 = scmp.eq.s32.totalorder %s16, 0
    %p43 = por %p41, %p42
    %s45 = sadd.s32 %s44, 1
    %p48 = scmp.eq.s32.totalorder %s10, 1
    %p49 = scmp.ne.s32.totalorder %s44, %s46
    %p50 = scmp.eq.s32.totalorder %s10, 0
    %p51 = por %p49, %p50
    %p52 = scmp.ne.s32.totalorder %s44, %s46
    %p53 = scmp.eq.s32.totalorder %s15, 1
    %p54 = por %p52, %p53
    %p55 = scmp.ne.s32.totalorder %s46, %s47
    %p56 = scmp.eq.s32.totalorder %s15, 0
    %p57 = por %p55, %p56
    %p58 = scmp.ne.s32.totalorder %s46, %s47
    %p59 = scmp.eq.s32.totalorder %s16, 1
    %p60 = por %p58, %p59
    %p62 = scmp.ne.s32.totalorder %s47, %s61
    %p63 = scmp.eq.s32.totalorder %s16, 0
    %p64 = por %p62, %p63
    %s66 = sadd.s32 %s65, 1
    %p69 = scmp.eq.s32.totalorder %s10, 1
    %p70 = scmp.ne.s32.totalorder %s65, %s67
    %p71 = scmp.eq.s32.totalorder %s10, 0
    %p72 = por %p70, %p71
    %p73 = scmp.ne.s32.totalorder %s65, %s67
    %p74 = scmp.eq.s32.totalorder %s15, 1
    %p75 = por %p73, %p74
    %p76 = scmp.ne.s32.totalorder %s67, %s68
    %p77 = scmp.eq.s32.totalorder %s15, 0
    %p78 = por %p76, %p77
    %p79 = scmp.ne.s32.totalorder %s67, %s68
    %p80 = scmp.eq.s32.totalorder %s16, 1
    %p81 = por %p79, %p80
    %p83 = scmp.ne.s32.totalorder %s68, %s82
    %p84 = scmp.eq.s32.totalorder %s16, 0
    %p85 = por %p83, %p84
    %s87 = sadd.s32 %s86, 1
    %p90 = scmp.eq.s32.totalorder %s10, 1
    %p91 = scmp.ne.s32.totalorder %s86, %s88
    %p92 = scmp.eq.s32.totalorder %s10, 0
    %p93 = por %p91, %p92
    %p94 = scmp.ne.s32.totalorder %s86, %s88
    %p95 = scmp.eq.s32.totalorder %s15, 1
    %p96 = por %p94, %p95
    %p97 = scmp.ne.s32.totalorder %s88, %s89
    %p98 = scmp.eq.s32.totalorder %s15, 0
    %p99 = por %p97, %p98
    %p100 = scmp.ne.s32.totalorder %s88, %s89
    %p101 = scmp.eq.s32.totalorder %s16, 1
    %p102 = por %p100, %p101
    %p104 = scmp.ne.s32.totalorder %s89, %s103
    %p105 = scmp.eq.s32.totalorder %s16, 0
    %p106 = por %p104, %p105
    %s107 = ssub.s32 %s10, %s17
    %p108 = scmp.eq.s32.totalorder %s107, 0
    %s110 = sadd.s32 %s109, 1
    %s111 = scalar_select %p108, %s109, %s110
    %p114 = pneg %p108
    %p115 = scmp.eq.s32.totalorder %s10, 1
    %p116 = por %p114, %p115
    %p117 = scmp.ne.s32.totalorder %s109, %s112
    %p118 = scmp.eq.s32.totalorder %s10, 0
    %p119 = por %p117, %p118
    %p120 = scmp.ne.s32.totalorder %s109, %s112
    %p121 = scmp.eq.s32.totalorder %s15, 1
    %p122 = por %p120, %p121
    %p123 = scmp.ne.s32.totalorder %s112, %s113
    %p124 = scmp.eq.s32.totalorder %s15, 0
    %p125 = por %p123, %p124
    %p126 = scmp.ne.s32.totalorder %s112, %s113
    %p127 = scmp.eq.s32.totalorder %s16, 1
    %p128 = por %p126, %p127
    %p130 = scmp.ne.s32.totalorder %s113, %s129
    %p131 = scmp.eq.s32.totalorder %s16, 0
    %p132 = por %p130, %p131
    %p133 = scmp.le.s32.totalorder 1, %s10
    %p134 = scmp.lt.s32.totalorder %s10, 3
    %p135 = pnand %p133, %p134
    %p136 = pneg %p135
    // Predicated region
    $region9: #{down_forward.7} parent=5 // pred_check
      _
    $region10: #{down_forward.7} parent=5 // pred_check_branch
      %138 = sbr.rel (%p135) target = $region12
    $region11: #{down_forward.7} parent=5 // pred_region
      %s139 = ssub.s32 %s10, 1
      // Predicated region
      $region13: #{down_forward.7} parent=11 // pred_check
        %p140 = pneg %p57
      $region14: #{down_forward.7} parent=11 // pred_check_branch
        %142 = sbr.rel (%p140) target = $region16
      $region15: #{down_forward.7} parent=11 // pred_region
        _
      $region16: #{down_forward.7} parent=11 // pred_fallthru
        _
      // Predicated region
      $region17: #{down_forward.7} parent=11 // pred_check
        %p143 = pneg %p78
      $region18: #{down_forward.7} parent=11 // pred_check_branch
        %145 = sbr.rel (%p143) target = $region20
      $region19: #{down_forward.7} parent=11 // pred_region
        _
      $region20: #{down_forward.7} parent=11 // pred_fallthru
        _
      // Predicated region
      $region21: #{down_forward.7} parent=11 // pred_check
        %p146 = pneg %p99
      $region22: #{down_forward.7} parent=11 // pred_check_branch
        %148 = sbr.rel (%p146) target = $region24
      $region23: #{down_forward.7} parent=11 // pred_region
        _
      $region24: #{down_forward.7} parent=11 // pred_fallthru
        _
    $region12: #{down_forward.7} parent=5 // pred_fallthru
      _
    %p149 = scmp.lt.s32.totalorder %s10, 2
    // Predicated region
    $region25: #{down_forward.7} parent=5 // pred_check
      %p150 = pneg %p149
    $region26: #{down_forward.7} parent=5 // pred_check_branch
      %152 = sbr.rel (%p150) target = $region28
    $region27: #{down_forward.7} parent=5 // pred_region
      // Predicated region
      $region29: #{down_forward.7} parent=27 // pred_check
        %p153 = pneg %p30
      $region30: #{down_forward.7} parent=27 // pred_check_branch
        %155 = sbr.rel (%p153) target = $region32
      $region31: #{down_forward.7} parent=27 // pred_region
        %s156 = smul.u32 64, %s10
        %p157 = scmp.lt.s32.totalorder %s156, 127
        %s158 = scalar_select %p157, %s156, 127
        %s159 = smul.addr %s158, 8
        %s160 = scalar_lea.vmem %s0, %s159
        %s161 = smul.u32 64, %s10
      $region32: #{down_forward.7} parent=27 // pred_fallthru
        _
    $region28: #{down_forward.7} parent=5 // pred_fallthru
      _
    %p162 = scmp.le.s32.totalorder 1, %s10
    %p163 = scmp.lt.s32.totalorder %s10, 3
    %p164 = pnand %p162, %p163
    %p165 = pneg %p164
    // Predicated region
    $region33: #{down_forward.7} parent=5 // pred_check
      _
    $region34: #{down_forward.7} parent=5 // pred_check_branch
      %167 = sbr.rel (%p164) target = $region36
    $region35: #{down_forward.7} parent=5 // pred_region
      %s168 = ssub.s32 %s10, 1
      %s169 = smul.u32 64, %s15
      %p170 = scmp.lt.s32.totalorder %s169, 127
      %s171 = scalar_select %p170, %s169, 127
      %s172 = smul.addr %s171, 8
      %s173 = scalar_lea.vmem %s0, %s172
      %p174 = pneg %p36
      %p175 = pneg %p33
      %p176 = pneg %p57
      %p177 = pneg %p54
      %p178 = pneg %p78
      %p179 = pneg %p75
      %p180 = pneg %p99
      %p181 = pneg %p96
      %p182 = pneg %p125
      %p183 = pneg %p122
      %s184 = smul.u32 64, %s15
      %p185 = scmp.lt.s32.totalorder %s184, 127
      %s186 = scalar_select %p185, %s184, 127
      %s187 = smul.addr %s186, 4
      %s188 = scalar_lea.vmem %s4, %s187
      %s189 = smul.u32 64, %s15
      %p190 = scmp.lt.s32.totalorder %s189, 127
      %s191 = scalar_select %p190, %s189, 127
      %s192 = smul.addr %s191, 8
      %s193 = scalar_lea.vmem %s0, %s192
      %s194 = smul.u32 64, %s15
      %s195 = smul.u32 64, %s15
      %p196 = scmp.lt.s32.totalorder %s195, 127
      %s197 = scalar_select %p196, %s195, 127
      %s198 = smul.addr %s197, 4
      %s199 = scalar_lea.vmem %s4, %s198
      %s200 = smul.u32 64, %s15
      %v201 = vld [vmem:[%s1] sm:$0x1]
      %v202 = vmul.f32 %v201, 0.0009765625
      %v203 = vld [vmem:[%s1 + $0x1] sm:$0x1]
      %v204 = vmul.f32 %v203, 0.0009765625
      %v205 = vmul.f32 %v202, %v202
      %v206 = vsub.f32 %v204, %v205
      %v207 = vmax.f32 %v206, 0.0
      %v208 = vld [vmem:[%s2] sm:$0x1]
      %v209 = vadd.f32 %v207, 1e-05
      %v210 = vrsqrt.pop %v209
      %v211 = vmul.f32 %v210, %v209
      %v212 = vmul.f32 %v211, %v210
      %v213 = vmul.f32 0.5, %v212
      %v214 = vsub.f32 1.5, %v213
      %v215 = vmul.f32 %v210, %v214
      %vm216 = vweird.f32 %v209
      %vm217 = vweird.f32 %v210
      %vm218 = vmor %vm216, %vm217
      %v219 = vsel %vm218, %v210, %v215
      %v220 = vmul.f32 %v208, %v219
      %v221 = vld [vmem:[%s3] sm:$0x1]
      %v222 = vmul.f32 %v202, %v220
      %v223 = vsub.f32 %v221, %v222
      %v224 = vld [vmem:[%s193] sm:$0xff]
      %v225 = vld [vmem:[%s193 + $0x8] sm:$0xff]
      %v226 = vld [vmem:[%s193 + $0x10] sm:$0xff]
      %v227 = vld [vmem:[%s193 + $0x18] sm:$0xff]
      %v228 = vld [vmem:[%s193 + $0x20] sm:$0xff]
      %v229 = vld [vmem:[%s193 + $0x28] sm:$0xff]
      %v230 = vld [vmem:[%s193 + $0x30] sm:$0xff]
      %v231 = vld [vmem:[%s193 + $0x38] sm:$0xff]
      %v232 = vld [vmem:[%s193 + $0x40] sm:$0xff]
      %v233 = vld [vmem:[%s193 + $0x48] sm:$0xff]
      %v234 = vld [vmem:[%s193 + $0x50] sm:$0xff]
      %v235 = vld [vmem:[%s193 + $0x58] sm:$0xff]
      %v236 = vld [vmem:[%s193 + $0x60] sm:$0xff]
      %v237 = vld [vmem:[%s193 + $0x68] sm:$0xff]
      %v238 = vld [vmem:[%s193 + $0x70] sm:$0xff]
      %v239 = vld [vmem:[%s193 + $0x78] sm:$0xff]
      %v240 = vld [vmem:[%s193 + $0x80] sm:$0xff]
      %v241 = vld [vmem:[%s193 + $0x88] sm:$0xff]
      %v242 = vld [vmem:[%s193 + $0x90] sm:$0xff]
      %v243 = vld [vmem:[%s193 + $0x98] sm:$0xff]
      %v244 = vld [vmem:[%s193 + $0xa0] sm:$0xff]
      %v245 = vld [vmem:[%s193 + $0xa8] sm:$0xff]
      %v246 = vld [vmem:[%s193 + $0xb0] sm:$0xff]
      %v247 = vld [vmem:[%s193 + $0xb8] sm:$0xff]
      %v248 = vld [vmem:[%s193 + $0xc0] sm:$0xff]
      %v249 = vld [vmem:[%s193 + $0xc8] sm:$0xff]
      %v250 = vld [vmem:[%s193 + $0xd0] sm:$0xff]
      %v251 = vld [vmem:[%s193 + $0xd8] sm:$0xff]
      %v252 = vld [vmem:[%s193 + $0xe0] sm:$0xff]
      %v253 = vld [vmem:[%s193 + $0xe8] sm:$0xff]
      %v254 = vld [vmem:[%s193 + $0xf0] sm:$0xff]
      %v255 = vld [vmem:[%s193 + $0xf8] sm:$0xff]
      %v256 = vld [vmem:[%s193 + $0x100] sm:$0xff]
      %v257 = vld [vmem:[%s193 + $0x108] sm:$0xff]
      %v258 = vld [vmem:[%s193 + $0x110] sm:$0xff]
      %v259 = vld [vmem:[%s193 + $0x118] sm:$0xff]
      %v260 = vld [vmem:[%s193 + $0x120] sm:$0xff]
      %v261 = vld [vmem:[%s193 + $0x128] sm:$0xff]
      %v262 = vld [vmem:[%s193 + $0x130] sm:$0xff]
      %v263 = vld [vmem:[%s193 + $0x138] sm:$0xff]
      %v264 = vld [vmem:[%s193 + $0x140] sm:$0xff]
      %v265 = vld [vmem:[%s193 + $0x148] sm:$0xff]
      %v266 = vld [vmem:[%s193 + $0x150] sm:$0xff]
      %v267 = vld [vmem:[%s193 + $0x158] sm:$0xff]
      %v268 = vld [vmem:[%s193 + $0x160] sm:$0xff]
      %v269 = vld [vmem:[%s193 + $0x168] sm:$0xff]
      %v270 = vld [vmem:[%s193 + $0x170] sm:$0xff]
      %v271 = vld [vmem:[%s193 + $0x178] sm:$0xff]
      %v272 = vld [vmem:[%s193 + $0x180] sm:$0xff]
      %v273 = vld [vmem:[%s193 + $0x188] sm:$0xff]
      %v274 = vld [vmem:[%s193 + $0x190] sm:$0xff]
      %v275 = vld [vmem:[%s193 + $0x198] sm:$0xff]
      %v276 = vld [vmem:[%s193 + $0x1a0] sm:$0xff]
      %v277 = vld [vmem:[%s193 + $0x1a8] sm:$0xff]
      %v278 = vld [vmem:[%s193 + $0x1b0] sm:$0xff]
      %v279 = vld [vmem:[%s193 + $0x1b8] sm:$0xff]
      %v280 = vld [vmem:[%s193 + $0x1c0] sm:$0xff]
      %v281 = vld [vmem:[%s193 + $0x1c8] sm:$0xff]
      %v282 = vld [vmem:[%s193 + $0x1d0] sm:$0xff]
      %v283 = vld [vmem:[%s193 + $0x1d8] sm:$0xff]
      %v284 = vld [vmem:[%s193 + $0x1e0] sm:$0xff]
      %v285 = vld [vmem:[%s193 + $0x1e8] sm:$0xff]
      %v286 = vld [vmem:[%s193 + $0x1f0] sm:$0xff]
      %v287 = vld [vmem:[%s193 + $0x1f8] sm:$0xff]
      %v289 = vperm.slane %v220, 0
      %v291 = vmul.f32 %v224, %v289
      %v292 = vmul.f32 %v225, %v289
      %v293 = vmul.f32 %v226, %v289
      %v294 = vmul.f32 %v227, %v289
      %v295 = vmul.f32 %v228, %v289
      %v296 = vmul.f32 %v229, %v289
      %v297 = vmul.f32 %v230, %v289
      %v298 = vmul.f32 %v231, %v289
      %v299 = vmul.f32 %v232, %v289
      %v300 = vmul.f32 %v233, %v289
      %v301 = vmul.f32 %v234, %v289
      %v302 = vmul.f32 %v235, %v289
      %v303 = vmul.f32 %v236, %v289
      %v304 = vmul.f32 %v237, %v289
      %v305 = vmul.f32 %v238, %v289
      %v306 = vmul.f32 %v239, %v289
      %v307 = vmul.f32 %v240, %v289
      %v308 = vmul.f32 %v241, %v289
      %v309 = vmul.f32 %v242, %v289
      %v310 = vmul.f32 %v243, %v289
      %v311 = vmul.f32 %v244, %v289
      %v312 = vmul.f32 %v245, %v289
      %v313 = vmul.f32 %v246, %v289
      %v314 = vmul.f32 %v247, %v289
      %v315 = vmul.f32 %v248, %v289
      %v316 = vmul.f32 %v249, %v289
      %v317 = vmul.f32 %v250, %v289
      %v318 = vmul.f32 %v251, %v289
      %v319 = vmul.f32 %v252, %v289
      %v320 = vmul.f32 %v253, %v289
      %v321 = vmul.f32 %v254, %v289
      %v322 = vmul.f32 %v255, %v289
      %v323 = vmul.f32 %v256, %v289
      %v324 = vmul.f32 %v257, %v289
      %v325 = vmul.f32 %v258, %v289
      %v326 = vmul.f32 %v259, %v289
      %v327 = vmul.f32 %v260, %v289
      %v328 = vmul.f32 %v261, %v289
      %v329 = vmul.f32 %v262, %v289
      %v330 = vmul.f32 %v263, %v289
      %v331 = vmul.f32 %v264, %v289
      %v332 = vmul.f32 %v265, %v289
      %v333 = vmul.f32 %v266, %v289
      %v334 = vmul.f32 %v267, %v289
      %v335 = vmul.f32 %v268, %v289
      %v336 = vmul.f32 %v269, %v289
      %v337 = vmul.f32 %v270, %v289
      %v338 = vmul.f32 %v271, %v289
      %v339 = vmul.f32 %v272, %v289
      %v340 = vmul.f32 %v273, %v289
      %v341 = vmul.f32 %v274, %v289
      %v342 = vmul.f32 %v275, %v289
      %v343 = vmul.f32 %v276, %v289
      %v344 = vmul.f32 %v277, %v289
      %v345 = vmul.f32 %v278, %v289
      %v346 = vmul.f32 %v279, %v289
      %v347 = vmul.f32 %v280, %v289
      %v348 = vmul.f32 %v281, %v289
      %v349 = vmul.f32 %v282, %v289
      %v350 = vmul.f32 %v283, %v289
      %v351 = vmul.f32 %v284, %v289
      %v352 = vmul.f32 %v285, %v289
      %v353 = vmul.f32 %v286, %v289
      %v354 = vmul.f32 %v287, %v289
      %v356 = vperm.slane %v223, 0
      %v358 = vadd.f32 %v291, %v356
      %v359 = vadd.f32 %v292, %v356
      %v360 = vadd.f32 %v293, %v356
      %v361 = vadd.f32 %v294, %v356
      %v362 = vadd.f32 %v295, %v356
      %v363 = vadd.f32 %v296, %v356
      %v364 = vadd.f32 %v297, %v356
      %v365 = vadd.f32 %v298, %v356
      %v366 = vadd.f32 %v299, %v356
      %v367 = vadd.f32 %v300, %v356
      %v368 = vadd.f32 %v301, %v356
      %v369 = vadd.f32 %v302, %v356
      %v370 = vadd.f32 %v303, %v356
      %v371 = vadd.f32 %v304, %v356
      %v372 = vadd.f32 %v305, %v356
      %v373 = vadd.f32 %v306, %v356
      %v374 = vadd.f32 %v307, %v356
      %v375 = vadd.f32 %v308, %v356
      %v376 = vadd.f32 %v309, %v356
      %v377 = vadd.f32 %v310, %v356
      %v378 = vadd.f32 %v311, %v356
      %v379 = vadd.f32 %v312, %v356
      %v380 = vadd.f32 %v313, %v356
      %v381 = vadd.f32 %v314, %v356
      %v382 = vadd.f32 %v315, %v356
      %v383 = vadd.f32 %v316, %v356
      %v384 = vadd.f32 %v317, %v356
      %v385 = vadd.f32 %v318, %v356
      %v386 = vadd.f32 %v319, %v356
      %v387 = vadd.f32 %v320, %v356
      %v388 = vadd.f32 %v321, %v356
      %v389 = vadd.f32 %v322, %v356
      %v390 = vadd.f32 %v323, %v356
      %v391 = vadd.f32 %v324, %v356
      %v392 = vadd.f32 %v325, %v356
      %v393 = vadd.f32 %v326, %v356
      %v394 = vadd.f32 %v327, %v356
      %v395 = vadd.f32 %v328, %v356
      %v396 = vadd.f32 %v329, %v356
      %v397 = vadd.f32 %v330, %v356
      %v398 = vadd.f32 %v331, %v356
      %v399 = vadd.f32 %v332, %v356
      %v400 = vadd.f32 %v333, %v356
      %v401 = vadd.f32 %v334, %v356
      %v402 = vadd.f32 %v335, %v356
      %v403 = vadd.f32 %v336, %v356
      %v404 = vadd.f32 %v337, %v356
      %v405 = vadd.f32 %v338, %v356
      %v406 = vadd.f32 %v339, %v356
      %v407 = vadd.f32 %v340, %v356
      %v408 = vadd.f32 %v341, %v356
      %v409 = vadd.f32 %v342, %v356
      %v410 = vadd.f32 %v343, %v356
      %v411 = vadd.f32 %v344, %v356
      %v412 = vadd.f32 %v345, %v356
      %v413 = vadd.f32 %v346, %v356
      %v414 = vadd.f32 %v347, %v356
      %v415 = vadd.f32 %v348, %v356
      %v416 = vadd.f32 %v349, %v356
      %v417 = vadd.f32 %v350, %v356
      %v418 = vadd.f32 %v351, %v356
      %v419 = vadd.f32 %v352, %v356
      %v420 = vadd.f32 %v353, %v356
      %v421 = vadd.f32 %v354, %v356
      %v422 = vmax.f32 %v358, 0.0
      %v423 = vmax.f32 %v359, 0.0
      %v424 = vmax.f32 %v360, 0.0
      %v425 = vmax.f32 %v361, 0.0
      %v426 = vmax.f32 %v362, 0.0
      %v427 = vmax.f32 %v363, 0.0
      %v428 = vmax.f32 %v364, 0.0
      %v429 = vmax.f32 %v365, 0.0
      %v430 = vmax.f32 %v366, 0.0
      %v431 = vmax.f32 %v367, 0.0
      %v432 = vmax.f32 %v368, 0.0
      %v433 = vmax.f32 %v369, 0.0
      %v434 = vmax.f32 %v370, 0.0
      %v435 = vmax.f32 %v371, 0.0
      %v436 = vmax.f32 %v372, 0.0
      %v437 = vmax.f32 %v373, 0.0
      %v438 = vmax.f32 %v374, 0.0
      %v439 = vmax.f32 %v375, 0.0
      %v440 = vmax.f32 %v376, 0.0
      %v441 = vmax.f32 %v377, 0.0
      %v442 = vmax.f32 %v378, 0.0
      %v443 = vmax.f32 %v379, 0.0
      %v444 = vmax.f32 %v380, 0.0
      %v445 = vmax.f32 %v381, 0.0
      %v446 = vmax.f32 %v382, 0.0
      %v447 = vmax.f32 %v383, 0.0
      %v448 = vmax.f32 %v384, 0.0
      %v449 = vmax.f32 %v385, 0.0
      %v450 = vmax.f32 %v386, 0.0
      %v451 = vmax.f32 %v387, 0.0
      %v452 = vmax.f32 %v388, 0.0
      %v453 = vmax.f32 %v389, 0.0
      %v454 = vmax.f32 %v390, 0.0
      %v455 = vmax.f32 %v391, 0.0
      %v456 = vmax.f32 %v392, 0.0
      %v457 = vmax.f32 %v393, 0.0
      %v458 = vmax.f32 %v394, 0.0
      %v459 = vmax.f32 %v395, 0.0
      %v460 = vmax.f32 %v396, 0.0
      %v461 = vmax.f32 %v397, 0.0
      %v462 = vmax.f32 %v398, 0.0
      %v463 = vmax.f32 %v399, 0.0
      %v464 = vmax.f32 %v400, 0.0
      %v465 = vmax.f32 %v401, 0.0
      %v466 = vmax.f32 %v402, 0.0
      %v467 = vmax.f32 %v403, 0.0
      %v468 = vmax.f32 %v404, 0.0
      %v469 = vmax.f32 %v405, 0.0
      %v470 = vmax.f32 %v406, 0.0
      %v471 = vmax.f32 %v407, 0.0
      %v472 = vmax.f32 %v408, 0.0
      %v473 = vmax.f32 %v409, 0.0
      %v474 = vmax.f32 %v410, 0.0
      %v475 = vmax.f32 %v411, 0.0
      %v476 = vmax.f32 %v412, 0.0
      %v477 = vmax.f32 %v413, 0.0
      %v478 = vmax.f32 %v414, 0.0
      %v479 = vmax.f32 %v415, 0.0
      %v480 = vmax.f32 %v416, 0.0
      %v481 = vmax.f32 %v417, 0.0
      %v482 = vmax.f32 %v418, 0.0
      %v483 = vmax.f32 %v419, 0.0
      %v484 = vmax.f32 %v420, 0.0
      %v485 = vmax.f32 %v421, 0.0
      %v486 = vpack.c.bf16 %v422, %v422
      %v487 = vpack.c.bf16 %v423, %v423
      %v488 = vpack.c.bf16 %v424, %v424
      %v489 = vpack.c.bf16 %v425, %v425
      %v490 = vpack.c.bf16 %v426, %v426
      %v491 = vpack.c.bf16 %v427, %v427
      %v492 = vpack.c.bf16 %v428, %v428
      %v493 = vpack.c.bf16 %v429, %v429
      %v494 = vpack.c.bf16 %v430, %v430
      %v495 = vpack.c.bf16 %v431, %v431
      %v496 = vpack.c.bf16 %v432, %v432
      %v497 = vpack.c.bf16 %v433, %v433
      %v498 = vpack.c.bf16 %v434, %v434
      %v499 = vpack.c.bf16 %v435, %v435
      %v500 = vpack.c.bf16 %v436, %v436
      %v501 = vpack.c.bf16 %v437, %v437
      %v502 = vpack.c.bf16 %v438, %v438
      %v503 = vpack.c.bf16 %v439, %v439
      %v504 = vpack.c.bf16 %v440, %v440
      %v505 = vpack.c.bf16 %v441, %v441
      %v506 = vpack.c.bf16 %v442, %v442
      %v507 = vpack.c.bf16 %v443, %v443
      %v508 = vpack.c.bf16 %v444, %v444
      %v509 = vpack.c.bf16 %v445, %v445
      %v510 = vpack.c.bf16 %v446, %v446
      %v511 = vpack.c.bf16 %v447, %v447
      %v512 = vpack.c.bf16 %v448, %v448
      %v513 = vpack.c.bf16 %v449, %v449
      %v514 = vpack.c.bf16 %v450, %v450
      %v515 = vpack.c.bf16 %v451, %v451
      %v516 = vpack.c.bf16 %v452, %v452
      %v517 = vpack.c.bf16 %v453, %v453
      %v518 = vpack.c.bf16 %v454, %v454
      %v519 = vpack.c.bf16 %v455, %v455
      %v520 = vpack.c.bf16 %v456, %v456
      %v521 = vpack.c.bf16 %v457, %v457
      %v522 = vpack.c.bf16 %v458, %v458
      %v523 = vpack.c.bf16 %v459, %v459
      %v524 = vpack.c.bf16 %v460, %v460
      %v525 = vpack.c.bf16 %v461, %v461
      %v526 = vpack.c.bf16 %v462, %v462
      %v527 = vpack.c.bf16 %v463, %v463
      %v528 = vpack.c.bf16 %v464, %v464
      %v529 = vpack.c.bf16 %v465, %v465
      %v530 = vpack.c.bf16 %v466, %v466
      %v531 = vpack.c.bf16 %v467, %v467
      %v532 = vpack.c.bf16 %v468, %v468
      %v533 = vpack.c.bf16 %v469, %v469
      %v534 = vpack.c.bf16 %v470, %v470
      %v535 = vpack.c.bf16 %v471, %v471
      %v536 = vpack.c.bf16 %v472, %v472
      %v537 = vpack.c.bf16 %v473, %v473
      %v538 = vpack.c.bf16 %v474, %v474
      %v539 = vpack.c.bf16 %v475, %v475
      %v540 = vpack.c.bf16 %v476, %v476
      %v541 = vpack.c.bf16 %v477, %v477
      %v542 = vpack.c.bf16 %v478, %v478
      %v543 = vpack.c.bf16 %v479, %v479
      %v544 = vpack.c.bf16 %v480, %v480
      %v545 = vpack.c.bf16 %v481, %v481
      %v546 = vpack.c.bf16 %v482, %v482
      %v547 = vpack.c.bf16 %v483, %v483
      %v548 = vpack.c.bf16 %v484, %v484
      %v549 = vpack.c.bf16 %v485, %v485
      %550 = vst [vmem:[%s199] sm:$0xf] %v486
      %551 = vst [vmem:[%s199 + $0x4] sm:$0xf] %v487
      %552 = vst [vmem:[%s199 + $0x8] sm:$0xf] %v488
      %553 = vst [vmem:[%s199 + $0xc] sm:$0xf] %v489
      %554 = vst [vmem:[%s199 + $0x10] sm:$0xf] %v490
      %555 = vst [vmem:[%s199 + $0x14] sm:$0xf] %v491
      %556 = vst [vmem:[%s199 + $0x18] sm:$0xf] %v492
      %557 = vst [vmem:[%s199 + $0x1c] sm:$0xf] %v493
      %558 = vst [vmem:[%s199 + $0x20] sm:$0xf] %v494
      %559 = vst [vmem:[%s199 + $0x24] sm:$0xf] %v495
      %560 = vst [vmem:[%s199 + $0x28] sm:$0xf] %v496
      %561 = vst [vmem:[%s199 + $0x2c] sm:$0xf] %v497
      %562 = vst [vmem:[%s199 + $0x30] sm:$0xf] %v498
      %563 = vst [vmem:[%s199 + $0x34] sm:$0xf] %v499
      %564 = vst [vmem:[%s199 + $0x38] sm:$0xf] %v500
      %565 = vst [vmem:[%s199 + $0x3c] sm:$0xf] %v501
      %566 = vst [vmem:[%s199 + $0x40] sm:$0xf] %v502
      %567 = vst [vmem:[%s199 + $0x44] sm:$0xf] %v503
      %568 = vst [vmem:[%s199 + $0x48] sm:$0xf] %v504
      %569 = vst [vmem:[%s199 + $0x4c] sm:$0xf] %v505
      %570 = vst [vmem:[%s199 + $0x50] sm:$0xf] %v506
      %571 = vst [vmem:[%s199 + $0x54] sm:$0xf] %v507
      %572 = vst [vmem:[%s199 + $0x58] sm:$0xf] %v508
      %573 = vst [vmem:[%s199 + $0x5c] sm:$0xf] %v509
      %574 = vst [vmem:[%s199 + $0x60] sm:$0xf] %v510
      %575 = vst [vmem:[%s199 + $0x64] sm:$0xf] %v511
      %576 = vst [vmem:[%s199 + $0x68] sm:$0xf] %v512
      %577 = vst [vmem:[%s199 + $0x6c] sm:$0xf] %v513
      %578 = vst [vmem:[%s199 + $0x70] sm:$0xf] %v514
      %579 = vst [vmem:[%s199 + $0x74] sm:$0xf] %v515
      %580 = vst [vmem:[%s199 + $0x78] sm:$0xf] %v516
      %581 = vst [vmem:[%s199 + $0x7c] sm:$0xf] %v517
      %582 = vst [vmem:[%s199 + $0x80] sm:$0xf] %v518
      %583 = vst [vmem:[%s199 + $0x84] sm:$0xf] %v519
      %584 = vst [vmem:[%s199 + $0x88] sm:$0xf] %v520
      %585 = vst [vmem:[%s199 + $0x8c] sm:$0xf] %v521
      %586 = vst [vmem:[%s199 + $0x90] sm:$0xf] %v522
      %587 = vst [vmem:[%s199 + $0x94] sm:$0xf] %v523
      %588 = vst [vmem:[%s199 + $0x98] sm:$0xf] %v524
      %589 = vst [vmem:[%s199 + $0x9c] sm:$0xf] %v525
      %590 = vst [vmem:[%s199 + $0xa0] sm:$0xf] %v526
      %591 = vst [vmem:[%s199 + $0xa4] sm:$0xf] %v527
      %592 = vst [vmem:[%s199 + $0xa8] sm:$0xf] %v528
      %593 = vst [vmem:[%s199 + $0xac] sm:$0xf] %v529
      %594 = vst [vmem:[%s199 + $0xb0] sm:$0xf] %v530
      %595 = vst [vmem:[%s199 + $0xb4] sm:$0xf] %v531
      %596 = vst [vmem:[%s199 + $0xb8] sm:$0xf] %v532
      %597 = vst [vmem:[%s199 + $0xbc] sm:$0xf] %v533
      %598 = vst [vmem:[%s199 + $0xc0] sm:$0xf] %v534
      %599 = vst [vmem:[%s199 + $0xc4] sm:$0xf] %v535
      %600 = vst [vmem:[%s199 + $0xc8] sm:$0xf] %v536
      %601 = vst [vmem:[%s199 + $0xcc] sm:$0xf] %v537
      %602 = vst [vmem:[%s199 + $0xd0] sm:$0xf] %v538
      %603 = vst [vmem:[%s199 + $0xd4] sm:$0xf] %v539
      %604 = vst [vmem:[%s199 + $0xd8] sm:$0xf] %v540
      %605 = vst [vmem:[%s199 + $0xdc] sm:$0xf] %v541
      %606 = vst [vmem:[%s199 + $0xe0] sm:$0xf] %v542
      %607 = vst [vmem:[%s199 + $0xe4] sm:$0xf] %v543
      %608 = vst [vmem:[%s199 + $0xe8] sm:$0xf] %v544
      %609 = vst [vmem:[%s199 + $0xec] sm:$0xf] %v545
      %610 = vst [vmem:[%s199 + $0xf0] sm:$0xf] %v546
      %611 = vst [vmem:[%s199 + $0xf4] sm:$0xf] %v547
      %612 = vst [vmem:[%s199 + $0xf8] sm:$0xf] %v548
      %613 = vst [vmem:[%s199 + $0xfc] sm:$0xf] %v549
      %s614 = smul.u32 64, %s15
      %p615 = scmp.lt.s32.totalorder %s614, 127
      %s616 = scalar_select %p615, %s614, 127
      %s617 = smul.addr %s616, 4
      %s618 = scalar_lea.vmem %s4, %s617
      // Predicated region
      $region37: #{down_forward.7} parent=35 // pred_check
        %p619 = pneg %p122
      $region38: #{down_forward.7} parent=35 // pred_check_branch
        %621 = sbr.rel (%p619) target = $region40
      $region39: #{down_forward.7} parent=35 // pred_region
        %s622 = smul.u32 64, %s15
      $region40: #{down_forward.7} parent=35 // pred_fallthru
        _
    $region36: #{down_forward.7} parent=5 // pred_fallthru
      _
    %p623 = scmp.le.s32.totalorder 2, %s10
    // Predicated region
    $region41: #{down_forward.7} parent=5 // pred_check
      %p624 = pneg %p623
    $region42: #{down_forward.7} parent=5 // pred_check_branch
      %626 = sbr.rel (%p624) target = $region44
    $region43: #{down_forward.7} parent=5 // pred_region
      %s627 = ssub.s32 %s10, 2
      // Predicated region
      $region45: #{down_forward.7} parent=43 // pred_check
        %p628 = pneg %p128
      $region46: #{down_forward.7} parent=43 // pred_check_branch
        %630 = sbr.rel (%p628) target = $region48
      $region47: #{down_forward.7} parent=43 // pred_region
        %s631 = smul.u32 64, %s16
        %p632 = scmp.lt.s32.totalorder %s631, 127
        %s633 = scalar_select %p632, %s631, 127
        %s634 = smul.addr %s633, 4
        %s635 = scalar_lea.vmem %s4, %s634
      $region48: #{down_forward.7} parent=43 // pred_fallthru
        _
    $region44: #{down_forward.7} parent=5 // pred_fallthru
      _
  $region6: #{down_forward.7} parent=0 // loop_footer
    %s14 = sadd.s32 1, %s10
  $region7: #{down_forward.7} parent=0 // loop_footer_branch
    %9 = sbr.rel target = $region3
  $region8: #{down_forward.7} parent=0 // loop_exit
    _

// kernel: down_forward.8
$region0: #{down_forward.8}
  #allocation0 [shape = 'u32[]', space=smem, size = 0x4, offset = 0x4, fixed_abs, tag = 'smem constant byte address 0x4 - core index']
  #allocation1 [shape = 'u32[72,128]{1,0:T(1,128)}', space=vmem, size = 0x9000, scoped, tag = 'internal scratch']
  %s0 = inlined_call_operand.vmem [shape: bf16[1024,256], index: 0, kind: input, shape index: {}]
  %s1 = inlined_call_operand.vmem [shape: bf16[256,128], index: 1, kind: input, shape index: {}]
  %s2 = inlined_call_operand.vmem [shape: f32[1024,128], index: 2, kind: output, shape index: {0}]
  %s3 = inlined_call_operand.vmem [shape: f32[2,128], index: 3, kind: output, shape index: {1}]
  %4 = xla_tuple %s2, %s3
  %s5 = sld [smem:[#allocation0]]
  $region53: #{down_forward.8} parent=0
    _
  %s7 = ssub.s32 1, %s5
  %s8 = scalar_select 0, %s7, %s5
  loop: start=0, step=1, limit=4
  $region2: #{down_forward.8} parent=0 // loop_pre_header
    _
  $region3: #{down_forward.8} parent=0 // loop_header
    %s10 = sphi 0, %s14
    %p11 = scmp.ge.s32.totalorder %s10, 4
    %s20 = sphi 0, %s22
    %s23 = sphi 0, %s20
    %s24 = sphi 0, %s23
    %s40 = sphi 0, %s24
    %s44 = sphi 0, %s44
    %s46 = sphi 0, %s44
    %s47 = sphi 0, %s46
    %s61 = sphi 0, %s47
    %s67 = sphi 0, %s69
    %s70 = sphi 0, %s67
    %s71 = sphi 0, %s70
    %s87 = sphi 0, %s71
    %s91 = sphi 0, %s91
    %s93 = sphi 0, %s91
    %s94 = sphi 0, %s93
    %s108 = sphi 0, %s94
  $region4: #{down_forward.8} parent=0 // loop_header_branch
    %13 = sbr.rel (%p11) target = $region8
  $region5: #{down_forward.8} parent=0 // loop_body
    %s15 = ssub.s32 %s10, 1
    %s16 = ssub.s32 %s10, 2
    %s17 = sadd.s32 %s10, 1
    %s18 = ssub.s32 %s10, %s17
    %p19 = scmp.eq.s32.totalorder %s18, 0
    %s21 = sadd.s32 %s20, 1
    %s22 = scalar_select %p19, %s20, %s21
    %p25 = pneg %p19
    %p26 = scmp.eq.s32.totalorder %s10, 1
    %p27 = por %p25, %p26
    %p28 = scmp.ne.s32.totalorder %s20, %s23
    %p29 = scmp.eq.s32.totalorder %s10, 0
    %p30 = por %p28, %p29
    %p31 = scmp.ne.s32.totalorder %s20, %s23
    %p32 = scmp.eq.s32.totalorder %s15, 1
    %p33 = por %p31, %p32
    %p34 = scmp.ne.s32.totalorder %s23, %s24
    %p35 = scmp.eq.s32.totalorder %s15, 0
    %p36 = por %p34, %p35
    %p37 = scmp.ne.s32.totalorder %s23, %s24
    %p38 = scmp.eq.s32.totalorder %s16, 1
    %p39 = por %p37, %p38
    %p41 = scmp.ne.s32.totalorder %s24, %s40
    %p42 = scmp.eq.s32.totalorder %s16, 0
    %p43 = por %p41, %p42
    %s45 = sadd.s32 %s44, 1
    %p48 = scmp.eq.s32.totalorder %s10, 1
    %p49 = scmp.ne.s32.totalorder %s44, %s46
    %p50 = scmp.eq.s32.totalorder %s10, 0
    %p51 = por %p49, %p50
    %p52 = scmp.ne.s32.totalorder %s44, %s46
    %p53 = scmp.eq.s32.totalorder %s15, 1
    %p54 = por %p52, %p53
    %p55 = scmp.ne.s32.totalorder %s46, %s47
    %p56 = scmp.eq.s32.totalorder %s15, 0
    %p57 = por %p55, %p56
    %p58 = scmp.ne.s32.totalorder %s46, %s47
    %p59 = scmp.eq.s32.totalorder %s16, 1
    %p60 = por %p58, %p59
    %p62 = scmp.ne.s32.totalorder %s47, %s61
    %p63 = scmp.eq.s32.totalorder %s16, 0
    %p64 = por %p62, %p63
    %s65 = ssub.s32 %s10, %s17
    %p66 = scmp.eq.s32.totalorder %s65, 0
    %s68 = sadd.s32 %s67, 1
    %s69 = scalar_select %p66, %s67, %s68
    %p72 = pneg %p66
    %p73 = scmp.eq.s32.totalorder %s10, 1
    %p74 = por %p72, %p73
    %p75 = scmp.ne.s32.totalorder %s67, %s70
    %p76 = scmp.eq.s32.totalorder %s10, 0
    %p77 = por %p75, %p76
    %p78 = scmp.ne.s32.totalorder %s67, %s70
    %p79 = scmp.eq.s32.totalorder %s15, 1
    %p80 = por %p78, %p79
    %p81 = scmp.ne.s32.totalorder %s70, %s71
    %p82 = scmp.eq.s32.totalorder %s15, 0
    %p83 = por %p81, %p82
    %p84 = scmp.ne.s32.totalorder %s70, %s71
    %p85 = scmp.eq.s32.totalorder %s16, 1
    %p86 = por %p84, %p85
    %p88 = scmp.ne.s32.totalorder %s71, %s87
    %p89 = scmp.eq.s32.totalorder %s16, 0
    %p90 = por %p88, %p89
    %s92 = sadd.s32 %s91, 1
    %p95 = scmp.eq.s32.totalorder %s10, 1
    %p96 = scmp.ne.s32.totalorder %s91, %s93
    %p97 = scmp.eq.s32.totalorder %s10, 0
    %p98 = por %p96, %p97
    %p99 = scmp.ne.s32.totalorder %s91, %s93
    %p100 = scmp.eq.s32.totalorder %s15, 1
    %p101 = por %p99, %p100
    %p102 = scmp.ne.s32.totalorder %s93, %s94
    %p103 = scmp.eq.s32.totalorder %s15, 0
    %p104 = por %p102, %p103
    %p105 = scmp.ne.s32.totalorder %s93, %s94
    %p106 = scmp.eq.s32.totalorder %s16, 1
    %p107 = por %p105, %p106
    %p109 = scmp.ne.s32.totalorder %s94, %s108
    %p110 = scmp.eq.s32.totalorder %s16, 0
    %p111 = por %p109, %p110
    %p112 = scmp.le.s32.totalorder 1, %s10
    %p113 = scmp.lt.s32.totalorder %s10, 3
    %p114 = pnand %p112, %p113
    %p115 = pneg %p114
    // Predicated region
    $region9: #{down_forward.8} parent=5 // pred_check
      _
    $region10: #{down_forward.8} parent=5 // pred_check_branch
      %117 = sbr.rel (%p114) target = $region12
    $region11: #{down_forward.8} parent=5 // pred_region
      %s118 = ssub.s32 %s10, 1
      // Predicated region
      $region13: #{down_forward.8} parent=11 // pred_check
        %p119 = pneg %p57
      $region14: #{down_forward.8} parent=11 // pred_check_branch
        %121 = sbr.rel (%p119) target = $region16
      $region15: #{down_forward.8} parent=11 // pred_region
        _
      $region16: #{down_forward.8} parent=11 // pred_fallthru
        _
    $region12: #{down_forward.8} parent=5 // pred_fallthru
      _
    %p122 = scmp.lt.s32.totalorder %s10, 2
    // Predicated region
    $region17: #{down_forward.8} parent=5 // pred_check
      %p123 = pneg %p122
    $region18: #{down_forward.8} parent=5 // pred_check_branch
      %125 = sbr.rel (%p123) target = $region20
    $region19: #{down_forward.8} parent=5 // pred_region
      // Predicated region
      $region21: #{down_forward.8} parent=19 // pred_check
        %p126 = pneg %p30
      $region22: #{down_forward.8} parent=19 // pred_check_branch
        %128 = sbr.rel (%p126) target = $region24
      $region23: #{down_forward.8} parent=19 // pred_region
        %s129 = smul.u32 64, %s10
        %p130 = scmp.lt.s32.totalorder %s129, 127
        %s131 = scalar_select %p130, %s129, 127
        %s132 = smul.addr %s131, 2
        %s133 = smul.addr %s132, 4
        %s134 = scalar_lea.vmem %s0, %s133
        %s135 = smul.u32 64, %s10
      $region24: #{down_forward.8} parent=19 // pred_fallthru
        _
    $region20: #{down_forward.8} parent=5 // pred_fallthru
      _
    %p136 = scmp.le.s32.totalorder 1, %s10
    %p137 = scmp.lt.s32.totalorder %s10, 3
    %p138 = pnand %p136, %p137
    %p139 = pneg %p138
    // Predicated region
    $region25: #{down_forward.8} parent=5 // pred_check
      _
    $region26: #{down_forward.8} parent=5 // pred_check_branch
      %141 = sbr.rel (%p138) target = $region28
    $region27: #{down_forward.8} parent=5 // pred_region
      %s142 = ssub.s32 %s10, 1
      %s143 = smul.u32 64, %s15
      %p144 = scmp.lt.s32.totalorder %s143, 127
      %s145 = scalar_select %p144, %s143, 127
      %s146 = smul.addr %s145, 2
      %s147 = smul.addr %s146, 4
      %s148 = scalar_lea.vmem %s0, %s147
      %p149 = pneg %p36
      %p150 = pneg %p33
      %p151 = pneg %p57
      %p152 = pneg %p54
      %p153 = pneg %p83
      %p154 = pneg %p80
      %s155 = smul.u32 64, %s15
      %p156 = scmp.lt.s32.totalorder %s155, 127
      %s157 = scalar_select %p156, %s155, 127
      %s158 = smul.addr %s157, 8
      %s159 = scalar_lea.vmem %s2, %s158
      %p160 = pneg %p104
      %p161 = pneg %p101
      %s162 = smul.u32 64, %s15
      %p163 = scmp.lt.s32.totalorder %s162, 127
      %s164 = scalar_select %p163, %s162, 127
      %s165 = smul.addr %s164, 2
      %s166 = smul.addr %s165, 4
      %s167 = scalar_lea.vmem %s0, %s166
      %s168 = smul.u32 64, %s15
      %s169 = smul.u32 64, %s15
      %p170 = scmp.lt.s32.totalorder %s169, 127
      %s171 = scalar_select %p170, %s169, 127
      %s172 = smul.addr %s171, 8
      %s173 = scalar_lea.vmem %s2, %s172
      %s174 = smul.u32 64, %s15
      %v175 = vld [vmem:[%s167] sm:$0xff]
      %v176 = vld [vmem:[%s167 + $0x8] sm:$0xff]
      %v177 = vld [vmem:[%s167 + $0x10] sm:$0xff]
      %v178 = vld [vmem:[%s167 + $0x18] sm:$0xff]
      %v179 = vld [vmem:[%s167 + $0x20] sm:$0xff]
      %v180 = vld [vmem:[%s167 + $0x28] sm:$0xff]
      %v181 = vld [vmem:[%s167 + $0x30] sm:$0xff]
      %v182 = vld [vmem:[%s167 + $0x38] sm:$0xff]
      %v183 = vld [vmem:[%s167 + $0x40] sm:$0xff]
      %v184 = vld [vmem:[%s167 + $0x48] sm:$0xff]
      %v185 = vld [vmem:[%s167 + $0x50] sm:$0xff]
      %v186 = vld [vmem:[%s167 + $0x58] sm:$0xff]
      %v187 = vld [vmem:[%s167 + $0x60] sm:$0xff]
      %v188 = vld [vmem:[%s167 + $0x68] sm:$0xff]
      %v189 = vld [vmem:[%s167 + $0x70] sm:$0xff]
      %v190 = vld [vmem:[%s167 + $0x78] sm:$0xff]
      %v191 = vld [vmem:[%s167 + $0x80] sm:$0xff]
      %v192 = vld [vmem:[%s167 + $0x88] sm:$0xff]
      %v193 = vld [vmem:[%s167 + $0x90] sm:$0xff]
      %v194 = vld [vmem:[%s167 + $0x98] sm:$0xff]
      %v195 = vld [vmem:[%s167 + $0xa0] sm:$0xff]
      %v196 = vld [vmem:[%s167 + $0xa8] sm:$0xff]
      %v197 = vld [vmem:[%s167 + $0xb0] sm:$0xff]
      %v198 = vld [vmem:[%s167 + $0xb8] sm:$0xff]
      %v199 = vld [vmem:[%s167 + $0xc0] sm:$0xff]
      %v200 = vld [vmem:[%s167 + $0xc8] sm:$0xff]
      %v201 = vld [vmem:[%s167 + $0xd0] sm:$0xff]
      %v202 = vld [vmem:[%s167 + $0xd8] sm:$0xff]
      %v203 = vld [vmem:[%s167 + $0xe0] sm:$0xff]
      %v204 = vld [vmem:[%s167 + $0xe8] sm:$0xff]
      %v205 = vld [vmem:[%s167 + $0xf0] sm:$0xff]
      %v206 = vld [vmem:[%s167 + $0xf8] sm:$0xff]
      %v207 = vld [vmem:[%s167 + $0x100] sm:$0xff]
      %v208 = vld [vmem:[%s167 + $0x108] sm:$0xff]
      %v209 = vld [vmem:[%s167 + $0x110] sm:$0xff]
      %v210 = vld [vmem:[%s167 + $0x118] sm:$0xff]
      %v211 = vld [vmem:[%s167 + $0x120] sm:$0xff]
      %v212 = vld [vmem:[%s167 + $0x128] sm:$0xff]
      %v213 = vld [vmem:[%s167 + $0x130] sm:$0xff]
      %v214 = vld [vmem:[%s167 + $0x138] sm:$0xff]
      %v215 = vld [vmem:[%s167 + $0x140] sm:$0xff]
      %v216 = vld [vmem:[%s167 + $0x148] sm:$0xff]
      %v217 = vld [vmem:[%s167 + $0x150] sm:$0xff]
      %v218 = vld [vmem:[%s167 + $0x158] sm:$0xff]
      %v219 = vld [vmem:[%s167 + $0x160] sm:$0xff]
      %v220 = vld [vmem:[%s167 + $0x168] sm:$0xff]
      %v221 = vld [vmem:[%s167 + $0x170] sm:$0xff]
      %v222 = vld [vmem:[%s167 + $0x178] sm:$0xff]
      %v223 = vld [vmem:[%s167 + $0x180] sm:$0xff]
      %v224 = vld [vmem:[%s167 + $0x188] sm:$0xff]
      %v225 = vld [vmem:[%s167 + $0x190] sm:$0xff]
      %v226 = vld [vmem:[%s167 + $0x198] sm:$0xff]
      %v227 = vld [vmem:[%s167 + $0x1a0] sm:$0xff]
      %v228 = vld [vmem:[%s167 + $0x1a8] sm:$0xff]
      %v229 = vld [vmem:[%s167 + $0x1b0] sm:$0xff]
      %v230 = vld [vmem:[%s167 + $0x1b8] sm:$0xff]
      %v231 = vld [vmem:[%s167 + $0x1c0] sm:$0xff]
      %v232 = vld [vmem:[%s167 + $0x1c8] sm:$0xff]
      %v233 = vld [vmem:[%s167 + $0x1d0] sm:$0xff]
      %v234 = vld [vmem:[%s167 + $0x1d8] sm:$0xff]
      %v235 = vld [vmem:[%s167 + $0x1e0] sm:$0xff]
      %v236 = vld [vmem:[%s167 + $0x1e8] sm:$0xff]
      %v237 = vld [vmem:[%s167 + $0x1f0] sm:$0xff]
      %v238 = vld [vmem:[%s167 + $0x1f8] sm:$0xff]
      %v239 = vld [vmem:[%s1] sm:$0xf]
      %v240 = vld [vmem:[%s1 + $0x4] sm:$0xf]
      %v241 = vld [vmem:[%s1 + $0x8] sm:$0xf]
      %v242 = vld [vmem:[%s1 + $0xc] sm:$0xf]
      %v243 = vld [vmem:[%s1 + $0x10] sm:$0xf]
      %v244 = vld [vmem:[%s1 + $0x14] sm:$0xf]
      %v245 = vld [vmem:[%s1 + $0x18] sm:$0xf]
      %v246 = vld [vmem:[%s1 + $0x1c] sm:$0xf]
      %v247 = vld [vmem:[%s1 + $0x20] sm:$0xf]
      %v248 = vld [vmem:[%s1 + $0x24] sm:$0xf]
      %v249 = vld [vmem:[%s1 + $0x28] sm:$0xf]
      %v250 = vld [vmem:[%s1 + $0x2c] sm:$0xf]
      %v251 = vld [vmem:[%s1 + $0x30] sm:$0xf]
      %v252 = vld [vmem:[%s1 + $0x34] sm:$0xf]
      %v253 = vld [vmem:[%s1 + $0x38] sm:$0xf]
      %v254 = vld [vmem:[%s1 + $0x3c] sm:$0xf]
      %v255 = vld [vmem:[%s1 + $0x40] sm:$0xf]
      %v256 = vld [vmem:[%s1 + $0x44] sm:$0xf]
      %v257 = vld [vmem:[%s1 + $0x48] sm:$0xf]
      %v258 = vld [vmem:[%s1 + $0x4c] sm:$0xf]
      %v259 = vld [vmem:[%s1 + $0x50] sm:$0xf]
      %v260 = vld [vmem:[%s1 + $0x54] sm:$0xf]
      %v261 = vld [vmem:[%s1 + $0x58] sm:$0xf]
      %v262 = vld [vmem:[%s1 + $0x5c] sm:$0xf]
      %v263 = vld [vmem:[%s1 + $0x60] sm:$0xf]
      %v264 = vld [vmem:[%s1 + $0x64] sm:$0xf]
      %v265 = vld [vmem:[%s1 + $0x68] sm:$0xf]
      %v266 = vld [vmem:[%s1 + $0x6c] sm:$0xf]
      %v267 = vld [vmem:[%s1 + $0x70] sm:$0xf]
      %v268 = vld [vmem:[%s1 + $0x74] sm:$0xf]
      %v269 = vld [vmem:[%s1 + $0x78] sm:$0xf]
      %v270 = vld [vmem:[%s1 + $0x7c] sm:$0xf]
      %v335 = vunpack.c.l.b16 %v175
      %v336 = vunpack.c.h.b16 %v175
      %v337 = vunpack.c.l.b16 %v176
      %v338 = vunpack.c.h.b16 %v176
      %v339 = vunpack.c.l.b16 %v177
      %v340 = vunpack.c.h.b16 %v177
      %v341 = vunpack.c.l.b16 %v178
      %v342 = vunpack.c.h.b16 %v178
      %v343 = vunpack.c.l.b16 %v179
      %v344 = vunpack.c.h.b16 %v179
      %v345 = vunpack.c.l.b16 %v180
      %v346 = vunpack.c.h.b16 %v180
      %v347 = vunpack.c.l.b16 %v181
      %v348 = vunpack.c.h.b16 %v181
      %v349 = vunpack.c.l.b16 %v182
      %v350 = vunpack.c.h.b16 %v182
      %v351 = vunpack.c.l.b16 %v183
      %v352 = vunpack.c.h.b16 %v183
      %v353 = vunpack.c.l.b16 %v184
      %v354 = vunpack.c.h.b16 %v184
      %v355 = vunpack.c.l.b16 %v185
      %v356 = vunpack.c.h.b16 %v185
      %v357 = vunpack.c.l.b16 %v186
      %v358 = vunpack.c.h.b16 %v186
      %v359 = vunpack.c.l.b16 %v187
      %v360 = vunpack.c.h.b16 %v187
      %v361 = vunpack.c.l.b16 %v188
      %v362 = vunpack.c.h.b16 %v188
      %v363 = vunpack.c.l.b16 %v189
      %v364 = vunpack.c.h.b16 %v189
      %v365 = vunpack.c.l.b16 %v190
      %v366 = vunpack.c.h.b16 %v190
      %v367 = vunpack.c.l.b16 %v191
      %v368 = vunpack.c.h.b16 %v191
      %v369 = vunpack.c.l.b16 %v192
      %v370 = vunpack.c.h.b16 %v192
      %v371 = vunpack.c.l.b16 %v193
      %v372 = vunpack.c.h.b16 %v193
      %v373 = vunpack.c.l.b16 %v194
      %v374 = vunpack.c.h.b16 %v194
      %v375 = vunpack.c.l.b16 %v195
      %v376 = vunpack.c.h.b16 %v195
      %v377 = vunpack.c.l.b16 %v196
      %v378 = vunpack.c.h.b16 %v196
      %v379 = vunpack.c.l.b16 %v197
      %v380 = vunpack.c.h.b16 %v197
      %v381 = vunpack.c.l.b16 %v198
      %v382 = vunpack.c.h.b16 %v198
      %v383 = vunpack.c.l.b16 %v199
      %v384 = vunpack.c.h.b16 %v199
      %v385 = vunpack.c.l.b16 %v200
      %v386 = vunpack.c.h.b16 %v200
      %v387 = vunpack.c.l.b16 %v201
      %v388 = vunpack.c.h.b16 %v201
      %v389 = vunpack.c.l.b16 %v202
      %v390 = vunpack.c.h.b16 %v202
      %v391 = vunpack.c.l.b16 %v203
      %v392 = vunpack.c.h.b16 %v203
      %v393 = vunpack.c.l.b16 %v204
      %v394 = vunpack.c.h.b16 %v204
      %v395 = vunpack.c.l.b16 %v205
      %v396 = vunpack.c.h.b16 %v205
      %v397 = vunpack.c.l.b16 %v206
      %v398 = vunpack.c.h.b16 %v206
      %v399 = vunpack.c.l.b16 %v207
      %v400 = vunpack.c.h.b16 %v207
      %v401 = vunpack.c.l.b16 %v208
      %v402 = vunpack.c.h.b16 %v208
      %v403 = vunpack.c.l.b16 %v209
      %v404 = vunpack.c.h.b16 %v209
      %v405 = vunpack.c.l.b16 %v210
      %v406 = vunpack.c.h.b16 %v210
      %v407 = vunpack.c.l.b16 %v211
      %v408 = vunpack.c.h.b16 %v211
      %v409 = vunpack.c.l.b16 %v212
      %v410 = vunpack.c.h.b16 %v212
      %v411 = vunpack.c.l.b16 %v213
      %v412 = vunpack.c.h.b16 %v213
      %v413 = vunpack.c.l.b16 %v214
      %v414 = vunpack.c.h.b16 %v214
      %v415 = vunpack.c.l.b16 %v215
      %v416 = vunpack.c.h.b16 %v215
      %v417 = vunpack.c.l.b16 %v216
      %v418 = vunpack.c.h.b16 %v216
      %v419 = vunpack.c.l.b16 %v217
      %v420 = vunpack.c.h.b16 %v217
      %v421 = vunpack.c.l.b16 %v218
      %v422 = vunpack.c.h.b16 %v218
      %v423 = vunpack.c.l.b16 %v219
      %v424 = vunpack.c.h.b16 %v219
      %v425 = vunpack.c.l.b16 %v220
      %v426 = vunpack.c.h.b16 %v220
      %v427 = vunpack.c.l.b16 %v221
      %v428 = vunpack.c.h.b16 %v221
      %v429 = vunpack.c.l.b16 %v222
      %v430 = vunpack.c.h.b16 %v222
      %v431 = vunpack.c.l.b16 %v223
      %v432 = vunpack.c.h.b16 %v223
      %v433 = vunpack.c.l.b16 %v224
      %v434 = vunpack.c.h.b16 %v224
      %v435 = vunpack.c.l.b16 %v225
      %v436 = vunpack.c.h.b16 %v225
      %v437 = vunpack.c.l.b16 %v226
      %v438 = vunpack.c.h.b16 %v226
      %v439 = vunpack.c.l.b16 %v227
      %v440 = vunpack.c.h.b16 %v227
      %v441 = vunpack.c.l.b16 %v228
      %v442 = vunpack.c.h.b16 %v228
      %v443 = vunpack.c.l.b16 %v229
      %v444 = vunpack.c.h.b16 %v229
      %v445 = vunpack.c.l.b16 %v230
      %v446 = vunpack.c.h.b16 %v230
      %v447 = vunpack.c.l.b16 %v231
      %v448 = vunpack.c.h.b16 %v231
      %v449 = vunpack.c.l.b16 %v232
      %v450 = vunpack.c.h.b16 %v232
      %v451 = vunpack.c.l.b16 %v233
      %v452 = vunpack.c.h.b16 %v233
      %v453 = vunpack.c.l.b16 %v234
      %v454 = vunpack.c.h.b16 %v234
      %v455 = vunpack.c.l.b16 %v235
      %v456 = vunpack.c.h.b16 %v235
      %v457 = vunpack.c.l.b16 %v236
      %v458 = vunpack.c.h.b16 %v236
      %v459 = vunpack.c.l.b16 %v237
      %v460 = vunpack.c.h.b16 %v237
      %v461 = vunpack.c.l.b16 %v238
      %v462 = vunpack.c.h.b16 %v238
      %v463 = vpack.c.b16 %v337, %v335
      %v464 = vpack.c.b16 %v338, %v336
      %v465 = vpack.c.b16 %v341, %v339
      %v466 = vpack.c.b16 %v342, %v340
      %v467 = vpack.c.b16 %v345, %v343
      %v468 = vpack.c.b16 %v346, %v344
      %v469 = vpack.c.b16 %v349, %v347
      %v470 = vpack.c.b16 %v350, %v348
      %v471 = vpack.c.b16 %v353, %v351
      %v472 = vpack.c.b16 %v354, %v352
      %v473 = vpack.c.b16 %v357, %v355
      %v474 = vpack.c.b16 %v358, %v356
      %v475 = vpack.c.b16 %v361, %v359
      %v476 = vpack.c.b16 %v362, %v360
      %v477 = vpack.c.b16 %v365, %v363
      %v478 = vpack.c.b16 %v366, %v364
      %v479 = vpack.c.b16 %v369, %v367
      %v480 = vpack.c.b16 %v370, %v368
      %v481 = vpack.c.b16 %v373, %v371
      %v482 = vpack.c.b16 %v374, %v372
      %v483 = vpack.c.b16 %v377, %v375
      %v484 = vpack.c.b16 %v378, %v376
      %v485 = vpack.c.b16 %v381, %v379
      %v486 = vpack.c.b16 %v382, %v380
      %v487 = vpack.c.b16 %v385, %v383
      %v488 = vpack.c.b16 %v386, %v384
      %v489 = vpack.c.b16 %v389, %v387
      %v490 = vpack.c.b16 %v390, %v388
      %v491 = vpack.c.b16 %v393, %v391
      %v492 = vpack.c.b16 %v394, %v392
      %v493 = vpack.c.b16 %v397, %v395
      %v494 = vpack.c.b16 %v398, %v396
      %v495 = vpack.c.b16 %v401, %v399
      %v496 = vpack.c.b16 %v402, %v400
      %v497 = vpack.c.b16 %v405, %v403
      %v498 = vpack.c.b16 %v406, %v404
      %v499 = vpack.c.b16 %v409, %v407
      %v500 = vpack.c.b16 %v410, %v408
      %v501 = vpack.c.b16 %v413, %v411
      %v502 = vpack.c.b16 %v414, %v412
      %v503 = vpack.c.b16 %v417, %v415
      %v504 = vpack.c.b16 %v418, %v416
      %v505 = vpack.c.b16 %v421, %v419
      %v506 = vpack.c.b16 %v422, %v420
      %v507 = vpack.c.b16 %v425, %v423
      %v508 = vpack.c.b16 %v426, %v424
      %v509 = vpack.c.b16 %v429, %v427
      %v510 = vpack.c.b16 %v430, %v428
      %v511 = vpack.c.b16 %v433, %v431
      %v512 = vpack.c.b16 %v434, %v432
      %v513 = vpack.c.b16 %v437, %v435
      %v514 = vpack.c.b16 %v438, %v436
      %v515 = vpack.c.b16 %v441, %v439
      %v516 = vpack.c.b16 %v442, %v440
      %v517 = vpack.c.b16 %v445, %v443
      %v518 = vpack.c.b16 %v446, %v444
      %v519 = vpack.c.b16 %v449, %v447
      %v520 = vpack.c.b16 %v450, %v448
      %v521 = vpack.c.b16 %v453, %v451
      %v522 = vpack.c.b16 %v454, %v452
      %v523 = vpack.c.b16 %v457, %v455
      %v524 = vpack.c.b16 %v458, %v456
      %v525 = vpack.c.b16 %v461, %v459
      %v526 = vpack.c.b16 %v462, %v460
      %v623 = vunpack.c.l.b16 %v239
      %v624 = vunpack.c.l.b16 %v240
      %v625 = vunpack.c.l.b16 %v241
      %v626 = vunpack.c.l.b16 %v242
      %v627 = vunpack.c.l.b16 %v243
      %v628 = vunpack.c.l.b16 %v244
      %v629 = vunpack.c.l.b16 %v245
      %v630 = vunpack.c.l.b16 %v246
      %v631 = vunpack.c.l.b16 %v247
      %v632 = vunpack.c.l.b16 %v248
      %v633 = vunpack.c.l.b16 %v249
      %v634 = vunpack.c.l.b16 %v250
      %v635 = vunpack.c.l.b16 %v251
      %v636 = vunpack.c.l.b16 %v252
      %v637 = vunpack.c.l.b16 %v253
      %v638 = vunpack.c.l.b16 %v254
      %v639 = vunpack.c.l.b16 %v255
      %v640 = vunpack.c.l.b16 %v256
      %v641 = vunpack.c.l.b16 %v257
      %v642 = vunpack.c.l.b16 %v258
      %v643 = vunpack.c.l.b16 %v259
      %v644 = vunpack.c.l.b16 %v260
      %v645 = vunpack.c.l.b16 %v261
      %v646 = vunpack.c.l.b16 %v262
      %v647 = vunpack.c.l.b16 %v263
      %v648 = vunpack.c.l.b16 %v264
      %v649 = vunpack.c.l.b16 %v265
      %v650 = vunpack.c.l.b16 %v266
      %v651 = vunpack.c.l.b16 %v267
      %v652 = vunpack.c.l.b16 %v268
      %v653 = vunpack.c.l.b16 %v269
      %v654 = vunpack.c.l.b16 %v270
      %v655 = vpack.c.b16 %v624, %v623
      %v656 = vpack.c.b16 %v626, %v625
      %v657 = vpack.c.b16 %v628, %v627
      %v658 = vpack.c.b16 %v630, %v629
      %v659 = vpack.c.b16 %v632, %v631
      %v660 = vpack.c.b16 %v634, %v633
      %v661 = vpack.c.b16 %v636, %v635
      %v662 = vpack.c.b16 %v638, %v637
      %v663 = vpack.c.b16 %v640, %v639
      %v664 = vpack.c.b16 %v642, %v641
      %v665 = vpack.c.b16 %v644, %v643
      %v666 = vpack.c.b16 %v646, %v645
      %v667 = vpack.c.b16 %v648, %v647
      %v668 = vpack.c.b16 %v650, %v649
      %v669 = vpack.c.b16 %v652, %v651
      %v670 = vpack.c.b16 %v654, %v653
      %687 = vmatpush.bf16.msra.mxu0 %v662
      %688 = vmatpush.bf16.msra.mxu0 %v661
      %689 = vmatpush.bf16.msra.mxu0 %v660
      %690 = vmatpush.bf16.msra.mxu0 %v659
      %691 = vmatpush.bf16.msra.mxu0 %v658
      %692 = vmatpush.bf16.msra.mxu0 %v657
      %693 = vmatpush.bf16.msra.mxu0 %v656
      %694 = vmatpush.bf16.msra.mxu0 %v655
      %695 = vmatmul.bf16.gmra.mxu0 %v463
      %v696 = vpop.f32.mrf.mxu0
      %v697 = vadd.f32 0.0, %v696
      %v698 = vpop.f32.mrf.mxu0
      %v699 = vadd.f32 0.0, %v698
      %700 = vmatmul.bf16.gmra.mxu0 %v465
      %v701 = vpop.f32.mrf.mxu0
      %v702 = vadd.f32 0.0, %v701
      %v703 = vpop.f32.mrf.mxu0
      %v704 = vadd.f32 0.0, %v703
      %705 = vmatmul.bf16.gmra.mxu0 %v467
      %v706 = vpop.f32.mrf.mxu0
      %v707 = vadd.f32 0.0, %v706
      %v708 = vpop.f32.mrf.mxu0
      %v709 = vadd.f32 0.0, %v708
      %710 = vmatmul.bf16.gmra.mxu0 %v469
      %v711 = vpop.f32.mrf.mxu0
      %v712 = vadd.f32 0.0, %v711
      %v713 = vpop.f32.mrf.mxu0
      %v714 = vadd.f32 0.0, %v713
      %715 = vmatmul.bf16.gmra.mxu0 %v471
      %v716 = vpop.f32.mrf.mxu0
      %v717 = vadd.f32 0.0, %v716
      %v718 = vpop.f32.mrf.mxu0
      %v719 = vadd.f32 0.0, %v718
      %720 = vmatmul.bf16.gmra.mxu0 %v473
      %v721 = vpop.f32.mrf.mxu0
      %v722 = vadd.f32 0.0, %v721
      %v723 = vpop.f32.mrf.mxu0
      %v724 = vadd.f32 0.0, %v723
      %725 = vmatmul.bf16.gmra.mxu0 %v475
      %v726 = vpop.f32.mrf.mxu0
      %v727 = vadd.f32 0.0, %v726
      %v728 = vpop.f32.mrf.mxu0
      %v729 = vadd.f32 0.0, %v728
      %730 = vmatmul.bf16.gmra.mxu0 %v477
      %v731 = vpop.f32.mrf.mxu0
      %v732 = vadd.f32 0.0, %v731
      %v733 = vpop.f32.mrf.mxu0
      %v734 = vadd.f32 0.0, %v733
      %735 = vmatmul.bf16.gmra.mxu0 %v479
      %v736 = vpop.f32.mrf.mxu0
      %v737 = vadd.f32 0.0, %v736
      %v738 = vpop.f32.mrf.mxu0
      %v739 = vadd.f32 0.0, %v738
      %740 = vmatmul.bf16.gmra.mxu0 %v481
      %v741 = vpop.f32.mrf.mxu0
      %v742 = vadd.f32 0.0, %v741
      %v743 = vpop.f32.mrf.mxu0
      %v744 = vadd.f32 0.0, %v743
      %745 = vmatmul.bf16.gmra.mxu0 %v483
      %v746 = vpop.f32.mrf.mxu0
      %v747 = vadd.f32 0.0, %v746
      %v748 = vpop.f32.mrf.mxu0
      %v749 = vadd.f32 0.0, %v748
      %750 = vmatmul.bf16.gmra.mxu0 %v485
      %v751 = vpop.f32.mrf.mxu0
      %v752 = vadd.f32 0.0, %v751
      %v753 = vpop.f32.mrf.mxu0
      %v754 = vadd.f32 0.0, %v753
      %755 = vmatmul.bf16.gmra.mxu0 %v487
      %v756 = vpop.f32.mrf.mxu0
      %v757 = vadd.f32 0.0, %v756
      %v758 = vpop.f32.mrf.mxu0
      %v759 = vadd.f32 0.0, %v758
      %760 = vmatmul.bf16.gmra.mxu0 %v489
      %v761 = vpop.f32.mrf.mxu0
      %v762 = vadd.f32 0.0, %v761
      %v763 = vpop.f32.mrf.mxu0
      %v764 = vadd.f32 0.0, %v763
      %765 = vmatmul.bf16.gmra.mxu0 %v491
      %v766 = vpop.f32.mrf.mxu0
      %v767 = vadd.f32 0.0, %v766
      %v768 = vpop.f32.mrf.mxu0
      %v769 = vadd.f32 0.0, %v768
      %770 = vmatmul.bf16.gmra.mxu0 %v493
      %v771 = vpop.f32.mrf.mxu0
      %v772 = vadd.f32 0.0, %v771
      %v773 = vpop.f32.mrf.mxu0
      %v774 = vadd.f32 0.0, %v773
      %775 = vmatmul.bf16.gmra.mxu0 %v495
      %v776 = vpop.f32.mrf.mxu0
      %v777 = vadd.f32 0.0, %v776
      %v778 = vpop.f32.mrf.mxu0
      %v779 = vadd.f32 0.0, %v778
      %780 = vmatmul.bf16.gmra.mxu0 %v497
      %v781 = vpop.f32.mrf.mxu0
      %v782 = vadd.f32 0.0, %v781
      %v783 = vpop.f32.mrf.mxu0
      %v784 = vadd.f32 0.0, %v783
      %785 = vmatmul.bf16.gmra.mxu0 %v499
      %v786 = vpop.f32.mrf.mxu0
      %v787 = vadd.f32 0.0, %v786
      %v788 = vpop.f32.mrf.mxu0
      %v789 = vadd.f32 0.0, %v788
      %790 = vmatmul.bf16.gmra.mxu0 %v501
      %v791 = vpop.f32.mrf.mxu0
      %v792 = vadd.f32 0.0, %v791
      %v793 = vpop.f32.mrf.mxu0
      %v794 = vadd.f32 0.0, %v793
      %795 = vmatmul.bf16.gmra.mxu0 %v503
      %v796 = vpop.f32.mrf.mxu0
      %v797 = vadd.f32 0.0, %v796
      %v798 = vpop.f32.mrf.mxu0
      %v799 = vadd.f32 0.0, %v798
      %800 = vmatmul.bf16.gmra.mxu0 %v505
      %v801 = vpop.f32.mrf.mxu0
      %v802 = vadd.f32 0.0, %v801
      %v803 = vpop.f32.mrf.mxu0
      %v804 = vadd.f32 0.0, %v803
      %805 = vmatmul.bf16.gmra.mxu0 %v507
      %v806 = vpop.f32.mrf.mxu0
      %v807 = vadd.f32 0.0, %v806
      %v808 = vpop.f32.mrf.mxu0
      %v809 = vadd.f32 0.0, %v808
      %810 = vmatmul.bf16.gmra.mxu0 %v509
      %v811 = vpop.f32.mrf.mxu0
      %v812 = vadd.f32 0.0, %v811
      %v813 = vpop.f32.mrf.mxu0
      %v814 = vadd.f32 0.0, %v813
      %815 = vmatmul.bf16.gmra.mxu0 %v511
      %v816 = vpop.f32.mrf.mxu0
      %v817 = vadd.f32 0.0, %v816
      %v818 = vpop.f32.mrf.mxu0
      %v819 = vadd.f32 0.0, %v818
      %820 = vmatmul.bf16.gmra.mxu0 %v513
      %v821 = vpop.f32.mrf.mxu0
      %v822 = vadd.f32 0.0, %v821
      %v823 = vpop.f32.mrf.mxu0
      %v824 = vadd.f32 0.0, %v823
      %825 = vmatmul.bf16.gmra.mxu0 %v515
      %v826 = vpop.f32.mrf.mxu0
      %v827 = vadd.f32 0.0, %v826
      %v828 = vpop.f32.mrf.mxu0
      %v829 = vadd.f32 0.0, %v828
      %830 = vmatmul.bf16.gmra.mxu0 %v517
      %v831 = vpop.f32.mrf.mxu0
      %v832 = vadd.f32 0.0, %v831
      %v833 = vpop.f32.mrf.mxu0
      %v834 = vadd.f32 0.0, %v833
      %835 = vmatmul.bf16.gmra.mxu0 %v519
      %v836 = vpop.f32.mrf.mxu0
      %v837 = vadd.f32 0.0, %v836
      %v838 = vpop.f32.mrf.mxu0
      %v839 = vadd.f32 0.0, %v838
      %840 = vmatmul.bf16.gmra.mxu0 %v521
      %v841 = vpop.f32.mrf.mxu0
      %v842 = vadd.f32 0.0, %v841
      %v843 = vpop.f32.mrf.mxu0
      %v844 = vadd.f32 0.0, %v843
      %845 = vmatmul.bf16.gmra.mxu0 %v523
      %v846 = vpop.f32.mrf.mxu0
      %v847 = vadd.f32 0.0, %v846
      %v848 = vpop.f32.mrf.mxu0
      %v849 = vadd.f32 0.0, %v848
      %850 = vmatmul.bf16.gmra.mxu0 %v525
      %v851 = vpop.f32.mrf.mxu0
      %v852 = vadd.f32 0.0, %v851
      %v853 = vpop.f32.mrf.mxu0
      %v854 = vadd.f32 0.0, %v853
      %855 = vdwg.mxu0
      %856 = vmatpush.bf16.msra.mxu0 %v670
      %857 = vmatpush.bf16.msra.mxu0 %v669
      %858 = vmatpush.bf16.msra.mxu0 %v668
      %859 = vmatpush.bf16.msra.mxu0 %v667
      %860 = vmatpush.bf16.msra.mxu0 %v666
      %861 = vmatpush.bf16.msra.mxu0 %v665
      %862 = vmatpush.bf16.msra.mxu0 %v664
      %863 = vmatpush.bf16.msra.mxu0 %v663
      %864 = vmatmul.bf16.gmra.mxu0 %v464
      %v865 = vpop.f32.mrf.mxu0
      %v866 = vadd.f32 %v697, %v865
      %v867 = vpop.f32.mrf.mxu0
      %v868 = vadd.f32 %v699, %v867
      %869 = vmatmul.bf16.gmra.mxu0 %v466
      %v870 = vpop.f32.mrf.mxu0
      %v871 = vadd.f32 %v702, %v870
      %v872 = vpop.f32.mrf.mxu0
      %v873 = vadd.f32 %v704, %v872
      %874 = vmatmul.bf16.gmra.mxu0 %v468
      %v875 = vpop.f32.mrf.mxu0
      %v876 = vadd.f32 %v707, %v875
      %v877 = vpop.f32.mrf.mxu0
      %v878 = vadd.f32 %v709, %v877
      %879 = vmatmul.bf16.gmra.mxu0 %v470
      %v880 = vpop.f32.mrf.mxu0
      %v881 = vadd.f32 %v712, %v880
      %v882 = vpop.f32.mrf.mxu0
      %v883 = vadd.f32 %v714, %v882
      %884 = vmatmul.bf16.gmra.mxu0 %v472
      %v885 = vpop.f32.mrf.mxu0
      %v886 = vadd.f32 %v717, %v885
      %v887 = vpop.f32.mrf.mxu0
      %v888 = vadd.f32 %v719, %v887
      %889 = vmatmul.bf16.gmra.mxu0 %v474
      %v890 = vpop.f32.mrf.mxu0
      %v891 = vadd.f32 %v722, %v890
      %v892 = vpop.f32.mrf.mxu0
      %v893 = vadd.f32 %v724, %v892
      %894 = vmatmul.bf16.gmra.mxu0 %v476
      %v895 = vpop.f32.mrf.mxu0
      %v896 = vadd.f32 %v727, %v895
      %v897 = vpop.f32.mrf.mxu0
      %v898 = vadd.f32 %v729, %v897
      %899 = vmatmul.bf16.gmra.mxu0 %v478
      %v900 = vpop.f32.mrf.mxu0
      %v901 = vadd.f32 %v732, %v900
      %v902 = vpop.f32.mrf.mxu0
      %v903 = vadd.f32 %v734, %v902
      %904 = vmatmul.bf16.gmra.mxu0 %v480
      %v905 = vpop.f32.mrf.mxu0
      %v906 = vadd.f32 %v737, %v905
      %v907 = vpop.f32.mrf.mxu0
      %v908 = vadd.f32 %v739, %v907
      %909 = vmatmul.bf16.gmra.mxu0 %v482
      %v910 = vpop.f32.mrf.mxu0
      %v911 = vadd.f32 %v742, %v910
      %v912 = vpop.f32.mrf.mxu0
      %v913 = vadd.f32 %v744, %v912
      %914 = vmatmul.bf16.gmra.mxu0 %v484
      %v915 = vpop.f32.mrf.mxu0
      %v916 = vadd.f32 %v747, %v915
      %v917 = vpop.f32.mrf.mxu0
      %v918 = vadd.f32 %v749, %v917
      %919 = vmatmul.bf16.gmra.mxu0 %v486
      %v920 = vpop.f32.mrf.mxu0
      %v921 = vadd.f32 %v752, %v920
      %v922 = vpop.f32.mrf.mxu0
      %v923 = vadd.f32 %v754, %v922
      %924 = vmatmul.bf16.gmra.mxu0 %v488
      %v925 = vpop.f32.mrf.mxu0
      %v926 = vadd.f32 %v757, %v925
      %v927 = vpop.f32.mrf.mxu0
      %v928 = vadd.f32 %v759, %v927
      %929 = vmatmul.bf16.gmra.mxu0 %v490
      %v930 = vpop.f32.mrf.mxu0
      %v931 = vadd.f32 %v762, %v930
      %v932 = vpop.f32.mrf.mxu0
      %v933 = vadd.f32 %v764, %v932
      %934 = vmatmul.bf16.gmra.mxu0 %v492
      %v935 = vpop.f32.mrf.mxu0
      %v936 = vadd.f32 %v767, %v935
      %v937 = vpop.f32.mrf.mxu0
      %v938 = vadd.f32 %v769, %v937
      %939 = vmatmul.bf16.gmra.mxu0 %v494
      %v940 = vpop.f32.mrf.mxu0
      %v941 = vadd.f32 %v772, %v940
      %v942 = vpop.f32.mrf.mxu0
      %v943 = vadd.f32 %v774, %v942
      %944 = vmatmul.bf16.gmra.mxu0 %v496
      %v945 = vpop.f32.mrf.mxu0
      %v946 = vadd.f32 %v777, %v945
      %v947 = vpop.f32.mrf.mxu0
      %v948 = vadd.f32 %v779, %v947
      %949 = vmatmul.bf16.gmra.mxu0 %v498
      %v950 = vpop.f32.mrf.mxu0
      %v951 = vadd.f32 %v782, %v950
      %v952 = vpop.f32.mrf.mxu0
      %v953 = vadd.f32 %v784, %v952
      %954 = vmatmul.bf16.gmra.mxu0 %v500
      %v955 = vpop.f32.mrf.mxu0
      %v956 = vadd.f32 %v787, %v955
      %v957 = vpop.f32.mrf.mxu0
      %v958 = vadd.f32 %v789, %v957
      %959 = vmatmul.bf16.gmra.mxu0 %v502
      %v960 = vpop.f32.mrf.mxu0
      %v961 = vadd.f32 %v792, %v960
      %v962 = vpop.f32.mrf.mxu0
      %v963 = vadd.f32 %v794, %v962
      %964 = vmatmul.bf16.gmra.mxu0 %v504
      %v965 = vpop.f32.mrf.mxu0
      %v966 = vadd.f32 %v797, %v965
      %v967 = vpop.f32.mrf.mxu0
      %v968 = vadd.f32 %v799, %v967
      %969 = vmatmul.bf16.gmra.mxu0 %v506
      %v970 = vpop.f32.mrf.mxu0
      %v971 = vadd.f32 %v802, %v970
      %v972 = vpop.f32.mrf.mxu0
      %v973 = vadd.f32 %v804, %v972
      %974 = vmatmul.bf16.gmra.mxu0 %v508
      %v975 = vpop.f32.mrf.mxu0
      %v976 = vadd.f32 %v807, %v975
      %v977 = vpop.f32.mrf.mxu0
      %v978 = vadd.f32 %v809, %v977
      %979 = vmatmul.bf16.gmra.mxu0 %v510
      %v980 = vpop.f32.mrf.mxu0
      %v981 = vadd.f32 %v812, %v980
      %v982 = vpop.f32.mrf.mxu0
      %v983 = vadd.f32 %v814, %v982
      %984 = vmatmul.bf16.gmra.mxu0 %v512
      %v985 = vpop.f32.mrf.mxu0
      %v986 = vadd.f32 %v817, %v985
      %v987 = vpop.f32.mrf.mxu0
      %v988 = vadd.f32 %v819, %v987
      %989 = vmatmul.bf16.gmra.mxu0 %v514
      %v990 = vpop.f32.mrf.mxu0
      %v991 = vadd.f32 %v822, %v990
      %v992 = vpop.f32.mrf.mxu0
      %v993 = vadd.f32 %v824, %v992
      %994 = vmatmul.bf16.gmra.mxu0 %v516
      %v995 = vpop.f32.mrf.mxu0
      %v996 = vadd.f32 %v827, %v995
      %v997 = vpop.f32.mrf.mxu0
      %v998 = vadd.f32 %v829, %v997
      %999 = vmatmul.bf16.gmra.mxu0 %v518
      %v1000 = vpop.f32.mrf.mxu0
      %v1001 = vadd.f32 %v832, %v1000
      %v1002 = vpop.f32.mrf.mxu0
      %v1003 = vadd.f32 %v834, %v1002
      %1004 = vmatmul.bf16.gmra.mxu0 %v520
      %v1005 = vpop.f32.mrf.mxu0
      %v1006 = vadd.f32 %v837, %v1005
      %v1007 = vpop.f32.mrf.mxu0
      %v1008 = vadd.f32 %v839, %v1007
      %1009 = vmatmul.bf16.gmra.mxu0 %v522
      %v1010 = vpop.f32.mrf.mxu0
      %v1011 = vadd.f32 %v842, %v1010
      %v1012 = vpop.f32.mrf.mxu0
      %v1013 = vadd.f32 %v844, %v1012
      %1014 = vmatmul.bf16.gmra.mxu0 %v524
      %v1015 = vpop.f32.mrf.mxu0
      %v1016 = vadd.f32 %v847, %v1015
      %v1017 = vpop.f32.mrf.mxu0
      %v1018 = vadd.f32 %v849, %v1017
      %1019 = vmatmul.bf16.gmra.mxu0 %v526
      %v1020 = vpop.f32.mrf.mxu0
      %v1021 = vadd.f32 %v852, %v1020
      %v1022 = vpop.f32.mrf.mxu0
      %v1023 = vadd.f32 %v854, %v1022
      %1024 = vdwg.mxu0
      %1025 = vst [vmem:[%s173] sm:$0xff] %v866
      %1026 = vst [vmem:[%s173 + $0x8] sm:$0xff] %v868
      %1027 = vst [vmem:[%s173 + $0x10] sm:$0xff] %v871
      %1028 = vst [vmem:[%s173 + $0x18] sm:$0xff] %v873
      %1029 = vst [vmem:[%s173 + $0x20] sm:$0xff] %v876
      %1030 = vst [vmem:[%s173 + $0x28] sm:$0xff] %v878
      %1031 = vst [vmem:[%s173 + $0x30] sm:$0xff] %v881
      %1032 = vst [vmem:[%s173 + $0x38] sm:$0xff] %v883
      %1033 = vst [vmem:[%s173 + $0x40] sm:$0xff] %v886
      %1034 = vst [vmem:[%s173 + $0x48] sm:$0xff] %v888
      %1035 = vst [vmem:[%s173 + $0x50] sm:$0xff] %v891
      %1036 = vst [vmem:[%s173 + $0x58] sm:$0xff] %v893
      %1037 = vst [vmem:[%s173 + $0x60] sm:$0xff] %v896
      %1038 = vst [vmem:[%s173 + $0x68] sm:$0xff] %v898
      %1039 = vst [vmem:[%s173 + $0x70] sm:$0xff] %v901
      %1040 = vst [vmem:[%s173 + $0x78] sm:$0xff] %v903
      %1041 = vst [vmem:[%s173 + $0x80] sm:$0xff] %v906
      %1042 = vst [vmem:[%s173 + $0x88] sm:$0xff] %v908
      %1043 = vst [vmem:[%s173 + $0x90] sm:$0xff] %v911
      %1044 = vst [vmem:[%s173 + $0x98] sm:$0xff] %v913
      %1045 = vst [vmem:[%s173 + $0xa0] sm:$0xff] %v916
      %1046 = vst [vmem:[%s173 + $0xa8] sm:$0xff] %v918
      %1047 = vst [vmem:[%s173 + $0xb0] sm:$0xff] %v921
      %1048 = vst [vmem:[%s173 + $0xb8] sm:$0xff] %v923
      %1049 = vst [vmem:[%s173 + $0xc0] sm:$0xff] %v926
      %1050 = vst [vmem:[%s173 + $0xc8] sm:$0xff] %v928
      %1051 = vst [vmem:[%s173 + $0xd0] sm:$0xff] %v931
      %1052 = vst [vmem:[%s173 + $0xd8] sm:$0xff] %v933
      %1053 = vst [vmem:[%s173 + $0xe0] sm:$0xff] %v936
      %1054 = vst [vmem:[%s173 + $0xe8] sm:$0xff] %v938
      %1055 = vst [vmem:[%s173 + $0xf0] sm:$0xff] %v941
      %1056 = vst [vmem:[%s173 + $0xf8] sm:$0xff] %v943
      %1057 = vst [vmem:[%s173 + $0x100] sm:$0xff] %v946
      %1058 = vst [vmem:[%s173 + $0x108] sm:$0xff] %v948
      %1059 = vst [vmem:[%s173 + $0x110] sm:$0xff] %v951
      %1060 = vst [vmem:[%s173 + $0x118] sm:$0xff] %v953
      %1061 = vst [vmem:[%s173 + $0x120] sm:$0xff] %v956
      %1062 = vst [vmem:[%s173 + $0x128] sm:$0xff] %v958
      %1063 = vst [vmem:[%s173 + $0x130] sm:$0xff] %v961
      %1064 = vst [vmem:[%s173 + $0x138] sm:$0xff] %v963
      %1065 = vst [vmem:[%s173 + $0x140] sm:$0xff] %v966
      %1066 = vst [vmem:[%s173 + $0x148] sm:$0xff] %v968
      %1067 = vst [vmem:[%s173 + $0x150] sm:$0xff] %v971
      %1068 = vst [vmem:[%s173 + $0x158] sm:$0xff] %v973
      %1069 = vst [vmem:[%s173 + $0x160] sm:$0xff] %v976
      %1070 = vst [vmem:[%s173 + $0x168] sm:$0xff] %v978
      %1071 = vst [vmem:[%s173 + $0x170] sm:$0xff] %v981
      %1072 = vst [vmem:[%s173 + $0x178] sm:$0xff] %v983
      %1073 = vst [vmem:[%s173 + $0x180] sm:$0xff] %v986
      %1074 = vst [vmem:[%s173 + $0x188] sm:$0xff] %v988
      %1075 = vst [vmem:[%s173 + $0x190] sm:$0xff] %v991
      %1076 = vst [vmem:[%s173 + $0x198] sm:$0xff] %v993
      %1077 = vst [vmem:[%s173 + $0x1a0] sm:$0xff] %v996
      %1078 = vst [vmem:[%s173 + $0x1a8] sm:$0xff] %v998
      %1079 = vst [vmem:[%s173 + $0x1b0] sm:$0xff] %v1001
      %1080 = vst [vmem:[%s173 + $0x1b8] sm:$0xff] %v1003
      %1081 = vst [vmem:[%s173 + $0x1c0] sm:$0xff] %v1006
      %1082 = vst [vmem:[%s173 + $0x1c8] sm:$0xff] %v1008
      %1083 = vst [vmem:[%s173 + $0x1d0] sm:$0xff] %v1011
      %1084 = vst [vmem:[%s173 + $0x1d8] sm:$0xff] %v1013
      %1085 = vst [vmem:[%s173 + $0x1e0] sm:$0xff] %v1016
      %1086 = vst [vmem:[%s173 + $0x1e8] sm:$0xff] %v1018
      %1087 = vst [vmem:[%s173 + $0x1f0] sm:$0xff] %v1021
      %1088 = vst [vmem:[%s173 + $0x1f8] sm:$0xff] %v1023
      %p1089 = scmp.eq.s32.totalorder %s15, 0
      // Predicated region
      $region29: #{down_forward.8} parent=27 // pred_check
        %p1090 = pneg %p1089
      $region30: #{down_forward.8} parent=27 // pred_check_branch
        %1092 = sbr.rel (%p1090) target = $region32
      $region31: #{down_forward.8} parent=27 // pred_region
        %1093 = vst [vmem:[%s3] sm:$0x3] 0.0
      $region32: #{down_forward.8} parent=27 // pred_fallthru
        _
      %v1094 = vld [vmem:[%s3] sm:$0x3]
      %v1095 = vadd.f32 %v866, %v868
      %v1096 = vadd.f32 %v1095, %v871
      %v1097 = vadd.f32 %v1096, %v873
      %v1098 = vadd.f32 %v1097, %v876
      %v1099 = vadd.f32 %v1098, %v878
      %v1100 = vadd.f32 %v1099, %v881
      %v1101 = vadd.f32 %v1100, %v883
      %v1102 = vadd.f32 %v1101, %v886
      %v1103 = vadd.f32 %v1102, %v888
      %v1104 = vadd.f32 %v1103, %v891
      %v1105 = vadd.f32 %v1104, %v893
      %v1106 = vadd.f32 %v1105, %v896
      %v1107 = vadd.f32 %v1106, %v898
      %v1108 = vadd.f32 %v1107, %v901
      %v1109 = vadd.f32 %v1108, %v903
      %v1110 = vadd.f32 %v1109, %v906
      %v1111 = vadd.f32 %v1110, %v908
      %v1112 = vadd.f32 %v1111, %v911
      %v1113 = vadd.f32 %v1112, %v913
      %v1114 = vadd.f32 %v1113, %v916
      %v1115 = vadd.f32 %v1114, %v918
      %v1116 = vadd.f32 %v1115, %v921
      %v1117 = vadd.f32 %v1116, %v923
      %v1118 = vadd.f32 %v1117, %v926
      %v1119 = vadd.f32 %v1118, %v928
      %v1120 = vadd.f32 %v1119, %v931
      %v1121 = vadd.f32 %v1120, %v933
      %v1122 = vadd.f32 %v1121, %v936
      %v1123 = vadd.f32 %v1122, %v938
      %v1124 = vadd.f32 %v1123, %v941
      %v1125 = vadd.f32 %v1124, %v943
      %v1126 = vadd.f32 %v1125, %v946
      %v1127 = vadd.f32 %v1126, %v948
      %v1128 = vadd.f32 %v1127, %v951
      %v1129 = vadd.f32 %v1128, %v953
      %v1130 = vadd.f32 %v1129, %v956
      %v1131 = vadd.f32 %v1130, %v958
      %v1132 = vadd.f32 %v1131, %v961
      %v1133 = vadd.f32 %v1132, %v963
      %v1134 = vadd.f32 %v1133, %v966
      %v1135 = vadd.f32 %v1134, %v968
      %v1136 = vadd.f32 %v1135, %v971
      %v1137 = vadd.f32 %v1136, %v973
      %v1138 = vadd.f32 %v1137, %v976
      %v1139 = vadd.f32 %v1138, %v978
      %v1140 = vadd.f32 %v1139, %v981
      %v1141 = vadd.f32 %v1140, %v983
      %v1142 = vadd.f32 %v1141, %v986
      %v1143 = vadd.f32 %v1142, %v988
      %v1144 = vadd.f32 %v1143, %v991
      %v1145 = vadd.f32 %v1144, %v993
      %v1146 = vadd.f32 %v1145, %v996
      %v1147 = vadd.f32 %v1146, %v998
      %v1148 = vadd.f32 %v1147, %v1001
      %v1149 = vadd.f32 %v1148, %v1003
      %v1150 = vadd.f32 %v1149, %v1006
      %v1151 = vadd.f32 %v1150, %v1008
      %v1152 = vadd.f32 %v1151, %v1011
      %v1153 = vadd.f32 %v1152, %v1013
      %v1154 = vadd.f32 %v1153, %v1016
      %v1155 = vadd.f32 %v1154, %v1018
      %v1156 = vadd.f32 %v1155, %v1021
      %v1157 = vadd.f32 %v1156, %v1023
      %v1158 = vrot.slane %v1157, 4
      %v1159 = vadd.f32 %v1157, %v1158
      %v1160 = vrot.slane %v1159, 2
      %v1161 = vadd.f32 %v1159, %v1160
      %v1162 = vrot.slane %v1161, 1
      %v1163 = vadd.f32 %v1161, %v1162
      %v1164 = vmul.f32 %v866, %v866
      %v1165 = vmul.f32 %v868, %v868
      %v1166 = vmul.f32 %v871, %v871
      %v1167 = vmul.f32 %v873, %v873
      %v1168 = vmul.f32 %v876, %v876
      %v1169 = vmul.f32 %v878, %v878
      %v1170 = vmul.f32 %v881, %v881
      %v1171 = vmul.f32 %v883, %v883
      %v1172 = vmul.f32 %v886, %v886
      %v1173 = vmul.f32 %v888, %v888
      %v1174 = vmul.f32 %v891, %v891
      %v1175 = vmul.f32 %v893, %v893
      %v1176 = vmul.f32 %v896, %v896
      %v1177 = vmul.f32 %v898, %v898
      %v1178 = vmul.f32 %v901, %v901
      %v1179 = vmul.f32 %v903, %v903
      %v1180 = vmul.f32 %v906, %v906
      %v1181 = vmul.f32 %v908, %v908
      %v1182 = vmul.f32 %v911, %v911
      %v1183 = vmul.f32 %v913, %v913
      %v1184 = vmul.f32 %v916, %v916
      %v1185 = vmul.f32 %v918, %v918
      %v1186 = vmul.f32 %v921, %v921
      %v1187 = vmul.f32 %v923, %v923
      %v1188 = vmul.f32 %v926, %v926
      %v1189 = vmul.f32 %v928, %v928
      %v1190 = vmul.f32 %v931, %v931
      %v1191 = vmul.f32 %v933, %v933
      %v1192 = vmul.f32 %v936, %v936
      %v1193 = vmul.f32 %v938, %v938
      %v1194 = vmul.f32 %v941, %v941
      %v1195 = vmul.f32 %v943, %v943
      %v1196 = vmul.f32 %v946, %v946
      %v1197 = vmul.f32 %v948, %v948
      %v1198 = vmul.f32 %v951, %v951
      %v1199 = vmul.f32 %v953, %v953
      %v1200 = vmul.f32 %v956, %v956
      %v1201 = vmul.f32 %v958, %v958
      %v1202 = vmul.f32 %v961, %v961
      %v1203 = vmul.f32 %v963, %v963
      %v1204 = vmul.f32 %v966, %v966
      %v1205 = vmul.f32 %v968, %v968
      %v1206 = vmul.f32 %v971, %v971
      %v1207 = vmul.f32 %v973, %v973
      %v1208 = vmul.f32 %v976, %v976
      %v1209 = vmul.f32 %v978, %v978
      %v1210 = vmul.f32 %v981, %v981
      %v1211 = vmul.f32 %v983, %v983
      %v1212 = vmul.f32 %v986, %v986
      %v1213 = vmul.f32 %v988, %v988
      %v1214 = vmul.f32 %v991, %v991
      %v1215 = vmul.f32 %v993, %v993
      %v1216 = vmul.f32 %v996, %v996
      %v1217 = vmul.f32 %v998, %v998
      %v1218 = vmul.f32 %v1001, %v1001
      %v1219 = vmul.f32 %v1003, %v1003
      %v1220 = vmul.f32 %v1006, %v1006
      %v1221 = vmul.f32 %v1008, %v1008
      %v1222 = vmul.f32 %v1011, %v1011
      %v1223 = vmul.f32 %v1013, %v1013
      %v1224 = vmul.f32 %v1016, %v1016
      %v1225 = vmul.f32 %v1018, %v1018
      %v1226 = vmul.f32 %v1021, %v1021
      %v1227 = vmul.f32 %v1023, %v1023
      %v1228 = vadd.f32 %v1164, %v1165
      %v1229 = vadd.f32 %v1228, %v1166
      %v1230 = vadd.f32 %v1229, %v1167
      %v1231 = vadd.f32 %v1230, %v1168
      %v1232 = vadd.f32 %v1231, %v1169
      %v1233 = vadd.f32 %v1232, %v1170
      %v1234 = vadd.f32 %v1233, %v1171
      %v1235 = vadd.f32 %v1234, %v1172
      %v1236 = vadd.f32 %v1235, %v1173
      %v1237 = vadd.f32 %v1236, %v1174
      %v1238 = vadd.f32 %v1237, %v1175
      %v1239 = vadd.f32 %v1238, %v1176
      %v1240 = vadd.f32 %v1239, %v1177
      %v1241 = vadd.f32 %v1240, %v1178
      %v1242 = vadd.f32 %v1241, %v1179
      %v1243 = vadd.f32 %v1242, %v1180
      %v1244 = vadd.f32 %v1243, %v1181
      %v1245 = vadd.f32 %v1244, %v1182
      %v1246 = vadd.f32 %v1245, %v1183
      %v1247 = vadd.f32 %v1246, %v1184
      %v1248 = vadd.f32 %v1247, %v1185
      %v1249 = vadd.f32 %v1248, %v1186
      %v1250 = vadd.f32 %v1249, %v1187
      %v1251 = vadd.f32 %v1250, %v1188
      %v1252 = vadd.f32 %v1251, %v1189
      %v1253 = vadd.f32 %v1252, %v1190
      %v1254 = vadd.f32 %v1253, %v1191
      %v1255 = vadd.f32 %v1254, %v1192
      %v1256 = vadd.f32 %v1255, %v1193
      %v1257 = vadd.f32 %v1256, %v1194
      %v1258 = vadd.f32 %v1257, %v1195
      %v1259 = vadd.f32 %v1258, %v1196
      %v1260 = vadd.f32 %v1259, %v1197
      %v1261 = vadd.f32 %v1260, %v1198
      %v1262 = vadd.f32 %v1261, %v1199
      %v1263 = vadd.f32 %v1262, %v1200
      %v1264 = vadd.f32 %v1263, %v1201
      %v1265 = vadd.f32 %v1264, %v1202
      %v1266 = vadd.f32 %v1265, %v1203
      %v1267 = vadd.f32 %v1266, %v1204
      %v1268 = vadd.f32 %v1267, %v1205
      %v1269 = vadd.f32 %v1268, %v1206
      %v1270 = vadd.f32 %v1269, %v1207
      %v1271 = vadd.f32 %v1270, %v1208
      %v1272 = vadd.f32 %v1271, %v1209
      %v1273 = vadd.f32 %v1272, %v1210
      %v1274 = vadd.f32 %v1273, %v1211
      %v1275 = vadd.f32 %v1274, %v1212
      %v1276 = vadd.f32 %v1275, %v1213
      %v1277 = vadd.f32 %v1276, %v1214
      %v1278 = vadd.f32 %v1277, %v1215
      %v1279 = vadd.f32 %v1278, %v1216
      %v1280 = vadd.f32 %v1279, %v1217
      %v1281 = vadd.f32 %v1280, %v1218
      %v1282 = vadd.f32 %v1281, %v1219
      %v1283 = vadd.f32 %v1282, %v1220
      %v1284 = vadd.f32 %v1283, %v1221
      %v1285 = vadd.f32 %v1284, %v1222
      %v1286 = vadd.f32 %v1285, %v1223
      %v1287 = vadd.f32 %v1286, %v1224
      %v1288 = vadd.f32 %v1287, %v1225
      %v1289 = vadd.f32 %v1288, %v1226
      %v1290 = vadd.f32 %v1289, %v1227
      %v1291 = vrot.slane %v1290, 4
      %v1292 = vadd.f32 %v1290, %v1291
      %v1293 = vrot.slane %v1292, 2
      %v1294 = vadd.f32 %v1292, %v1293
      %v1295 = vrot.slane %v1294, 1
      %v1296 = vadd.f32 %v1294, %v1295
      %vm1297 = vcmask 1040384
      %v1298 = vsel %vm1297, %v1163, %v1296
      %v1299 = vadd.f32 %v1094, %v1298
      %1300 = vst [vmem:[%s3] sm:$0x3] %v1299
      %s1301 = smul.u32 64, %s15
      %p1302 = scmp.lt.s32.totalorder %s1301, 127
      %s1303 = scalar_select %p1302, %s1301, 127
      %s1304 = smul.addr %s1303, 8
      %s1305 = scalar_lea.vmem %s2, %s1304
      // Predicated region
      $region33: #{down_forward.8} parent=27 // pred_check
        %p1306 = pneg %p80
      $region34: #{down_forward.8} parent=27 // pred_check_branch
        %1308 = sbr.rel (%p1306) target = $region36
      $region35: #{down_forward.8} parent=27 // pred_region
        %s1309 = smul.u32 64, %s15
      $region36: #{down_forward.8} parent=27 // pred_fallthru
        _
      // Predicated region
      $region37: #{down_forward.8} parent=27 // pred_check
        %p1310 = pneg %p101
      $region38: #{down_forward.8} parent=27 // pred_check_branch
        %1312 = sbr.rel (%p1310) target = $region40
      $region39: #{down_forward.8} parent=27 // pred_region
        _
      $region40: #{down_forward.8} parent=27 // pred_fallthru
        _
      // Predicated region
      $region41: #{down_forward.8} parent=27 // pred_check
        %p1313 = pneg %p101
      $region42: #{down_forward.8} parent=27 // pred_check_branch
        %1315 = sbr.rel (%p1313) target = $region44
      $region43: #{down_forward.8} parent=27 // pred_region
        _
      $region44: #{down_forward.8} parent=27 // pred_fallthru
        _
    $region28: #{down_forward.8} parent=5 // pred_fallthru
      _
    %p1316 = scmp.le.s32.totalorder 2, %s10
    // Predicated region
    $region45: #{down_forward.8} parent=5 // pred_check
      %p1317 = pneg %p1316
    $region46: #{down_forward.8} parent=5 // pred_check_branch
      %1319 = sbr.rel (%p1317) target = $region48
    $region47: #{down_forward.8} parent=5 // pred_region
      %s1320 = ssub.s32 %s10, 2
      // Predicated region
      $region49: #{down_forward.8} parent=47 // pred_check
        %p1321 = pneg %p86
      $region50: #{down_forward.8} parent=47 // pred_check_branch
        %1323 = sbr.rel (%p1321) target = $region52
      $region51: #{down_forward.8} parent=47 // pred_region
        %s1324 = smul.u32 64, %s16
        %p1325 = scmp.lt.s32.totalorder %s1324, 127
        %s1326 = scalar_select %p1325, %s1324, 127
        %s1327 = smul.addr %s1326, 8
        %s1328 = scalar_lea.vmem %s2, %s1327
      $region52: #{down_forward.8} parent=47 // pred_fallthru
        _
    $region48: #{down_forward.8} parent=5 // pred_fallthru
      _
  $region6: #{down_forward.8} parent=0 // loop_footer
    %s14 = sadd.s32 1, %s10
  $region7: #{down_forward.8} parent=0 // loop_footer_branch
    %9 = sbr.rel target = $region3
  $region8: #{down_forward.8} parent=0 // loop_exit
    _

// kernel: down_forward.9
$region0: #{down_forward.9}
  #allocation0 [shape = 'u32[]', space=smem, size = 0x4, offset = 0x4, fixed_abs, tag = 'smem constant byte address 0x4 - core index']
  #allocation1 [shape = 'u32[72,128]{1,0:T(1,128)}', space=vmem, size = 0x9000, scoped, tag = 'internal scratch']
  %s0 = inlined_call_operand.vmem [shape: f32[1024,128], index: 0, kind: input, shape index: {}]
  %s1 = inlined_call_operand.vmem [shape: f32[2,128], index: 1, kind: input, shape index: {}]
  %s2 = inlined_call_operand.vmem [shape: f32[1,128], index: 2, kind: input, shape index: {}]
  %s3 = inlined_call_operand.vmem [shape: f32[1,128], index: 3, kind: input, shape index: {}]
  %s4 = inlined_call_operand.vmem [shape: f32[1024,128], index: 4, kind: output, shape index: {}]
  %s5 = sld [smem:[#allocation0]]
  $region49: #{down_forward.9} parent=0
    _
  %s7 = ssub.s32 1, %s5
  %s8 = scalar_select 0, %s7, %s5
  loop: start=0, step=1, limit=4
  $region2: #{down_forward.9} parent=0 // loop_pre_header
    _
  $region3: #{down_forward.9} parent=0 // loop_header
    %s10 = sphi 0, %s14
    %p11 = scmp.ge.s32.totalorder %s10, 4
    %s20 = sphi 0, %s22
    %s23 = sphi 0, %s20
    %s24 = sphi 0, %s23
    %s40 = sphi 0, %s24
    %s44 = sphi 0, %s44
    %s46 = sphi 0, %s44
    %s47 = sphi 0, %s46
    %s61 = sphi 0, %s47
    %s65 = sphi 0, %s65
    %s67 = sphi 0, %s65
    %s68 = sphi 0, %s67
    %s82 = sphi 0, %s68
    %s86 = sphi 0, %s86
    %s88 = sphi 0, %s86
    %s89 = sphi 0, %s88
    %s103 = sphi 0, %s89
    %s109 = sphi 0, %s111
    %s112 = sphi 0, %s109
    %s113 = sphi 0, %s112
    %s129 = sphi 0, %s113
  $region4: #{down_forward.9} parent=0 // loop_header_branch
    %13 = sbr.rel (%p11) target = $region8
  $region5: #{down_forward.9} parent=0 // loop_body
    %s15 = ssub.s32 %s10, 1
    %s16 = ssub.s32 %s10, 2
    %s17 = sadd.s32 %s10, 1
    %s18 = ssub.s32 %s10, %s17
    %p19 = scmp.eq.s32.totalorder %s18, 0
    %s21 = sadd.s32 %s20, 1
    %s22 = scalar_select %p19, %s20, %s21
    %p25 = pneg %p19
    %p26 = scmp.eq.s32.totalorder %s10, 1
    %p27 = por %p25, %p26
    %p28 = scmp.ne.s32.totalorder %s20, %s23
    %p29 = scmp.eq.s32.totalorder %s10, 0
    %p30 = por %p28, %p29
    %p31 = scmp.ne.s32.totalorder %s20, %s23
    %p32 = scmp.eq.s32.totalorder %s15, 1
    %p33 = por %p31, %p32
    %p34 = scmp.ne.s32.totalorder %s23, %s24
    %p35 = scmp.eq.s32.totalorder %s15, 0
    %p36 = por %p34, %p35
    %p37 = scmp.ne.s32.totalorder %s23, %s24
    %p38 = scmp.eq.s32.totalorder %s16, 1
    %p39 = por %p37, %p38
    %p41 = scmp.ne.s32.totalorder %s24, %s40
    %p42 = scmp.eq.s32.totalorder %s16, 0
    %p43 = por %p41, %p42
    %s45 = sadd.s32 %s44, 1
    %p48 = scmp.eq.s32.totalorder %s10, 1
    %p49 = scmp.ne.s32.totalorder %s44, %s46
    %p50 = scmp.eq.s32.totalorder %s10, 0
    %p51 = por %p49, %p50
    %p52 = scmp.ne.s32.totalorder %s44, %s46
    %p53 = scmp.eq.s32.totalorder %s15, 1
    %p54 = por %p52, %p53
    %p55 = scmp.ne.s32.totalorder %s46, %s47
    %p56 = scmp.eq.s32.totalorder %s15, 0
    %p57 = por %p55, %p56
    %p58 = scmp.ne.s32.totalorder %s46, %s47
    %p59 = scmp.eq.s32.totalorder %s16, 1
    %p60 = por %p58, %p59
    %p62 = scmp.ne.s32.totalorder %s47, %s61
    %p63 = scmp.eq.s32.totalorder %s16, 0
    %p64 = por %p62, %p63
    %s66 = sadd.s32 %s65, 1
    %p69 = scmp.eq.s32.totalorder %s10, 1
    %p70 = scmp.ne.s32.totalorder %s65, %s67
    %p71 = scmp.eq.s32.totalorder %s10, 0
    %p72 = por %p70, %p71
    %p73 = scmp.ne.s32.totalorder %s65, %s67
    %p74 = scmp.eq.s32.totalorder %s15, 1
    %p75 = por %p73, %p74
    %p76 = scmp.ne.s32.totalorder %s67, %s68
    %p77 = scmp.eq.s32.totalorder %s15, 0
    %p78 = por %p76, %p77
    %p79 = scmp.ne.s32.totalorder %s67, %s68
    %p80 = scmp.eq.s32.totalorder %s16, 1
    %p81 = por %p79, %p80
    %p83 = scmp.ne.s32.totalorder %s68, %s82
    %p84 = scmp.eq.s32.totalorder %s16, 0
    %p85 = por %p83, %p84
    %s87 = sadd.s32 %s86, 1
    %p90 = scmp.eq.s32.totalorder %s10, 1
    %p91 = scmp.ne.s32.totalorder %s86, %s88
    %p92 = scmp.eq.s32.totalorder %s10, 0
    %p93 = por %p91, %p92
    %p94 = scmp.ne.s32.totalorder %s86, %s88
    %p95 = scmp.eq.s32.totalorder %s15, 1
    %p96 = por %p94, %p95
    %p97 = scmp.ne.s32.totalorder %s88, %s89
    %p98 = scmp.eq.s32.totalorder %s15, 0
    %p99 = por %p97, %p98
    %p100 = scmp.ne.s32.totalorder %s88, %s89
    %p101 = scmp.eq.s32.totalorder %s16, 1
    %p102 = por %p100, %p101
    %p104 = scmp.ne.s32.totalorder %s89, %s103
    %p105 = scmp.eq.s32.totalorder %s16, 0
    %p106 = por %p104, %p105
    %s107 = ssub.s32 %s10, %s17
    %p108 = scmp.eq.s32.totalorder %s107, 0
    %s110 = sadd.s32 %s109, 1
    %s111 = scalar_select %p108, %s109, %s110
    %p114 = pneg %p108
    %p115 = scmp.eq.s32.totalorder %s10, 1
    %p116 = por %p114, %p115
    %p117 = scmp.ne.s32.totalorder %s109, %s112
    %p118 = scmp.eq.s32.totalorder %s10, 0
    %p119 = por %p117, %p118
    %p120 = scmp.ne.s32.totalorder %s109, %s112
    %p121 = scmp.eq.s32.totalorder %s15, 1
    %p122 = por %p120, %p121
    %p123 = scmp.ne.s32.totalorder %s112, %s113
    %p124 = scmp.eq.s32.totalorder %s15, 0
    %p125 = por %p123, %p124
    %p126 = scmp.ne.s32.totalorder %s112, %s113
    %p127 = scmp.eq.s32.totalorder %s16, 1
    %p128 = por %p126, %p127
    %p130 = scmp.ne.s32.totalorder %s113, %s129
    %p131 = scmp.eq.s32.totalorder %s16, 0
    %p132 = por %p130, %p131
    %p133 = scmp.le.s32.totalorder 1, %s10
    %p134 = scmp.lt.s32.totalorder %s10, 3
    %p135 = pnand %p133, %p134
    %p136 = pneg %p135
    // Predicated region
    $region9: #{down_forward.9} parent=5 // pred_check
      _
    $region10: #{down_forward.9} parent=5 // pred_check_branch
      %138 = sbr.rel (%p135) target = $region12
    $region11: #{down_forward.9} parent=5 // pred_region
      %s139 = ssub.s32 %s10, 1
      // Predicated region
      $region13: #{down_forward.9} parent=11 // pred_check
        %p140 = pneg %p57
      $region14: #{down_forward.9} parent=11 // pred_check_branch
        %142 = sbr.rel (%p140) target = $region16
      $region15: #{down_forward.9} parent=11 // pred_region
        _
      $region16: #{down_forward.9} parent=11 // pred_fallthru
        _
      // Predicated region
      $region17: #{down_forward.9} parent=11 // pred_check
        %p143 = pneg %p78
      $region18: #{down_forward.9} parent=11 // pred_check_branch
        %145 = sbr.rel (%p143) target = $region20
      $region19: #{down_forward.9} parent=11 // pred_region
        _
      $region20: #{down_forward.9} parent=11 // pred_fallthru
        _
      // Predicated region
      $region21: #{down_forward.9} parent=11 // pred_check
        %p146 = pneg %p99
      $region22: #{down_forward.9} parent=11 // pred_check_branch
        %148 = sbr.rel (%p146) target = $region24
      $region23: #{down_forward.9} parent=11 // pred_region
        _
      $region24: #{down_forward.9} parent=11 // pred_fallthru
        _
    $region12: #{down_forward.9} parent=5 // pred_fallthru
      _
    %p149 = scmp.lt.s32.totalorder %s10, 2
    // Predicated region
    $region25: #{down_forward.9} parent=5 // pred_check
      %p150 = pneg %p149
    $region26: #{down_forward.9} parent=5 // pred_check_branch
      %152 = sbr.rel (%p150) target = $region28
    $region27: #{down_forward.9} parent=5 // pred_region
      // Predicated region
      $region29: #{down_forward.9} parent=27 // pred_check
        %p153 = pneg %p30
      $region30: #{down_forward.9} parent=27 // pred_check_branch
        %155 = sbr.rel (%p153) target = $region32
      $region31: #{down_forward.9} parent=27 // pred_region
        %s156 = smul.u32 64, %s10
        %p157 = scmp.lt.s32.totalorder %s156, 127
        %s158 = scalar_select %p157, %s156, 127
        %s159 = smul.addr %s158, 8
        %s160 = scalar_lea.vmem %s0, %s159
        %s161 = smul.u32 64, %s10
      $region32: #{down_forward.9} parent=27 // pred_fallthru
        _
    $region28: #{down_forward.9} parent=5 // pred_fallthru
      _
    %p162 = scmp.le.s32.totalorder 1, %s10
    %p163 = scmp.lt.s32.totalorder %s10, 3
    %p164 = pnand %p162, %p163
    %p165 = pneg %p164
    // Predicated region
    $region33: #{down_forward.9} parent=5 // pred_check
      _
    $region34: #{down_forward.9} parent=5 // pred_check_branch
      %167 = sbr.rel (%p164) target = $region36
    $region35: #{down_forward.9} parent=5 // pred_region
      %s168 = ssub.s32 %s10, 1
      %s169 = smul.u32 64, %s15
      %p170 = scmp.lt.s32.totalorder %s169, 127
      %s171 = scalar_select %p170, %s169, 127
      %s172 = smul.addr %s171, 8
      %s173 = scalar_lea.vmem %s0, %s172
      %p174 = pneg %p36
      %p175 = pneg %p33
      %p176 = pneg %p57
      %p177 = pneg %p54
      %p178 = pneg %p78
      %p179 = pneg %p75
      %p180 = pneg %p99
      %p181 = pneg %p96
      %p182 = pneg %p125
      %p183 = pneg %p122
      %s184 = smul.u32 64, %s15
      %p185 = scmp.lt.s32.totalorder %s184, 127
      %s186 = scalar_select %p185, %s184, 127
      %s187 = smul.addr %s186, 8
      %s188 = scalar_lea.vmem %s4, %s187
      %s189 = smul.u32 64, %s15
      %p190 = scmp.lt.s32.totalorder %s189, 127
      %s191 = scalar_select %p190, %s189, 127
      %s192 = smul.addr %s191, 8
      %s193 = scalar_lea.vmem %s0, %s192
      %s194 = smul.u32 64, %s15
      %s195 = smul.u32 64, %s15
      %p196 = scmp.lt.s32.totalorder %s195, 127
      %s197 = scalar_select %p196, %s195, 127
      %s198 = smul.addr %s197, 8
      %s199 = scalar_lea.vmem %s4, %s198
      %s200 = smul.u32 64, %s15
      %v201 = vld [vmem:[%s1] sm:$0x1]
      %v202 = vmul.f32 %v201, 0.0009765625
      %v203 = vld [vmem:[%s1 + $0x1] sm:$0x1]
      %v204 = vmul.f32 %v203, 0.0009765625
      %v205 = vmul.f32 %v202, %v202
      %v206 = vsub.f32 %v204, %v205
      %v207 = vmax.f32 %v206, 0.0
      %v208 = vld [vmem:[%s2] sm:$0x1]
      %v209 = vadd.f32 %v207, 1e-05
      %v210 = vrsqrt.pop %v209
      %v211 = vmul.f32 %v210, %v209
      %v212 = vmul.f32 %v211, %v210
      %v213 = vmul.f32 0.5, %v212
      %v214 = vsub.f32 1.5, %v213
      %v215 = vmul.f32 %v210, %v214
      %vm216 = vweird.f32 %v209
      %vm217 = vweird.f32 %v210
      %vm218 = vmor %vm216, %vm217
      %v219 = vsel %vm218, %v210, %v215
      %v220 = vmul.f32 %v208, %v219
      %v221 = vld [vmem:[%s3] sm:$0x1]
      %v222 = vmul.f32 %v202, %v220
      %v223 = vsub.f32 %v221, %v222
      %v224 = vld [vmem:[%s193] sm:$0xff]
      %v225 = vld [vmem:[%s193 + $0x8] sm:$0xff]
      %v226 = vld [vmem:[%s193 + $0x10] sm:$0xff]
      %v227 = vld [vmem:[%s193 + $0x18] sm:$0xff]
      %v228 = vld [vmem:[%s193 + $0x20] sm:$0xff]
      %v229 = vld [vmem:[%s193 + $0x28] sm:$0xff]
      %v230 = vld [vmem:[%s193 + $0x30] sm:$0xff]
      %v231 = vld [vmem:[%s193 + $0x38] sm:$0xff]
      %v232 = vld [vmem:[%s193 + $0x40] sm:$0xff]
      %v233 = vld [vmem:[%s193 + $0x48] sm:$0xff]
      %v234 = vld [vmem:[%s193 + $0x50] sm:$0xff]
      %v235 = vld [vmem:[%s193 + $0x58] sm:$0xff]
      %v236 = vld [vmem:[%s193 + $0x60] sm:$0xff]
      %v237 = vld [vmem:[%s193 + $0x68] sm:$0xff]
      %v238 = vld [vmem:[%s193 + $0x70] sm:$0xff]
      %v239 = vld [vmem:[%s193 + $0x78] sm:$0xff]
      %v240 = vld [vmem:[%s193 + $0x80] sm:$0xff]
      %v241 = vld [vmem:[%s193 + $0x88] sm:$0xff]
      %v242 = vld [vmem:[%s193 + $0x90] sm:$0xff]
      %v243 = vld [vmem:[%s193 + $0x98] sm:$0xff]
      %v244 = vld [vmem:[%s193 + $0xa0] sm:$0xff]
      %v245 = vld [vmem:[%s193 + $0xa8] sm:$0xff]
      %v246 = vld [vmem:[%s193 + $0xb0] sm:$0xff]
      %v247 = vld [vmem:[%s193 + $0xb8] sm:$0xff]
      %v248 = vld [vmem:[%s193 + $0xc0] sm:$0xff]
      %v249 = vld [vmem:[%s193 + $0xc8] sm:$0xff]
      %v250 = vld [vmem:[%s193 + $0xd0] sm:$0xff]
      %v251 = vld [vmem:[%s193 + $0xd8] sm:$0xff]
      %v252 = vld [vmem:[%s193 + $0xe0] sm:$0xff]
      %v253 = vld [vmem:[%s193 + $0xe8] sm:$0xff]
      %v254 = vld [vmem:[%s193 + $0xf0] sm:$0xff]
      %v255 = vld [vmem:[%s193 + $0xf8] sm:$0xff]
      %v256 = vld [vmem:[%s193 + $0x100] sm:$0xff]
      %v257 = vld [vmem:[%s193 + $0x108] sm:$0xff]
      %v258 = vld [vmem:[%s193 + $0x110] sm:$0xff]
      %v259 = vld [vmem:[%s193 + $0x118] sm:$0xff]
      %v260 = vld [vmem:[%s193 + $0x120] sm:$0xff]
      %v261 = vld [vmem:[%s193 + $0x128] sm:$0xff]
      %v262 = vld [vmem:[%s193 + $0x130] sm:$0xff]
      %v263 = vld [vmem:[%s193 + $0x138] sm:$0xff]
      %v264 = vld [vmem:[%s193 + $0x140] sm:$0xff]
      %v265 = vld [vmem:[%s193 + $0x148] sm:$0xff]
      %v266 = vld [vmem:[%s193 + $0x150] sm:$0xff]
      %v267 = vld [vmem:[%s193 + $0x158] sm:$0xff]
      %v268 = vld [vmem:[%s193 + $0x160] sm:$0xff]
      %v269 = vld [vmem:[%s193 + $0x168] sm:$0xff]
      %v270 = vld [vmem:[%s193 + $0x170] sm:$0xff]
      %v271 = vld [vmem:[%s193 + $0x178] sm:$0xff]
      %v272 = vld [vmem:[%s193 + $0x180] sm:$0xff]
      %v273 = vld [vmem:[%s193 + $0x188] sm:$0xff]
      %v274 = vld [vmem:[%s193 + $0x190] sm:$0xff]
      %v275 = vld [vmem:[%s193 + $0x198] sm:$0xff]
      %v276 = vld [vmem:[%s193 + $0x1a0] sm:$0xff]
      %v277 = vld [vmem:[%s193 + $0x1a8] sm:$0xff]
      %v278 = vld [vmem:[%s193 + $0x1b0] sm:$0xff]
      %v279 = vld [vmem:[%s193 + $0x1b8] sm:$0xff]
      %v280 = vld [vmem:[%s193 + $0x1c0] sm:$0xff]
      %v281 = vld [vmem:[%s193 + $0x1c8] sm:$0xff]
      %v282 = vld [vmem:[%s193 + $0x1d0] sm:$0xff]
      %v283 = vld [vmem:[%s193 + $0x1d8] sm:$0xff]
      %v284 = vld [vmem:[%s193 + $0x1e0] sm:$0xff]
      %v285 = vld [vmem:[%s193 + $0x1e8] sm:$0xff]
      %v286 = vld [vmem:[%s193 + $0x1f0] sm:$0xff]
      %v287 = vld [vmem:[%s193 + $0x1f8] sm:$0xff]
      %v289 = vperm.slane %v220, 0
      %v291 = vmul.f32 %v224, %v289
      %v292 = vmul.f32 %v225, %v289
      %v293 = vmul.f32 %v226, %v289
      %v294 = vmul.f32 %v227, %v289
      %v295 = vmul.f32 %v228, %v289
      %v296 = vmul.f32 %v229, %v289
      %v297 = vmul.f32 %v230, %v289
      %v298 = vmul.f32 %v231, %v289
      %v299 = vmul.f32 %v232, %v289
      %v300 = vmul.f32 %v233, %v289
      %v301 = vmul.f32 %v234, %v289
      %v302 = vmul.f32 %v235, %v289
      %v303 = vmul.f32 %v236, %v289
      %v304 = vmul.f32 %v237, %v289
      %v305 = vmul.f32 %v238, %v289
      %v306 = vmul.f32 %v239, %v289
      %v307 = vmul.f32 %v240, %v289
      %v308 = vmul.f32 %v241, %v289
      %v309 = vmul.f32 %v242, %v289
      %v310 = vmul.f32 %v243, %v289
      %v311 = vmul.f32 %v244, %v289
      %v312 = vmul.f32 %v245, %v289
      %v313 = vmul.f32 %v246, %v289
      %v314 = vmul.f32 %v247, %v289
      %v315 = vmul.f32 %v248, %v289
      %v316 = vmul.f32 %v249, %v289
      %v317 = vmul.f32 %v250, %v289
      %v318 = vmul.f32 %v251, %v289
      %v319 = vmul.f32 %v252, %v289
      %v320 = vmul.f32 %v253, %v289
      %v321 = vmul.f32 %v254, %v289
      %v322 = vmul.f32 %v255, %v289
      %v323 = vmul.f32 %v256, %v289
      %v324 = vmul.f32 %v257, %v289
      %v325 = vmul.f32 %v258, %v289
      %v326 = vmul.f32 %v259, %v289
      %v327 = vmul.f32 %v260, %v289
      %v328 = vmul.f32 %v261, %v289
      %v329 = vmul.f32 %v262, %v289
      %v330 = vmul.f32 %v263, %v289
      %v331 = vmul.f32 %v264, %v289
      %v332 = vmul.f32 %v265, %v289
      %v333 = vmul.f32 %v266, %v289
      %v334 = vmul.f32 %v267, %v289
      %v335 = vmul.f32 %v268, %v289
      %v336 = vmul.f32 %v269, %v289
      %v337 = vmul.f32 %v270, %v289
      %v338 = vmul.f32 %v271, %v289
      %v339 = vmul.f32 %v272, %v289
      %v340 = vmul.f32 %v273, %v289
      %v341 = vmul.f32 %v274, %v289
      %v342 = vmul.f32 %v275, %v289
      %v343 = vmul.f32 %v276, %v289
      %v344 = vmul.f32 %v277, %v289
      %v345 = vmul.f32 %v278, %v289
      %v346 = vmul.f32 %v279, %v289
      %v347 = vmul.f32 %v280, %v289
      %v348 = vmul.f32 %v281, %v289
      %v349 = vmul.f32 %v282, %v289
      %v350 = vmul.f32 %v283, %v289
      %v351 = vmul.f32 %v284, %v289
      %v352 = vmul.f32 %v285, %v289
      %v353 = vmul.f32 %v286, %v289
      %v354 = vmul.f32 %v287, %v289
      %v356 = vperm.slane %v223, 0
      %v358 = vadd.f32 %v291, %v356
      %v359 = vadd.f32 %v292, %v356
      %v360 = vadd.f32 %v293, %v356
      %v361 = vadd.f32 %v294, %v356
      %v362 = vadd.f32 %v295, %v356
      %v363 = vadd.f32 %v296, %v356
      %v364 = vadd.f32 %v297, %v356
      %v365 = vadd.f32 %v298, %v356
      %v366 = vadd.f32 %v299, %v356
      %v367 = vadd.f32 %v300, %v356
      %v368 = vadd.f32 %v301, %v356
      %v369 = vadd.f32 %v302, %v356
      %v370 = vadd.f32 %v303, %v356
      %v371 = vadd.f32 %v304, %v356
      %v372 = vadd.f32 %v305, %v356
      %v373 = vadd.f32 %v306, %v356
      %v374 = vadd.f32 %v307, %v356
      %v375 = vadd.f32 %v308, %v356
      %v376 = vadd.f32 %v309, %v356
      %v377 = vadd.f32 %v310, %v356
      %v378 = vadd.f32 %v311, %v356
      %v379 = vadd.f32 %v312, %v356
      %v380 = vadd.f32 %v313, %v356
      %v381 = vadd.f32 %v314, %v356
      %v382 = vadd.f32 %v315, %v356
      %v383 = vadd.f32 %v316, %v356
      %v384 = vadd.f32 %v317, %v356
      %v385 = vadd.f32 %v318, %v356
      %v386 = vadd.f32 %v319, %v356
      %v387 = vadd.f32 %v320, %v356
      %v388 = vadd.f32 %v321, %v356
      %v389 = vadd.f32 %v322, %v356
      %v390 = vadd.f32 %v323, %v356
      %v391 = vadd.f32 %v324, %v356
      %v392 = vadd.f32 %v325, %v356
      %v393 = vadd.f32 %v326, %v356
      %v394 = vadd.f32 %v327, %v356
      %v395 = vadd.f32 %v328, %v356
      %v396 = vadd.f32 %v329, %v356
      %v397 = vadd.f32 %v330, %v356
      %v398 = vadd.f32 %v331, %v356
      %v399 = vadd.f32 %v332, %v356
      %v400 = vadd.f32 %v333, %v356
      %v401 = vadd.f32 %v334, %v356
      %v402 = vadd.f32 %v335, %v356
      %v403 = vadd.f32 %v336, %v356
      %v404 = vadd.f32 %v337, %v356
      %v405 = vadd.f32 %v338, %v356
      %v406 = vadd.f32 %v339, %v356
      %v407 = vadd.f32 %v340, %v356
      %v408 = vadd.f32 %v341, %v356
      %v409 = vadd.f32 %v342, %v356
      %v410 = vadd.f32 %v343, %v356
      %v411 = vadd.f32 %v344, %v356
      %v412 = vadd.f32 %v345, %v356
      %v413 = vadd.f32 %v346, %v356
      %v414 = vadd.f32 %v347, %v356
      %v415 = vadd.f32 %v348, %v356
      %v416 = vadd.f32 %v349, %v356
      %v417 = vadd.f32 %v350, %v356
      %v418 = vadd.f32 %v351, %v356
      %v419 = vadd.f32 %v352, %v356
      %v420 = vadd.f32 %v353, %v356
      %v421 = vadd.f32 %v354, %v356
      %v422 = vmax.f32 %v358, 0.0
      %v423 = vmax.f32 %v359, 0.0
      %v424 = vmax.f32 %v360, 0.0
      %v425 = vmax.f32 %v361, 0.0
      %v426 = vmax.f32 %v362, 0.0
      %v427 = vmax.f32 %v363, 0.0
      %v428 = vmax.f32 %v364, 0.0
      %v429 = vmax.f32 %v365, 0.0
      %v430 = vmax.f32 %v366, 0.0
      %v431 = vmax.f32 %v367, 0.0
      %v432 = vmax.f32 %v368, 0.0
      %v433 = vmax.f32 %v369, 0.0
      %v434 = vmax.f32 %v370, 0.0
      %v435 = vmax.f32 %v371, 0.0
      %v436 = vmax.f32 %v372, 0.0
      %v437 = vmax.f32 %v373, 0.0
      %v438 = vmax.f32 %v374, 0.0
      %v439 = vmax.f32 %v375, 0.0
      %v440 = vmax.f32 %v376, 0.0
      %v441 = vmax.f32 %v377, 0.0
      %v442 = vmax.f32 %v378, 0.0
      %v443 = vmax.f32 %v379, 0.0
      %v444 = vmax.f32 %v380, 0.0
      %v445 = vmax.f32 %v381, 0.0
      %v446 = vmax.f32 %v382, 0.0
      %v447 = vmax.f32 %v383, 0.0
      %v448 = vmax.f32 %v384, 0.0
      %v449 = vmax.f32 %v385, 0.0
      %v450 = vmax.f32 %v386, 0.0
      %v451 = vmax.f32 %v387, 0.0
      %v452 = vmax.f32 %v388, 0.0
      %v453 = vmax.f32 %v389, 0.0
      %v454 = vmax.f32 %v390, 0.0
      %v455 = vmax.f32 %v391, 0.0
      %v456 = vmax.f32 %v392, 0.0
      %v457 = vmax.f32 %v393, 0.0
      %v458 = vmax.f32 %v394, 0.0
      %v459 = vmax.f32 %v395, 0.0
      %v460 = vmax.f32 %v396, 0.0
      %v461 = vmax.f32 %v397, 0.0
      %v462 = vmax.f32 %v398, 0.0
      %v463 = vmax.f32 %v399, 0.0
      %v464 = vmax.f32 %v400, 0.0
      %v465 = vmax.f32 %v401, 0.0
      %v466 = vmax.f32 %v402, 0.0
      %v467 = vmax.f32 %v403, 0.0
      %v468 = vmax.f32 %v404, 0.0
      %v469 = vmax.f32 %v405, 0.0
      %v470 = vmax.f32 %v406, 0.0
      %v471 = vmax.f32 %v407, 0.0
      %v472 = vmax.f32 %v408, 0.0
      %v473 = vmax.f32 %v409, 0.0
      %v474 = vmax.f32 %v410, 0.0
      %v475 = vmax.f32 %v411, 0.0
      %v476 = vmax.f32 %v412, 0.0
      %v477 = vmax.f32 %v413, 0.0
      %v478 = vmax.f32 %v414, 0.0
      %v479 = vmax.f32 %v415, 0.0
      %v480 = vmax.f32 %v416, 0.0
      %v481 = vmax.f32 %v417, 0.0
      %v482 = vmax.f32 %v418, 0.0
      %v483 = vmax.f32 %v419, 0.0
      %v484 = vmax.f32 %v420, 0.0
      %v485 = vmax.f32 %v421, 0.0
      %486 = vst [vmem:[%s199] sm:$0xff] %v422
      %487 = vst [vmem:[%s199 + $0x8] sm:$0xff] %v423
      %488 = vst [vmem:[%s199 + $0x10] sm:$0xff] %v424
      %489 = vst [vmem:[%s199 + $0x18] sm:$0xff] %v425
      %490 = vst [vmem:[%s199 + $0x20] sm:$0xff] %v426
      %491 = vst [vmem:[%s199 + $0x28] sm:$0xff] %v427
      %492 = vst [vmem:[%s199 + $0x30] sm:$0xff] %v428
      %493 = vst [vmem:[%s199 + $0x38] sm:$0xff] %v429
      %494 = vst [vmem:[%s199 + $0x40] sm:$0xff] %v430
      %495 = vst [vmem:[%s199 + $0x48] sm:$0xff] %v431
      %496 = vst [vmem:[%s199 + $0x50] sm:$0xff] %v432
      %497 = vst [vmem:[%s199 + $0x58] sm:$0xff] %v433
      %498 = vst [vmem:[%s199 + $0x60] sm:$0xff] %v434
      %499 = vst [vmem:[%s199 + $0x68] sm:$0xff] %v435
      %500 = vst [vmem:[%s199 + $0x70] sm:$0xff] %v436
      %501 = vst [vmem:[%s199 + $0x78] sm:$0xff] %v437
      %502 = vst [vmem:[%s199 + $0x80] sm:$0xff] %v438
      %503 = vst [vmem:[%s199 + $0x88] sm:$0xff] %v439
      %504 = vst [vmem:[%s199 + $0x90] sm:$0xff] %v440
      %505 = vst [vmem:[%s199 + $0x98] sm:$0xff] %v441
      %506 = vst [vmem:[%s199 + $0xa0] sm:$0xff] %v442
      %507 = vst [vmem:[%s199 + $0xa8] sm:$0xff] %v443
      %508 = vst [vmem:[%s199 + $0xb0] sm:$0xff] %v444
      %509 = vst [vmem:[%s199 + $0xb8] sm:$0xff] %v445
      %510 = vst [vmem:[%s199 + $0xc0] sm:$0xff] %v446
      %511 = vst [vmem:[%s199 + $0xc8] sm:$0xff] %v447
      %512 = vst [vmem:[%s199 + $0xd0] sm:$0xff] %v448
      %513 = vst [vmem:[%s199 + $0xd8] sm:$0xff] %v449
      %514 = vst [vmem:[%s199 + $0xe0] sm:$0xff] %v450
      %515 = vst [vmem:[%s199 + $0xe8] sm:$0xff] %v451
      %516 = vst [vmem:[%s199 + $0xf0] sm:$0xff] %v452
      %517 = vst [vmem:[%s199 + $0xf8] sm:$0xff] %v453
      %518 = vst [vmem:[%s199 + $0x100] sm:$0xff] %v454
      %519 = vst [vmem:[%s199 + $0x108] sm:$0xff] %v455
      %520 = vst [vmem:[%s199 + $0x110] sm:$0xff] %v456
      %521 = vst [vmem:[%s199 + $0x118] sm:$0xff] %v457
      %522 = vst [vmem:[%s199 + $0x120] sm:$0xff] %v458
      %523 = vst [vmem:[%s199 + $0x128] sm:$0xff] %v459
      %524 = vst [vmem:[%s199 + $0x130] sm:$0xff] %v460
      %525 = vst [vmem:[%s199 + $0x138] sm:$0xff] %v461
      %526 = vst [vmem:[%s199 + $0x140] sm:$0xff] %v462
      %527 = vst [vmem:[%s199 + $0x148] sm:$0xff] %v463
      %528 = vst [vmem:[%s199 + $0x150] sm:$0xff] %v464
      %529 = vst [vmem:[%s199 + $0x158] sm:$0xff] %v465
      %530 = vst [vmem:[%s199 + $0x160] sm:$0xff] %v466
      %531 = vst [vmem:[%s199 + $0x168] sm:$0xff] %v467
      %532 = vst [vmem:[%s199 + $0x170] sm:$0xff] %v468
      %533 = vst [vmem:[%s199 + $0x178] sm:$0xff] %v469
      %534 = vst [vmem:[%s199 + $0x180] sm:$0xff] %v470
      %535 = vst [vmem:[%s199 + $0x188] sm:$0xff] %v471
      %536 = vst [vmem:[%s199 + $0x190] sm:$0xff] %v472
      %537 = vst [vmem:[%s199 + $0x198] sm:$0xff] %v473
      %538 = vst [vmem:[%s199 + $0x1a0] sm:$0xff] %v474
      %539 = vst [vmem:[%s199 + $0x1a8] sm:$0xff] %v475
      %540 = vst [vmem:[%s199 + $0x1b0] sm:$0xff] %v476
      %541 = vst [vmem:[%s199 + $0x1b8] sm:$0xff] %v477
      %542 = vst [vmem:[%s199 + $0x1c0] sm:$0xff] %v478
      %543 = vst [vmem:[%s199 + $0x1c8] sm:$0xff] %v479
      %544 = vst [vmem:[%s199 + $0x1d0] sm:$0xff] %v480
      %545 = vst [vmem:[%s199 + $0x1d8] sm:$0xff] %v481
      %546 = vst [vmem:[%s199 + $0x1e0] sm:$0xff] %v482
      %547 = vst [vmem:[%s199 + $0x1e8] sm:$0xff] %v483
      %548 = vst [vmem:[%s199 + $0x1f0] sm:$0xff] %v484
      %549 = vst [vmem:[%s199 + $0x1f8] sm:$0xff] %v485
      %s550 = smul.u32 64, %s15
      %p551 = scmp.lt.s32.totalorder %s550, 127
      %s552 = scalar_select %p551, %s550, 127
      %s553 = smul.addr %s552, 8
      %s554 = scalar_lea.vmem %s4, %s553
      // Predicated region
      $region37: #{down_forward.9} parent=35 // pred_check
        %p555 = pneg %p122
      $region38: #{down_forward.9} parent=35 // pred_check_branch
        %557 = sbr.rel (%p555) target = $region40
      $region39: #{down_forward.9} parent=35 // pred_region
        %s558 = smul.u32 64, %s15
      $region40: #{down_forward.9} parent=35 // pred_fallthru
        _
    $region36: #{down_forward.9} parent=5 // pred_fallthru
      _
    %p559 = scmp.le.s32.totalorder 2, %s10
    // Predicated region
    $region41: #{down_forward.9} parent=5 // pred_check
      %p560 = pneg %p559
    $region42: #{down_forward.9} parent=5 // pred_check_branch
      %562 = sbr.rel (%p560) target = $region44
    $region43: #{down_forward.9} parent=5 // pred_region
      %s563 = ssub.s32 %s10, 2
      // Predicated region
      $region45: #{down_forward.9} parent=43 // pred_check
        %p564 = pneg %p128
      $region46: #{down_forward.9} parent=43 // pred_check_branch
        %566 = sbr.rel (%p564) target = $region48
      $region47: #{down_forward.9} parent=43 // pred_region
        %s567 = smul.u32 64, %s16
        %p568 = scmp.lt.s32.totalorder %s567, 127
        %s569 = scalar_select %p568, %s567, 127
        %s570 = smul.addr %s569, 8
        %s571 = scalar_lea.vmem %s4, %s570
      $region48: #{down_forward.9} parent=43 // pred_fallthru
        _
    $region44: #{down_forward.9} parent=5 // pred_fallthru
      _
  $region6: #{down_forward.9} parent=0 // loop_footer
    %s14 = sadd.s32 1, %s10
  $region7: #{down_forward.9} parent=0 // loop_footer_branch
    %9 = sbr.rel target = $region3
  $region8: #{down_forward.9} parent=0 // loop_exit
    _

</llo_original>
